<compile_context>
chip_gen: v6e
topology: v6e:2x2x1
jax: 0.10.0
libtpu: 0.0.40
codegen_flags: <defaults>
</compile_context>

<pallas_src>
import jax
import jax.numpy as jnp
from jax.experimental import pallas as pl
from jax.experimental.pallas import tpu as pltpu

# ---------------- config (small synthetic shapes, lane-dense channels) ----------------
BATCH = 2
IMG_C, IMG_HW = 3, 16
H1 = W1 = IMG_HW // 2          # stem conv is stride-2
HW = H1 * W1                   # rows per image after the stem
PK = 3 * 3 * IMG_C             # im2col patch length for the 3x3 stem conv
C = 128                        # block channels (lane-dense stand-in)
CE = 4 * C                     # MBConv expansion (x4)
CSE = C // 4                   # squeeze-excite bottleneck
DEMB = 256                     # head / feature dim (stands in for 1280), lane-dense


# ---------------- fused Pallas kernel: whole EfficientNet forward, one image per grid step ----
def _effnet_kernel(patch_ref, stem_w_ref, stem_b_ref,
                   exp_w_ref, exp_b_ref,
                   dw_w_ref, dw_b_ref,
                   se1_w_ref, se1_b_ref, se2_w_ref, se2_b_ref,
                   proj_w_ref, proj_b_ref,
                   head_w_ref, head_b_ref,
                   out_ref, pad_ref):
    silu = jax.nn.silu

    def dot(a, b):  # bf16 operands, f32 accumulation on the MXU
        return jax.lax.dot_general(
            a.astype(jnp.bfloat16), b, (((1,), (0,)), ((), ())),
            preferred_element_type=jnp.float32)

    # --- stem: 3x3 / stride-2 conv as matmul over im2col patches (+BN folded, SiLU) ---
    h = silu(dot(patch_ref[...], stem_w_ref[...]) + stem_b_ref[...])         # (HW, C)

    # --- MBConv expand 1x1 (+SiLU) ---
    e = silu(dot(h, exp_w_ref[...]) + exp_b_ref[...])                        # (HW, CE)

    # --- depthwise 3x3 'same' conv on a channels-last padded VMEM scratch ---
    pad_ref[...] = jnp.zeros_like(pad_ref)
    pad_ref[1:H1 + 1, 1:W1 + 1, :] = e.reshape(H1, W1, CE)
    dww = dw_w_ref[...].reshape(9, 1, 1, CE)          # hoisted once, not per tap
    acc = jnp.zeros((H1, W1, CE), jnp.float32)
    for k in range(9):                                # static 9-tap unroll
        kh, kw = k // 3, k % 3
        acc = acc + pad_ref[kh:kh + H1, kw:kw + W1, :] * dww[k]
    x = silu(acc.reshape(HW, CE) + dw_b_ref[...])                            # (HW, CE)

    # --- squeeze & excite ---
    s = jnp.mean(x, axis=0, keepdims=True)                                   # (1, CE)
    s = silu(dot(s, se1_w_ref[...]) + se1_b_ref[...])                        # (1, CSE)
    gate = jax.nn.sigmoid(dot(s, se2_w_ref[...]) + se2_b_ref[...])           # (1, CE)
    x = x * gate

    # --- project 1x1 (+BN folded) with the residual fused into the epilogue ---
    y = dot(x, proj_w_ref[...]) + proj_b_ref[...] + h                        # (HW, C)

    # --- head 1x1 conv (+SiLU), global average pool, classifier = Identity ---
    z = silu(dot(y, head_w_ref[...]) + head_b_ref[...])                      # (HW, DEMB)
    out_ref[...] = jnp.mean(z, axis=0, keepdims=True)                        # (1, DEMB)


def _full_spec(arr):
    # whole-parameter-in-VMEM block, same block for every grid step (no re-fetch)
    return pl.BlockSpec(arr.shape, lambda b, n=arr.ndim: (0,) * n)


def vision_encoder_efficient(params, images_nchw):
    """Forward of VisionEncoderEfficient: frozen EfficientNet features, classifier=Identity."""
    B = images_nchw.shape[0]
    x = jnp.transpose(images_nchw, (0, 2, 3, 1)).astype(jnp.float32)         # NCHW -> NHWC
    xp = jnp.pad(x, ((0, 0), (1, 1), (1, 1), (0, 0)))
    # im2col for the stride-2 3x3 stem conv (cheap layout glue stays in XLA)
    taps = [xp[:, dh:dh + 2 * H1:2, dw:dw + 2 * W1:2, :]
            for dh in range(3) for dw in range(3)]                           # 9 x (B,H1,W1,3)
    patches = jnp.stack(taps, axis=3).reshape(B, HW, PK)                     # (B, HW, 27)

    weight_args = [params[k] for k in (
        "stem_w", "stem_b", "exp_w", "exp_b", "dw_w", "dw_b",
        "se1_w", "se1_b", "se2_w", "se2_b",
        "proj_w", "proj_b", "head_w", "head_b")]

    out = pl.pallas_call(
        _effnet_kernel,
        out_shape=jax.ShapeDtypeStruct((B, 1, DEMB), jnp.float32),
        grid=(B,),
        in_specs=[pl.BlockSpec((None, HW, PK), lambda b: (b, 0, 0))] +
                 [_full_spec(a) for a in weight_args],
        out_specs=pl.BlockSpec((None, 1, DEMB), lambda b: (b, 0, 0)),
        scratch_shapes=[pltpu.VMEM((H1 + 2, W1 + 2, CE), jnp.float32)],
        compiler_params=pltpu.CompilerParams(dimension_semantics=("parallel",)),
    )(patches, *weight_args)
    return out.reshape(B, DEMB)


# ---------------- deterministic synthetic frozen parameters (BN folded, pre-laid-out) -------
def init_params(key):
    ks = jax.random.split(key, 14)

    def w(k, shape, scale=0.05):
        return jax.random.normal(k, shape, jnp.float32) * scale

    return {
        # conv weights stored as matmul-ready (K, N) matrices, bf16 for the MXU
        "stem_w": w(ks[0], (PK, C)).astype(jnp.bfloat16),
        "stem_b": w(ks[1], (1, C), 0.01),
        "exp_w": w(ks[2], (C, CE)).astype(jnp.bfloat16),
        "exp_b": w(ks[3], (1, CE), 0.01),
        "dw_w": w(ks[4], (9, CE)),                 # depthwise taps stay f32 (VPU elementwise)
        "dw_b": w(ks[5], (1, CE), 0.01),
        "se1_w": w(ks[6], (CE, CSE)).astype(jnp.bfloat16),
        "se1_b": w(ks[7], (1, CSE), 0.01),
        "se2_w": w(ks[8], (CSE, CE)).astype(jnp.bfloat16),
        "se2_b": w(ks[9], (1, CE), 0.01),
        "proj_w": w(ks[10], (CE, C)).astype(jnp.bfloat16),
        "proj_b": w(ks[11], (1, C), 0.01),
        "head_w": w(ks[12], (C, DEMB)).astype(jnp.bfloat16),
        "head_b": w(ks[13], (1, DEMB), 0.01),
    }


if __name__ == "__main__":
    key = jax.random.PRNGKey(0)
    pkey, ikey = jax.random.split(key)
    params = init_params(pkey)
    images = jax.random.normal(ikey, (BATCH, IMG_C, IMG_HW, IMG_HW), jnp.float32)   # NCHW

    fwd = jax.jit(vision_encoder_efficient)
    feats = fwd(params, images)
    jax.block_until_ready(feats)
    assert feats.shape == (BATCH, DEMB) and bool(jnp.all(jnp.isfinite(feats)))
    print("KERNEL_OK")
</pallas_src>

<mosaic_0001>
module attributes {stable_mosaic.version = 11 : i64} {
  func.func @_effnet_kernel(%arg0: i32, %arg1: memref<1x64x27xf32, #tpu.memory_space<vmem>>, %arg2: memref<27x128xbf16, #tpu.memory_space<vmem>>, %arg3: memref<1x128xf32, #tpu.memory_space<vmem>>, %arg4: memref<128x512xbf16, #tpu.memory_space<vmem>>, %arg5: memref<1x512xf32, #tpu.memory_space<vmem>>, %arg6: memref<9x512xf32, #tpu.memory_space<vmem>>, %arg7: memref<1x512xf32, #tpu.memory_space<vmem>>, %arg8: memref<512x32xbf16, #tpu.memory_space<vmem>>, %arg9: memref<1x32xf32, #tpu.memory_space<vmem>>, %arg10: memref<32x512xbf16, #tpu.memory_space<vmem>>, %arg11: memref<1x512xf32, #tpu.memory_space<vmem>>, %arg12: memref<512x128xbf16, #tpu.memory_space<vmem>>, %arg13: memref<1x128xf32, #tpu.memory_space<vmem>>, %arg14: memref<128x256xbf16, #tpu.memory_space<vmem>>, %arg15: memref<1x256xf32, #tpu.memory_space<vmem>>, %arg16: memref<1x1x256xf32, #tpu.memory_space<vmem>>, %arg17: memref<10x10x512xf32, #tpu.memory_space<vmem>>) attributes {dimension_semantics = [#tpu.dimension_semantics<parallel>], iteration_bounds = array<i64: 2>, scalar_prefetch = 0 : i64, scratch_operands = 1 : i64, tpu.core_type = #tpu.core_type<tc>, window_params = [{transform_indices = @transform_0, window_bounds = array<i64: 1, 64, 27>}, {pipeline_mode = #tpu.pipeline_mode<synchronous>, transform_indices = @transform_1, window_bounds = array<i64: 27, 128>}, {pipeline_mode = #tpu.pipeline_mode<synchronous>, transform_indices = @transform_2, window_bounds = array<i64: 1, 128>}, {pipeline_mode = #tpu.pipeline_mode<synchronous>, transform_indices = @transform_3, window_bounds = array<i64: 128, 512>}, {pipeline_mode = #tpu.pipeline_mode<synchronous>, transform_indices = @transform_4, window_bounds = array<i64: 1, 512>}, {pipeline_mode = #tpu.pipeline_mode<synchronous>, transform_indices = @transform_5, window_bounds = array<i64: 9, 512>}, {pipeline_mode = #tpu.pipeline_mode<synchronous>, transform_indices = @transform_6, window_bounds = array<i64: 1, 512>}, {pipeline_mode = #tpu.pipeline_mode<synchronous>, transform_indices = @transform_7, window_bounds = array<i64: 512, 32>}, {pipeline_mode = #tpu.pipeline_mode<synchronous>, transform_indices = @transform_8, window_bounds = array<i64: 1, 32>}, {pipeline_mode = #tpu.pipeline_mode<synchronous>, transform_indices = @transform_9, window_bounds = array<i64: 32, 512>}, {pipeline_mode = #tpu.pipeline_mode<synchronous>, transform_indices = @transform_10, window_bounds = array<i64: 1, 512>}, {pipeline_mode = #tpu.pipeline_mode<synchronous>, transform_indices = @transform_11, window_bounds = array<i64: 512, 128>}, {pipeline_mode = #tpu.pipeline_mode<synchronous>, transform_indices = @transform_12, window_bounds = array<i64: 1, 128>}, {pipeline_mode = #tpu.pipeline_mode<synchronous>, transform_indices = @transform_13, window_bounds = array<i64: 128, 256>}, {pipeline_mode = #tpu.pipeline_mode<synchronous>, transform_indices = @transform_14, window_bounds = array<i64: 1, 256>}, {transform_indices = @transform_15, window_bounds = array<i64: 1, 1, 256>}]} {
    %c0 = arith.constant 0 : index
    %c0_0 = arith.constant 0 : index
    %c0_1 = arith.constant 0 : index
    %0 = vector.load %arg1[%c0, %c0_0, %c0_1] : memref<1x64x27xf32, #tpu.memory_space<vmem>>, vector<1x64x27xf32>
    %1 = vector.shape_cast %0 : vector<1x64x27xf32> to vector<64x27xf32>
    %c0_2 = arith.constant 0 : index
    %c0_3 = arith.constant 0 : index
    %2 = vector.load %arg2[%c0_2, %c0_3] : memref<27x128xbf16, #tpu.memory_space<vmem>>, vector<27x128xbf16>
    %3 = arith.truncf %1 : vector<64x27xf32> to vector<64x27xbf16>
    %cst = arith.constant dense<0.000000e+00> : vector<64x128xf32>
    %4 = tpu.matmul %3, %2, %cst {dimension_numbers = #tpu.dot_dimension_numbers<[1], [0], [0], [1], [0, 0, 1, 1], [], []>} : vector<64x27xbf16>, vector<27x128xbf16>, vector<64x128xf32> -> vector<64x128xf32>
    %c0_4 = arith.constant 0 : index
    %c0_5 = arith.constant 0 : index
    %5 = vector.load %arg3[%c0_4, %c0_5] : memref<1x128xf32, #tpu.memory_space<vmem>>, vector<1x128xf32>
    %6 = vector.broadcast %5 : vector<1x128xf32> to vector<64x128xf32>
    %7 = arith.addf %4, %6 : vector<64x128xf32>
    %8 = arith.negf %7 : vector<64x128xf32>
    %9 = math.exp %8 : vector<64x128xf32>
    %cst_6 = arith.constant 1.000000e+00 : f32
    %10 = vector.broadcast %cst_6 : f32 to vector<64x128xf32>
    %11 = arith.addf %10, %9 : vector<64x128xf32>
    %12 = arith.divf %10, %11 : vector<64x128xf32>
    %13 = arith.mulf %7, %12 : vector<64x128xf32>
    %c0_7 = arith.constant 0 : index
    %c0_8 = arith.constant 0 : index
    %14 = vector.load %arg4[%c0_7, %c0_8] : memref<128x512xbf16, #tpu.memory_space<vmem>>, vector<128x512xbf16>
    %15 = arith.truncf %13 : vector<64x128xf32> to vector<64x128xbf16>
    %cst_9 = arith.constant dense<0.000000e+00> : vector<64x512xf32>
    %16 = tpu.matmul %15, %14, %cst_9 {dimension_numbers = #tpu.dot_dimension_numbers<[1], [0], [0], [1], [0, 0, 1, 1], [], []>} : vector<64x128xbf16>, vector<128x512xbf16>, vector<64x512xf32> -> vector<64x512xf32>
    %c0_10 = arith.constant 0 : index
    %c0_11 = arith.constant 0 : index
    %17 = vector.load %arg5[%c0_10, %c0_11] : memref<1x512xf32, #tpu.memory_space<vmem>>, vector<1x512xf32>
    %18 = vector.broadcast %17 : vector<1x512xf32> to vector<64x512xf32>
    %19 = arith.addf %16, %18 : vector<64x512xf32>
    %20 = arith.negf %19 : vector<64x512xf32>
    %21 = math.exp %20 : vector<64x512xf32>
    %cst_12 = arith.constant 1.000000e+00 : f32
    %22 = vector.broadcast %cst_12 : f32 to vector<64x512xf32>
    %23 = arith.addf %22, %21 : vector<64x512xf32>
    %24 = arith.divf %22, %23 : vector<64x512xf32>
    %25 = arith.mulf %19, %24 : vector<64x512xf32>
    %cst_13 = arith.constant 0.000000e+00 : f32
    %26 = vector.broadcast %cst_13 : f32 to vector<10x10x512xf32>
    %c0_14 = arith.constant 0 : index
    %c0_15 = arith.constant 0 : index
    %c0_16 = arith.constant 0 : index
    %27 = vector.load %arg17[%c0_14, %c0_15, %c0_16] : memref<10x10x512xf32, #tpu.memory_space<vmem>>, vector<10x10x512xf32>
    tpu.vector_store %arg17[%c0_14, %c0_15, %c0_16], %26 {strides = array<i32>} : memref<10x10x512xf32, #tpu.memory_space<vmem>>, vector<10x10x512xf32>,
    %28 = vector.shape_cast %25 : vector<64x512xf32> to vector<8x8x512xf32>
    %c1 = arith.constant 1 : index
    %c1_17 = arith.constant 1 : index
    %c0_18 = arith.constant 0 : index
    %29 = vector.load %arg17[%c1, %c1_17, %c0_18] : memref<10x10x512xf32, #tpu.memory_space<vmem>>, vector<8x8x512xf32>
    tpu.vector_store %arg17[%c1, %c1_17, %c0_18], %28 {strides = array<i32>} : memref<10x10x512xf32, #tpu.memory_space<vmem>>, vector<8x8x512xf32>,
    %c0_19 = arith.constant 0 : index
    %c0_20 = arith.constant 0 : index
    %30 = vector.load %arg6[%c0_19, %c0_20] : memref<9x512xf32, #tpu.memory_space<vmem>>, vector<9x512xf32>
    %31 = vector.shape_cast %30 : vector<9x512xf32> to vector<9x1x1x512xf32>
    %cst_21 = arith.constant 0.000000e+00 : f32
    %32 = vector.broadcast %cst_21 : f32 to vector<8x8x512xf32>
    %c0_22 = arith.constant 0 : index
    %c0_23 = arith.constant 0 : index
    %c0_24 = arith.constant 0 : index
    %33 = vector.load %arg17[%c0_22, %c0_23, %c0_24] : memref<10x10x512xf32, #tpu.memory_space<vmem>>, vector<8x8x512xf32>
    %34 = vector.extract_strided_slice %31 {offsets = [0, 0, 0, 0], sizes = [1, 1, 1, 512], strides = [1, 1, 1, 1]} : vector<9x1x1x512xf32> to vector<1x1x1x512xf32>
    %35 = vector.shape_cast %34 : vector<1x1x1x512xf32> to vector<1x1x512xf32>
    %36 = vector.broadcast %35 : vector<1x1x512xf32> to vector<8x8x512xf32>
    %37 = arith.mulf %33, %36 : vector<8x8x512xf32>
    %38 = arith.addf %32, %37 : vector<8x8x512xf32>
    %c0_25 = arith.constant 0 : index
    %c1_26 = arith.constant 1 : index
    %c0_27 = arith.constant 0 : index
    %39 = vector.load %arg17[%c0_25, %c1_26, %c0_27] : memref<10x10x512xf32, #tpu.memory_space<vmem>>, vector<8x8x512xf32>
    %40 = vector.extract_strided_slice %31 {offsets = [1, 0, 0, 0], sizes = [1, 1, 1, 512], strides = [1, 1, 1, 1]} : vector<9x1x1x512xf32> to vector<1x1x1x512xf32>
    %41 = vector.shape_cast %40 : vector<1x1x1x512xf32> to vector<1x1x512xf32>
    %42 = vector.broadcast %41 : vector<1x1x512xf32> to vector<8x8x512xf32>
    %43 = arith.mulf %39, %42 : vector<8x8x512xf32>
    %44 = arith.addf %38, %43 : vector<8x8x512xf32>
    %c0_28 = arith.constant 0 : index
    %c2 = arith.constant 2 : index
    %c0_29 = arith.constant 0 : index
    %45 = vector.load %arg17[%c0_28, %c2, %c0_29] : memref<10x10x512xf32, #tpu.memory_space<vmem>>, vector<8x8x512xf32>
    %46 = vector.extract_strided_slice %31 {offsets = [2, 0, 0, 0], sizes = [1, 1, 1, 512], strides = [1, 1, 1, 1]} : vector<9x1x1x512xf32> to vector<1x1x1x512xf32>
    %47 = vector.shape_cast %46 : vector<1x1x1x512xf32> to vector<1x1x512xf32>
    %48 = vector.broadcast %47 : vector<1x1x512xf32> to vector<8x8x512xf32>
    %49 = arith.mulf %45, %48 : vector<8x8x512xf32>
    %50 = arith.addf %44, %49 : vector<8x8x512xf32>
    %c1_30 = arith.constant 1 : index
    %c0_31 = arith.constant 0 : index
    %c0_32 = arith.constant 0 : index
    %51 = vector.load %arg17[%c1_30, %c0_31, %c0_32] : memref<10x10x512xf32, #tpu.memory_space<vmem>>, vector<8x8x512xf32>
    %52 = vector.extract_strided_slice %31 {offsets = [3, 0, 0, 0], sizes = [1, 1, 1, 512], strides = [1, 1, 1, 1]} : vector<9x1x1x512xf32> to vector<1x1x1x512xf32>
    %53 = vector.shape_cast %52 : vector<1x1x1x512xf32> to vector<1x1x512xf32>
    %54 = vector.broadcast %53 : vector<1x1x512xf32> to vector<8x8x512xf32>
    %55 = arith.mulf %51, %54 : vector<8x8x512xf32>
    %56 = arith.addf %50, %55 : vector<8x8x512xf32>
    %c1_33 = arith.constant 1 : index
    %c1_34 = arith.constant 1 : index
    %c0_35 = arith.constant 0 : index
    %57 = vector.load %arg17[%c1_33, %c1_34, %c0_35] : memref<10x10x512xf32, #tpu.memory_space<vmem>>, vector<8x8x512xf32>
    %58 = vector.extract_strided_slice %31 {offsets = [4, 0, 0, 0], sizes = [1, 1, 1, 512], strides = [1, 1, 1, 1]} : vector<9x1x1x512xf32> to vector<1x1x1x512xf32>
    %59 = vector.shape_cast %58 : vector<1x1x1x512xf32> to vector<1x1x512xf32>
    %60 = vector.broadcast %59 : vector<1x1x512xf32> to vector<8x8x512xf32>
    %61 = arith.mulf %57, %60 : vector<8x8x512xf32>
    %62 = arith.addf %56, %61 : vector<8x8x512xf32>
    %c1_36 = arith.constant 1 : index
    %c2_37 = arith.constant 2 : index
    %c0_38 = arith.constant 0 : index
    %63 = vector.load %arg17[%c1_36, %c2_37, %c0_38] : memref<10x10x512xf32, #tpu.memory_space<vmem>>, vector<8x8x512xf32>
    %64 = vector.extract_strided_slice %31 {offsets = [5, 0, 0, 0], sizes = [1, 1, 1, 512], strides = [1, 1, 1, 1]} : vector<9x1x1x512xf32> to vector<1x1x1x512xf32>
    %65 = vector.shape_cast %64 : vector<1x1x1x512xf32> to vector<1x1x512xf32>
    %66 = vector.broadcast %65 : vector<1x1x512xf32> to vector<8x8x512xf32>
    %67 = arith.mulf %63, %66 : vector<8x8x512xf32>
    %68 = arith.addf %62, %67 : vector<8x8x512xf32>
    %c2_39 = arith.constant 2 : index
    %c0_40 = arith.constant 0 : index
    %c0_41 = arith.constant 0 : index
    %69 = vector.load %arg17[%c2_39, %c0_40, %c0_41] : memref<10x10x512xf32, #tpu.memory_space<vmem>>, vector<8x8x512xf32>
    %70 = vector.extract_strided_slice %31 {offsets = [6, 0, 0, 0], sizes = [1, 1, 1, 512], strides = [1, 1, 1, 1]} : vector<9x1x1x512xf32> to vector<1x1x1x512xf32>
    %71 = vector.shape_cast %70 : vector<1x1x1x512xf32> to vector<1x1x512xf32>
    %72 = vector.broadcast %71 : vector<1x1x512xf32> to vector<8x8x512xf32>
    %73 = arith.mulf %69, %72 : vector<8x8x512xf32>
    %74 = arith.addf %68, %73 : vector<8x8x512xf32>
    %c2_42 = arith.constant 2 : index
    %c1_43 = arith.constant 1 : index
    %c0_44 = arith.constant 0 : index
    %75 = vector.load %arg17[%c2_42, %c1_43, %c0_44] : memref<10x10x512xf32, #tpu.memory_space<vmem>>, vector<8x8x512xf32>
    %76 = vector.extract_strided_slice %31 {offsets = [7, 0, 0, 0], sizes = [1, 1, 1, 512], strides = [1, 1, 1, 1]} : vector<9x1x1x512xf32> to vector<1x1x1x512xf32>
    %77 = vector.shape_cast %76 : vector<1x1x1x512xf32> to vector<1x1x512xf32>
    %78 = vector.broadcast %77 : vector<1x1x512xf32> to vector<8x8x512xf32>
    %79 = arith.mulf %75, %78 : vector<8x8x512xf32>
    %80 = arith.addf %74, %79 : vector<8x8x512xf32>
    %c2_45 = arith.constant 2 : index
    %c2_46 = arith.constant 2 : index
    %c0_47 = arith.constant 0 : index
    %81 = vector.load %arg17[%c2_45, %c2_46, %c0_47] : memref<10x10x512xf32, #tpu.memory_space<vmem>>, vector<8x8x512xf32>
    %82 = vector.extract_strided_slice %31 {offsets = [8, 0, 0, 0], sizes = [1, 1, 1, 512], strides = [1, 1, 1, 1]} : vector<9x1x1x512xf32> to vector<1x1x1x512xf32>
    %83 = vector.shape_cast %82 : vector<1x1x1x512xf32> to vector<1x1x512xf32>
    %84 = vector.broadcast %83 : vector<1x1x512xf32> to vector<8x8x512xf32>
    %85 = arith.mulf %81, %84 : vector<8x8x512xf32>
    %86 = arith.addf %80, %85 : vector<8x8x512xf32>
    %87 = vector.shape_cast %86 : vector<8x8x512xf32> to vector<64x512xf32>
    %c0_48 = arith.constant 0 : index
    %c0_49 = arith.constant 0 : index
    %88 = vector.load %arg7[%c0_48, %c0_49] : memref<1x512xf32, #tpu.memory_space<vmem>>, vector<1x512xf32>
    %89 = vector.broadcast %88 : vector<1x512xf32> to vector<64x512xf32>
    %90 = arith.addf %87, %89 : vector<64x512xf32>
    %91 = arith.negf %90 : vector<64x512xf32>
    %92 = math.exp %91 : vector<64x512xf32>
    %cst_50 = arith.constant 1.000000e+00 : f32
    %93 = vector.broadcast %cst_50 : f32 to vector<64x512xf32>
    %94 = arith.addf %93, %92 : vector<64x512xf32>
    %95 = arith.divf %93, %94 : vector<64x512xf32>
    %96 = arith.mulf %90, %95 : vector<64x512xf32>
    %cst_51 = arith.constant dense<0.000000e+00> : vector<512xf32>
    %97 = vector.multi_reduction <add>, %96, %cst_51 [0] : vector<64x512xf32> to vector<512xf32>
    %98 = vector.shape_cast %97 : vector<512xf32> to vector<1x512xf32>
    %cst_52 = arith.constant 6.400000e+01 : f32
    %99 = vector.broadcast %cst_52 : f32 to vector<1x512xf32>
    %100 = arith.divf %98, %99 : vector<1x512xf32>
    %c0_53 = arith.constant 0 : index
    %c0_54 = arith.constant 0 : index
    %101 = vector.load %arg8[%c0_53, %c0_54] : memref<512x32xbf16, #tpu.memory_space<vmem>>, vector<512x32xbf16>
    %102 = arith.truncf %100 : vector<1x512xf32> to vector<1x512xbf16>
    %cst_55 = arith.constant dense<0.000000e+00> : vector<1x32xf32>
    %103 = tpu.matmul %102, %101, %cst_55 {dimension_numbers = #tpu.dot_dimension_numbers<[1], [0], [0], [1], [0, 0, 1, 1], [], []>} : vector<1x512xbf16>, vector<512x32xbf16>, vector<1x32xf32> -> vector<1x32xf32>
    %c0_56 = arith.constant 0 : index
    %c0_57 = arith.constant 0 : index
    %104 = vector.load %arg9[%c0_56, %c0_57] : memref<1x32xf32, #tpu.memory_space<vmem>>, vector<1x32xf32>
    %105 = arith.addf %103, %104 : vector<1x32xf32>
    %106 = arith.negf %105 : vector<1x32xf32>
    %107 = math.exp %106 : vector<1x32xf32>
    %cst_58 = arith.constant 1.000000e+00 : f32
    %108 = vector.broadcast %cst_58 : f32 to vector<1x32xf32>
    %109 = arith.addf %108, %107 : vector<1x32xf32>
    %110 = arith.divf %108, %109 : vector<1x32xf32>
    %111 = arith.mulf %105, %110 : vector<1x32xf32>
    %c0_59 = arith.constant 0 : index
    %c0_60 = arith.constant 0 : index
    %112 = vector.load %arg10[%c0_59, %c0_60] : memref<32x512xbf16, #tpu.memory_space<vmem>>, vector<32x512xbf16>
    %113 = arith.truncf %111 : vector<1x32xf32> to vector<1x32xbf16>
    %cst_61 = arith.constant dense<0.000000e+00> : vector<1x512xf32>
    %114 = tpu.matmul %113, %112, %cst_61 {dimension_numbers = #tpu.dot_dimension_numbers<[1], [0], [0], [1], [0, 0, 1, 1], [], []>} : vector<1x32xbf16>, vector<32x512xbf16>, vector<1x512xf32> -> vector<1x512xf32>
    %c0_62 = arith.constant 0 : index
    %c0_63 = arith.constant 0 : index
    %115 = vector.load %arg11[%c0_62, %c0_63] : memref<1x512xf32, #tpu.memory_space<vmem>>, vector<1x512xf32>
    %116 = arith.addf %114, %115 : vector<1x512xf32>
    %117 = arith.negf %116 : vector<1x512xf32>
    %118 = math.exp %117 : vector<1x512xf32>
    %cst_64 = arith.constant 1.000000e+00 : f32
    %119 = vector.broadcast %cst_64 : f32 to vector<1x512xf32>
    %120 = arith.addf %119, %118 : vector<1x512xf32>
    %121 = arith.divf %119, %120 : vector<1x512xf32>
    %122 = vector.broadcast %121 : vector<1x512xf32> to vector<64x512xf32>
    %123 = arith.mulf %96, %122 : vector<64x512xf32>
    %c0_65 = arith.constant 0 : index
    %c0_66 = arith.constant 0 : index
    %124 = vector.load %arg12[%c0_65, %c0_66] : memref<512x128xbf16, #tpu.memory_space<vmem>>, vector<512x128xbf16>
    %125 = arith.truncf %123 : vector<64x512xf32> to vector<64x512xbf16>
    %cst_67 = arith.constant dense<0.000000e+00> : vector<64x128xf32>
    %126 = tpu.matmul %125, %124, %cst_67 {dimension_numbers = #tpu.dot_dimension_numbers<[1], [0], [0], [1], [0, 0, 1, 1], [], []>} : vector<64x512xbf16>, vector<512x128xbf16>, vector<64x128xf32> -> vector<64x128xf32>
    %c0_68 = arith.constant 0 : index
    %c0_69 = arith.constant 0 : index
    %127 = vector.load %arg13[%c0_68, %c0_69] : memref<1x128xf32, #tpu.memory_space<vmem>>, vector<1x128xf32>
    %128 = vector.broadcast %127 : vector<1x128xf32> to vector<64x128xf32>
    %129 = arith.addf %126, %128 : vector<64x128xf32>
    %130 = arith.addf %129, %13 : vector<64x128xf32>
    %c0_70 = arith.constant 0 : index
    %c0_71 = arith.constant 0 : index
    %131 = vector.load %arg14[%c0_70, %c0_71] : memref<128x256xbf16, #tpu.memory_space<vmem>>, vector<128x256xbf16>
    %132 = arith.truncf %130 : vector<64x128xf32> to vector<64x128xbf16>
    %cst_72 = arith.constant dense<0.000000e+00> : vector<64x256xf32>
    %133 = tpu.matmul %132, %131, %cst_72 {dimension_numbers = #tpu.dot_dimension_numbers<[1], [0], [0], [1], [0, 0, 1, 1], [], []>} : vector<64x128xbf16>, vector<128x256xbf16>, vector<64x256xf32> -> vector<64x256xf32>
    %c0_73 = arith.constant 0 : index
    %c0_74 = arith.constant 0 : index
    %134 = vector.load %arg15[%c0_73, %c0_74] : memref<1x256xf32, #tpu.memory_space<vmem>>, vector<1x256xf32>
    %135 = vector.broadcast %134 : vector<1x256xf32> to vector<64x256xf32>
    %136 = arith.addf %133, %135 : vector<64x256xf32>
    %137 = arith.negf %136 : vector<64x256xf32>
    %138 = math.exp %137 : vector<64x256xf32>
    %cst_75 = arith.constant 1.000000e+00 : f32
    %139 = vector.broadcast %cst_75 : f32 to vector<64x256xf32>
    %140 = arith.addf %139, %138 : vector<64x256xf32>
    %141 = arith.divf %139, %140 : vector<64x256xf32>
    %142 = arith.mulf %136, %141 : vector<64x256xf32>
    %cst_76 = arith.constant dense<0.000000e+00> : vector<256xf32>
    %143 = vector.multi_reduction <add>, %142, %cst_76 [0] : vector<64x256xf32> to vector<256xf32>
    %144 = vector.shape_cast %143 : vector<256xf32> to vector<1x256xf32>
    %cst_77 = arith.constant 6.400000e+01 : f32
    %145 = vector.broadcast %cst_77 : f32 to vector<1x256xf32>
    %146 = arith.divf %144, %145 : vector<1x256xf32>
    %c0_78 = arith.constant 0 : index
    %c0_79 = arith.constant 0 : index
    %c0_80 = arith.constant 0 : index
    %147 = vector.load %arg16[%c0_78, %c0_79, %c0_80] : memref<1x1x256xf32, #tpu.memory_space<vmem>>, vector<1x1x256xf32>
    %148 = vector.shape_cast %147 : vector<1x1x256xf32> to vector<1x256xf32>
    %149 = vector.shape_cast %146 : vector<1x256xf32> to vector<1x1x256xf32>
    tpu.vector_store %arg16[%c0_78, %c0_79, %c0_80], %149 {strides = array<i32>} : memref<1x1x256xf32, #tpu.memory_space<vmem>>, vector<1x1x256xf32>,
    return
  }
  func.func @transform_0(%arg0: i32) -> (i32, i32, i32) {
    %c0_i32 = arith.constant 0 : i32
    %c0_i32_0 = arith.constant 0 : i32
    %c0_i32_1 = arith.constant 0 : i32
    return %arg0, %c0_i32, %c0_i32_0 : i32, i32, i32
  }
  func.func @transform_1(%arg0: i32) -> (i32, i32) {
    %c0_i32 = arith.constant 0 : i32
    %c0_i32_0 = arith.constant 0 : i32
    %c0_i32_1 = arith.constant 0 : i32
    return %c0_i32, %c0_i32_0 : i32, i32
  }
  func.func @transform_2(%arg0: i32) -> (i32, i32) {
    %c0_i32 = arith.constant 0 : i32
    %c0_i32_0 = arith.constant 0 : i32
    %c0_i32_1 = arith.constant 0 : i32
    return %c0_i32, %c0_i32_0 : i32, i32
  }
  func.func @transform_3(%arg0: i32) -> (i32, i32) {
    %c0_i32 = arith.constant 0 : i32
    %c0_i32_0 = arith.constant 0 : i32
    %c0_i32_1 = arith.constant 0 : i32
    return %c0_i32, %c0_i32_0 : i32, i32
  }
  func.func @transform_4(%arg0: i32) -> (i32, i32) {
    %c0_i32 = arith.constant 0 : i32
    %c0_i32_0 = arith.constant 0 : i32
    %c0_i32_1 = arith.constant 0 : i32
    return %c0_i32, %c0_i32_0 : i32, i32
  }
  func.func @transform_5(%arg0: i32) -> (i32, i32) {
    %c0_i32 = arith.constant 0 : i32
    %c0_i32_0 = arith.constant 0 : i32
    %c0_i32_1 = arith.constant 0 : i32
    return %c0_i32, %c0_i32_0 : i32, i32
  }
  func.func @transform_6(%arg0: i32) -> (i32, i32) {
    %c0_i32 = arith.constant 0 : i32
    %c0_i32_0 = arith.constant 0 : i32
    %c0_i32_1 = arith.constant 0 : i32
    return %c0_i32, %c0_i32_0 : i32, i32
  }
  func.func @transform_7(%arg0: i32) -> (i32, i32) {
    %c0_i32 = arith.constant 0 : i32
    %c0_i32_0 = arith.constant 0 : i32
    %c0_i32_1 = arith.constant 0 : i32
    return %c0_i32, %c0_i32_0 : i32, i32
  }
  func.func @transform_8(%arg0: i32) -> (i32, i32) {
    %c0_i32 = arith.constant 0 : i32
    %c0_i32_0 = arith.constant 0 : i32
    %c0_i32_1 = arith.constant 0 : i32
    return %c0_i32, %c0_i32_0 : i32, i32
  }
  func.func @transform_9(%arg0: i32) -> (i32, i32) {
    %c0_i32 = arith.constant 0 : i32
    %c0_i32_0 = arith.constant 0 : i32
    %c0_i32_1 = arith.constant 0 : i32
    return %c0_i32, %c0_i32_0 : i32, i32
  }
  func.func @transform_10(%arg0: i32) -> (i32, i32) {
    %c0_i32 = arith.constant 0 : i32
    %c0_i32_0 = arith.constant 0 : i32
    %c0_i32_1 = arith.constant 0 : i32
    return %c0_i32, %c0_i32_0 : i32, i32
  }
  func.func @transform_11(%arg0: i32) -> (i32, i32) {
    %c0_i32 = arith.constant 0 : i32
    %c0_i32_0 = arith.constant 0 : i32
    %c0_i32_1 = arith.constant 0 : i32
    return %c0_i32, %c0_i32_0 : i32, i32
  }
  func.func @transform_12(%arg0: i32) -> (i32, i32) {
    %c0_i32 = arith.constant 0 : i32
    %c0_i32_0 = arith.constant 0 : i32
    %c0_i32_1 = arith.constant 0 : i32
    return %c0_i32, %c0_i32_0 : i32, i32
  }
  func.func @transform_13(%arg0: i32) -> (i32, i32) {
    %c0_i32 = arith.constant 0 : i32
    %c0_i32_0 = arith.constant 0 : i32
    %c0_i32_1 = arith.constant 0 : i32
    return %c0_i32, %c0_i32_0 : i32, i32
  }
  func.func @transform_14(%arg0: i32) -> (i32, i32) {
    %c0_i32 = arith.constant 0 : i32
    %c0_i32_0 = arith.constant 0 : i32
    %c0_i32_1 = arith.constant 0 : i32
    return %c0_i32, %c0_i32_0 : i32, i32
  }
  func.func @transform_15(%arg0: i32) -> (i32, i32, i32) {
    %c0_i32 = arith.constant 0 : i32
    %c0_i32_0 = arith.constant 0 : i32
    %c0_i32_1 = arith.constant 0 : i32
    return %arg0, %c0_i32, %c0_i32_0 : i32, i32, i32
  }
}

</mosaic_0001>

<llo_original>
// kernel: vision_encoder_efficient.1
$region0: #{vision_encoder_efficient.1}
  #allocation0 [shape = 'u32[]', space=smem, size = 0x4, offset = 0x4, fixed_abs, tag = 'smem constant byte address 0x4 - core index']
  #allocation1 [shape = 'u32[144,128]{1,0:T(1,128)}', space=vmem, size = 0x12000, scoped, tag = 'internal scratch']
  #allocation2 [shape = 'f32[10,10,512]{2,1,0:T(8,128)}', space=vmem, size = 0x50000, scoped, tag = 'scratch operand']
  %s0 = inlined_call_operand.vmem [shape: f32[2,64,27], index: 0, kind: input, shape index: {}]
  %s1 = inlined_call_operand.vmem [shape: bf16[27,128], index: 1, kind: input, shape index: {}]
  %s2 = inlined_call_operand.vmem [shape: f32[1,128], index: 2, kind: input, shape index: {}]
  %s3 = inlined_call_operand.vmem [shape: bf16[128,512], index: 3, kind: input, shape index: {}]
  %s4 = inlined_call_operand.vmem [shape: f32[1,512], index: 4, kind: input, shape index: {}]
  %s5 = inlined_call_operand.vmem [shape: f32[9,512], index: 5, kind: input, shape index: {}]
  %s6 = inlined_call_operand.vmem [shape: f32[1,512], index: 6, kind: input, shape index: {}]
  %s7 = inlined_call_operand.vmem [shape: bf16[512,32], index: 7, kind: input, shape index: {}]
  %s8 = inlined_call_operand.vmem [shape: f32[1,32], index: 8, kind: input, shape index: {}]
  %s9 = inlined_call_operand.vmem [shape: bf16[32,512], index: 9, kind: input, shape index: {}]
  %s10 = inlined_call_operand.vmem [shape: f32[1,512], index: 10, kind: input, shape index: {}]
  %s11 = inlined_call_operand.vmem [shape: bf16[512,128], index: 11, kind: input, shape index: {}]
  %s12 = inlined_call_operand.vmem [shape: f32[1,128], index: 12, kind: input, shape index: {}]
  %s13 = inlined_call_operand.vmem [shape: bf16[128,256], index: 13, kind: input, shape index: {}]
  %s14 = inlined_call_operand.vmem [shape: f32[1,256], index: 14, kind: input, shape index: {}]
  %s15 = inlined_call_operand.vmem [shape: f32[2,1,256], index: 15, kind: output, shape index: {}]
  %s16 = sld [smem:[#allocation0]]
  $region93: #{vision_encoder_efficient.1} parent=0
    _
  %s18 = ssub.s32 1, %s16
  %s19 = scalar_select 0, %s18, %s16
  loop: start=0, step=1, limit=4
  $region2: #{vision_encoder_efficient.1} parent=0 // loop_pre_header
    _
  $region3: #{vision_encoder_efficient.1} parent=0 // loop_header
    %s21 = sphi 0, %s25
    %p22 = scmp.ge.s32.totalorder %s21, 4
    %s31 = sphi 0, %s33
    %s34 = sphi 0, %s31
    %s35 = sphi 0, %s34
    %s51 = sphi 0, %s35
    %s55 = sphi 0, %s55
    %s57 = sphi 0, %s55
    %s58 = sphi 0, %s57
    %s72 = sphi 0, %s58
    %s76 = sphi 0, %s76
    %s78 = sphi 0, %s76
    %s79 = sphi 0, %s78
    %s93 = sphi 0, %s79
    %s97 = sphi 0, %s97
    %s99 = sphi 0, %s97
    %s100 = sphi 0, %s99
    %s114 = sphi 0, %s100
    %s118 = sphi 0, %s118
    %s120 = sphi 0, %s118
    %s121 = sphi 0, %s120
    %s135 = sphi 0, %s121
    %s139 = sphi 0, %s139
    %s141 = sphi 0, %s139
    %s142 = sphi 0, %s141
    %s156 = sphi 0, %s142
    %s160 = sphi 0, %s160
    %s162 = sphi 0, %s160
    %s163 = sphi 0, %s162
    %s177 = sphi 0, %s163
    %s181 = sphi 0, %s181
    %s183 = sphi 0, %s181
    %s184 = sphi 0, %s183
    %s198 = sphi 0, %s184
    %s202 = sphi 0, %s202
    %s204 = sphi 0, %s202
    %s205 = sphi 0, %s204
    %s219 = sphi 0, %s205
    %s223 = sphi 0, %s223
    %s225 = sphi 0, %s223
    %s226 = sphi 0, %s225
    %s240 = sphi 0, %s226
    %s244 = sphi 0, %s244
    %s246 = sphi 0, %s244
    %s247 = sphi 0, %s246
    %s261 = sphi 0, %s247
    %s265 = sphi 0, %s265
    %s267 = sphi 0, %s265
    %s268 = sphi 0, %s267
    %s282 = sphi 0, %s268
    %s286 = sphi 0, %s286
    %s288 = sphi 0, %s286
    %s289 = sphi 0, %s288
    %s303 = sphi 0, %s289
    %s307 = sphi 0, %s307
    %s309 = sphi 0, %s307
    %s310 = sphi 0, %s309
    %s324 = sphi 0, %s310
    %s328 = sphi 0, %s328
    %s330 = sphi 0, %s328
    %s331 = sphi 0, %s330
    %s345 = sphi 0, %s331
    %s351 = sphi 0, %s353
    %s354 = sphi 0, %s351
    %s355 = sphi 0, %s354
    %s371 = sphi 0, %s355
  $region4: #{vision_encoder_efficient.1} parent=0 // loop_header_branch
    %24 = sbr.rel (%p22) target = $region8
  $region5: #{vision_encoder_efficient.1} parent=0 // loop_body
    %s26 = ssub.s32 %s21, 1
    %s27 = ssub.s32 %s21, 2
    %s28 = sadd.s32 %s21, 1
    %s29 = ssub.s32 %s21, %s28
    %p30 = scmp.eq.s32.totalorder %s29, 0
    %s32 = sadd.s32 %s31, 1
    %s33 = scalar_select %p30, %s31, %s32
    %p36 = pneg %p30
    %p37 = scmp.eq.s32.totalorder %s21, 1
    %p38 = por %p36, %p37
    %p39 = scmp.ne.s32.totalorder %s31, %s34
    %p40 = scmp.eq.s32.totalorder %s21, 0
    %p41 = por %p39, %p40
    %p42 = scmp.ne.s32.totalorder %s31, %s34
    %p43 = scmp.eq.s32.totalorder %s26, 1
    %p44 = por %p42, %p43
    %p45 = scmp.ne.s32.totalorder %s34, %s35
    %p46 = scmp.eq.s32.totalorder %s26, 0
    %p47 = por %p45, %p46
    %p48 = scmp.ne.s32.totalorder %s34, %s35
    %p49 = scmp.eq.s32.totalorder %s27, 1
    %p50 = por %p48, %p49
    %p52 = scmp.ne.s32.totalorder %s35, %s51
    %p53 = scmp.eq.s32.totalorder %s27, 0
    %p54 = por %p52, %p53
    %s56 = sadd.s32 %s55, 1
    %p59 = scmp.eq.s32.totalorder %s21, 1
    %p60 = scmp.ne.s32.totalorder %s55, %s57
    %p61 = scmp.eq.s32.totalorder %s21, 0
    %p62 = por %p60, %p61
    %p63 = scmp.ne.s32.totalorder %s55, %s57
    %p64 = scmp.eq.s32.totalorder %s26, 1
    %p65 = por %p63, %p64
    %p66 = scmp.ne.s32.totalorder %s57, %s58
    %p67 = scmp.eq.s32.totalorder %s26, 0
    %p68 = por %p66, %p67
    %p69 = scmp.ne.s32.totalorder %s57, %s58
    %p70 = scmp.eq.s32.totalorder %s27, 1
    %p71 = por %p69, %p70
    %p73 = scmp.ne.s32.totalorder %s58, %s72
    %p74 = scmp.eq.s32.totalorder %s27, 0
    %p75 = por %p73, %p74
    %s77 = sadd.s32 %s76, 1
    %p80 = scmp.eq.s32.totalorder %s21, 1
    %p81 = scmp.ne.s32.totalorder %s76, %s78
    %p82 = scmp.eq.s32.totalorder %s21, 0
    %p83 = por %p81, %p82
    %p84 = scmp.ne.s32.totalorder %s76, %s78
    %p85 = scmp.eq.s32.totalorder %s26, 1
    %p86 = por %p84, %p85
    %p87 = scmp.ne.s32.totalorder %s78, %s79
    %p88 = scmp.eq.s32.totalorder %s26, 0
    %p89 = por %p87, %p88
    %p90 = scmp.ne.s32.totalorder %s78, %s79
    %p91 = scmp.eq.s32.totalorder %s27, 1
    %p92 = por %p90, %p91
    %p94 = scmp.ne.s32.totalorder %s79, %s93
    %p95 = scmp.eq.s32.totalorder %s27, 0
    %p96 = por %p94, %p95
    %s98 = sadd.s32 %s97, 1
    %p101 = scmp.eq.s32.totalorder %s21, 1
    %p102 = scmp.ne.s32.totalorder %s97, %s99
    %p103 = scmp.eq.s32.totalorder %s21, 0
    %p104 = por %p102, %p103
    %p105 = scmp.ne.s32.totalorder %s97, %s99
    %p106 = scmp.eq.s32.totalorder %s26, 1
    %p107 = por %p105, %p106
    %p108 = scmp.ne.s32.totalorder %s99, %s100
    %p109 = scmp.eq.s32.totalorder %s26, 0
    %p110 = por %p108, %p109
    %p111 = scmp.ne.s32.totalorder %s99, %s100
    %p112 = scmp.eq.s32.totalorder %s27, 1
    %p113 = por %p111, %p112
    %p115 = scmp.ne.s32.totalorder %s100, %s114
    %p116 = scmp.eq.s32.totalorder %s27, 0
    %p117 = por %p115, %p116
    %s119 = sadd.s32 %s118, 1
    %p122 = scmp.eq.s32.totalorder %s21, 1
    %p123 = scmp.ne.s32.totalorder %s118, %s120
    %p124 = scmp.eq.s32.totalorder %s21, 0
    %p125 = por %p123, %p124
    %p126 = scmp.ne.s32.totalorder %s118, %s120
    %p127 = scmp.eq.s32.totalorder %s26, 1
    %p128 = por %p126, %p127
    %p129 = scmp.ne.s32.totalorder %s120, %s121
    %p130 = scmp.eq.s32.totalorder %s26, 0
    %p131 = por %p129, %p130
    %p132 = scmp.ne.s32.totalorder %s120, %s121
    %p133 = scmp.eq.s32.totalorder %s27, 1
    %p134 = por %p132, %p133
    %p136 = scmp.ne.s32.totalorder %s121, %s135
    %p137 = scmp.eq.s32.totalorder %s27, 0
    %p138 = por %p136, %p137
    %s140 = sadd.s32 %s139, 1
    %p143 = scmp.eq.s32.totalorder %s21, 1
    %p144 = scmp.ne.s32.totalorder %s139, %s141
    %p145 = scmp.eq.s32.totalorder %s21, 0
    %p146 = por %p144, %p145
    %p147 = scmp.ne.s32.totalorder %s139, %s141
    %p148 = scmp.eq.s32.totalorder %s26, 1
    %p149 = por %p147, %p148
    %p150 = scmp.ne.s32.totalorder %s141, %s142
    %p151 = scmp.eq.s32.totalorder %s26, 0
    %p152 = por %p150, %p151
    %p153 = scmp.ne.s32.totalorder %s141, %s142
    %p154 = scmp.eq.s32.totalorder %s27, 1
    %p155 = por %p153, %p154
    %p157 = scmp.ne.s32.totalorder %s142, %s156
    %p158 = scmp.eq.s32.totalorder %s27, 0
    %p159 = por %p157, %p158
    %s161 = sadd.s32 %s160, 1
    %p164 = scmp.eq.s32.totalorder %s21, 1
    %p165 = scmp.ne.s32.totalorder %s160, %s162
    %p166 = scmp.eq.s32.totalorder %s21, 0
    %p167 = por %p165, %p166
    %p168 = scmp.ne.s32.totalorder %s160, %s162
    %p169 = scmp.eq.s32.totalorder %s26, 1
    %p170 = por %p168, %p169
    %p171 = scmp.ne.s32.totalorder %s162, %s163
    %p172 = scmp.eq.s32.totalorder %s26, 0
    %p173 = por %p171, %p172
    %p174 = scmp.ne.s32.totalorder %s162, %s163
    %p175 = scmp.eq.s32.totalorder %s27, 1
    %p176 = por %p174, %p175
    %p178 = scmp.ne.s32.totalorder %s163, %s177
    %p179 = scmp.eq.s32.totalorder %s27, 0
    %p180 = por %p178, %p179
    %s182 = sadd.s32 %s181, 1
    %p185 = scmp.eq.s32.totalorder %s21, 1
    %p186 = scmp.ne.s32.totalorder %s181, %s183
    %p187 = scmp.eq.s32.totalorder %s21, 0
    %p188 = por %p186, %p187
    %p189 = scmp.ne.s32.totalorder %s181, %s183
    %p190 = scmp.eq.s32.totalorder %s26, 1
    %p191 = por %p189, %p190
    %p192 = scmp.ne.s32.totalorder %s183, %s184
    %p193 = scmp.eq.s32.totalorder %s26, 0
    %p194 = por %p192, %p193
    %p195 = scmp.ne.s32.totalorder %s183, %s184
    %p196 = scmp.eq.s32.totalorder %s27, 1
    %p197 = por %p195, %p196
    %p199 = scmp.ne.s32.totalorder %s184, %s198
    %p200 = scmp.eq.s32.totalorder %s27, 0
    %p201 = por %p199, %p200
    %s203 = sadd.s32 %s202, 1
    %p206 = scmp.eq.s32.totalorder %s21, 1
    %p207 = scmp.ne.s32.totalorder %s202, %s204
    %p208 = scmp.eq.s32.totalorder %s21, 0
    %p209 = por %p207, %p208
    %p210 = scmp.ne.s32.totalorder %s202, %s204
    %p211 = scmp.eq.s32.totalorder %s26, 1
    %p212 = por %p210, %p211
    %p213 = scmp.ne.s32.totalorder %s204, %s205
    %p214 = scmp.eq.s32.totalorder %s26, 0
    %p215 = por %p213, %p214
    %p216 = scmp.ne.s32.totalorder %s204, %s205
    %p217 = scmp.eq.s32.totalorder %s27, 1
    %p218 = por %p216, %p217
    %p220 = scmp.ne.s32.totalorder %s205, %s219
    %p221 = scmp.eq.s32.totalorder %s27, 0
    %p222 = por %p220, %p221
    %s224 = sadd.s32 %s223, 1
    %p227 = scmp.eq.s32.totalorder %s21, 1
    %p228 = scmp.ne.s32.totalorder %s223, %s225
    %p229 = scmp.eq.s32.totalorder %s21, 0
    %p230 = por %p228, %p229
    %p231 = scmp.ne.s32.totalorder %s223, %s225
    %p232 = scmp.eq.s32.totalorder %s26, 1
    %p233 = por %p231, %p232
    %p234 = scmp.ne.s32.totalorder %s225, %s226
    %p235 = scmp.eq.s32.totalorder %s26, 0
    %p236 = por %p234, %p235
    %p237 = scmp.ne.s32.totalorder %s225, %s226
    %p238 = scmp.eq.s32.totalorder %s27, 1
    %p239 = por %p237, %p238
    %p241 = scmp.ne.s32.totalorder %s226, %s240
    %p242 = scmp.eq.s32.totalorder %s27, 0
    %p243 = por %p241, %p242
    %s245 = sadd.s32 %s244, 1
    %p248 = scmp.eq.s32.totalorder %s21, 1
    %p249 = scmp.ne.s32.totalorder %s244, %s246
    %p250 = scmp.eq.s32.totalorder %s21, 0
    %p251 = por %p249, %p250
    %p252 = scmp.ne.s32.totalorder %s244, %s246
    %p253 = scmp.eq.s32.totalorder %s26, 1
    %p254 = por %p252, %p253
    %p255 = scmp.ne.s32.totalorder %s246, %s247
    %p256 = scmp.eq.s32.totalorder %s26, 0
    %p257 = por %p255, %p256
    %p258 = scmp.ne.s32.totalorder %s246, %s247
    %p259 = scmp.eq.s32.totalorder %s27, 1
    %p260 = por %p258, %p259
    %p262 = scmp.ne.s32.totalorder %s247, %s261
    %p263 = scmp.eq.s32.totalorder %s27, 0
    %p264 = por %p262, %p263
    %s266 = sadd.s32 %s265, 1
    %p269 = scmp.eq.s32.totalorder %s21, 1
    %p270 = scmp.ne.s32.totalorder %s265, %s267
    %p271 = scmp.eq.s32.totalorder %s21, 0
    %p272 = por %p270, %p271
    %p273 = scmp.ne.s32.totalorder %s265, %s267
    %p274 = scmp.eq.s32.totalorder %s26, 1
    %p275 = por %p273, %p274
    %p276 = scmp.ne.s32.totalorder %s267, %s268
    %p277 = scmp.eq.s32.totalorder %s26, 0
    %p278 = por %p276, %p277
    %p279 = scmp.ne.s32.totalorder %s267, %s268
    %p280 = scmp.eq.s32.totalorder %s27, 1
    %p281 = por %p279, %p280
    %p283 = scmp.ne.s32.totalorder %s268, %s282
    %p284 = scmp.eq.s32.totalorder %s27, 0
    %p285 = por %p283, %p284
    %s287 = sadd.s32 %s286, 1
    %p290 = scmp.eq.s32.totalorder %s21, 1
    %p291 = scmp.ne.s32.totalorder %s286, %s288
    %p292 = scmp.eq.s32.totalorder %s21, 0
    %p293 = por %p291, %p292
    %p294 = scmp.ne.s32.totalorder %s286, %s288
    %p295 = scmp.eq.s32.totalorder %s26, 1
    %p296 = por %p294, %p295
    %p297 = scmp.ne.s32.totalorder %s288, %s289
    %p298 = scmp.eq.s32.totalorder %s26, 0
    %p299 = por %p297, %p298
    %p300 = scmp.ne.s32.totalorder %s288, %s289
    %p301 = scmp.eq.s32.totalorder %s27, 1
    %p302 = por %p300, %p301
    %p304 = scmp.ne.s32.totalorder %s289, %s303
    %p305 = scmp.eq.s32.totalorder %s27, 0
    %p306 = por %p304, %p305
    %s308 = sadd.s32 %s307, 1
    %p311 = scmp.eq.s32.totalorder %s21, 1
    %p312 = scmp.ne.s32.totalorder %s307, %s309
    %p313 = scmp.eq.s32.totalorder %s21, 0
    %p314 = por %p312, %p313
    %p315 = scmp.ne.s32.totalorder %s307, %s309
    %p316 = scmp.eq.s32.totalorder %s26, 1
    %p317 = por %p315, %p316
    %p318 = scmp.ne.s32.totalorder %s309, %s310
    %p319 = scmp.eq.s32.totalorder %s26, 0
    %p320 = por %p318, %p319
    %p321 = scmp.ne.s32.totalorder %s309, %s310
    %p322 = scmp.eq.s32.totalorder %s27, 1
    %p323 = por %p321, %p322
    %p325 = scmp.ne.s32.totalorder %s310, %s324
    %p326 = scmp.eq.s32.totalorder %s27, 0
    %p327 = por %p325, %p326
    %s329 = sadd.s32 %s328, 1
    %p332 = scmp.eq.s32.totalorder %s21, 1
    %p333 = scmp.ne.s32.totalorder %s328, %s330
    %p334 = scmp.eq.s32.totalorder %s21, 0
    %p335 = por %p333, %p334
    %p336 = scmp.ne.s32.totalorder %s328, %s330
    %p337 = scmp.eq.s32.totalorder %s26, 1
    %p338 = por %p336, %p337
    %p339 = scmp.ne.s32.totalorder %s330, %s331
    %p340 = scmp.eq.s32.totalorder %s26, 0
    %p341 = por %p339, %p340
    %p342 = scmp.ne.s32.totalorder %s330, %s331
    %p343 = scmp.eq.s32.totalorder %s27, 1
    %p344 = por %p342, %p343
    %p346 = scmp.ne.s32.totalorder %s331, %s345
    %p347 = scmp.eq.s32.totalorder %s27, 0
    %p348 = por %p346, %p347
    %s349 = ssub.s32 %s21, %s28
    %p350 = scmp.eq.s32.totalorder %s349, 0
    %s352 = sadd.s32 %s351, 1
    %s353 = scalar_select %p350, %s351, %s352
    %p356 = pneg %p350
    %p357 = scmp.eq.s32.totalorder %s21, 1
    %p358 = por %p356, %p357
    %p359 = scmp.ne.s32.totalorder %s351, %s354
    %p360 = scmp.eq.s32.totalorder %s21, 0
    %p361 = por %p359, %p360
    %p362 = scmp.ne.s32.totalorder %s351, %s354
    %p363 = scmp.eq.s32.totalorder %s26, 1
    %p364 = por %p362, %p363
    %p365 = scmp.ne.s32.totalorder %s354, %s355
    %p366 = scmp.eq.s32.totalorder %s26, 0
    %p367 = por %p365, %p366
    %p368 = scmp.ne.s32.totalorder %s354, %s355
    %p369 = scmp.eq.s32.totalorder %s27, 1
    %p370 = por %p368, %p369
    %p372 = scmp.ne.s32.totalorder %s355, %s371
    %p373 = scmp.eq.s32.totalorder %s27, 0
    %p374 = por %p372, %p373
    %p375 = scmp.le.s32.totalorder 1, %s21
    %p376 = scmp.lt.s32.totalorder %s21, 3
    %p377 = pnand %p375, %p376
    %p378 = pneg %p377
    // Predicated region
    $region9: #{vision_encoder_efficient.1} parent=5 // pred_check
      _
    $region10: #{vision_encoder_efficient.1} parent=5 // pred_check_branch
      %380 = sbr.rel (%p377) target = $region12
    $region11: #{vision_encoder_efficient.1} parent=5 // pred_region
      %s381 = ssub.s32 %s21, 1
      // Predicated region
      $region13: #{vision_encoder_efficient.1} parent=11 // pred_check
        %p382 = pneg %p68
      $region14: #{vision_encoder_efficient.1} parent=11 // pred_check_branch
        %384 = sbr.rel (%p382) target = $region16
      $region15: #{vision_encoder_efficient.1} parent=11 // pred_region
        _
      $region16: #{vision_encoder_efficient.1} parent=11 // pred_fallthru
        _
      // Predicated region
      $region17: #{vision_encoder_efficient.1} parent=11 // pred_check
        %p385 = pneg %p89
      $region18: #{vision_encoder_efficient.1} parent=11 // pred_check_branch
        %387 = sbr.rel (%p385) target = $region20
      $region19: #{vision_encoder_efficient.1} parent=11 // pred_region
        _
      $region20: #{vision_encoder_efficient.1} parent=11 // pred_fallthru
        _
      // Predicated region
      $region21: #{vision_encoder_efficient.1} parent=11 // pred_check
        %p388 = pneg %p110
      $region22: #{vision_encoder_efficient.1} parent=11 // pred_check_branch
        %390 = sbr.rel (%p388) target = $region24
      $region23: #{vision_encoder_efficient.1} parent=11 // pred_region
        _
      $region24: #{vision_encoder_efficient.1} parent=11 // pred_fallthru
        _
      // Predicated region
      $region25: #{vision_encoder_efficient.1} parent=11 // pred_check
        %p391 = pneg %p131
      $region26: #{vision_encoder_efficient.1} parent=11 // pred_check_branch
        %393 = sbr.rel (%p391) target = $region28
      $region27: #{vision_encoder_efficient.1} parent=11 // pred_region
        _
      $region28: #{vision_encoder_efficient.1} parent=11 // pred_fallthru
        _
      // Predicated region
      $region29: #{vision_encoder_efficient.1} parent=11 // pred_check
        %p394 = pneg %p152
      $region30: #{vision_encoder_efficient.1} parent=11 // pred_check_branch
        %396 = sbr.rel (%p394) target = $region32
      $region31: #{vision_encoder_efficient.1} parent=11 // pred_region
        _
      $region32: #{vision_encoder_efficient.1} parent=11 // pred_fallthru
        _
      // Predicated region
      $region33: #{vision_encoder_efficient.1} parent=11 // pred_check
        %p397 = pneg %p173
      $region34: #{vision_encoder_efficient.1} parent=11 // pred_check_branch
        %399 = sbr.rel (%p397) target = $region36
      $region35: #{vision_encoder_efficient.1} parent=11 // pred_region
        _
      $region36: #{vision_encoder_efficient.1} parent=11 // pred_fallthru
        _
      // Predicated region
      $region37: #{vision_encoder_efficient.1} parent=11 // pred_check
        %p400 = pneg %p194
      $region38: #{vision_encoder_efficient.1} parent=11 // pred_check_branch
        %402 = sbr.rel (%p400) target = $region40
      $region39: #{vision_encoder_efficient.1} parent=11 // pred_region
        _
      $region40: #{vision_encoder_efficient.1} parent=11 // pred_fallthru
        _
      // Predicated region
      $region41: #{vision_encoder_efficient.1} parent=11 // pred_check
        %p403 = pneg %p215
      $region42: #{vision_encoder_efficient.1} parent=11 // pred_check_branch
        %405 = sbr.rel (%p403) target = $region44
      $region43: #{vision_encoder_efficient.1} parent=11 // pred_region
        _
      $region44: #{vision_encoder_efficient.1} parent=11 // pred_fallthru
        _
      // Predicated region
      $region45: #{vision_encoder_efficient.1} parent=11 // pred_check
        %p406 = pneg %p236
      $region46: #{vision_encoder_efficient.1} parent=11 // pred_check_branch
        %408 = sbr.rel (%p406) target = $region48
      $region47: #{vision_encoder_efficient.1} parent=11 // pred_region
        _
      $region48: #{vision_encoder_efficient.1} parent=11 // pred_fallthru
        _
      // Predicated region
      $region49: #{vision_encoder_efficient.1} parent=11 // pred_check
        %p409 = pneg %p257
      $region50: #{vision_encoder_efficient.1} parent=11 // pred_check_branch
        %411 = sbr.rel (%p409) target = $region52
      $region51: #{vision_encoder_efficient.1} parent=11 // pred_region
        _
      $region52: #{vision_encoder_efficient.1} parent=11 // pred_fallthru
        _
      // Predicated region
      $region53: #{vision_encoder_efficient.1} parent=11 // pred_check
        %p412 = pneg %p278
      $region54: #{vision_encoder_efficient.1} parent=11 // pred_check_branch
        %414 = sbr.rel (%p412) target = $region56
      $region55: #{vision_encoder_efficient.1} parent=11 // pred_region
        _
      $region56: #{vision_encoder_efficient.1} parent=11 // pred_fallthru
        _
      // Predicated region
      $region57: #{vision_encoder_efficient.1} parent=11 // pred_check
        %p415 = pneg %p299
      $region58: #{vision_encoder_efficient.1} parent=11 // pred_check_branch
        %417 = sbr.rel (%p415) target = $region60
      $region59: #{vision_encoder_efficient.1} parent=11 // pred_region
        _
      $region60: #{vision_encoder_efficient.1} parent=11 // pred_fallthru
        _
      // Predicated region
      $region61: #{vision_encoder_efficient.1} parent=11 // pred_check
        %p418 = pneg %p320
      $region62: #{vision_encoder_efficient.1} parent=11 // pred_check_branch
        %420 = sbr.rel (%p418) target = $region64
      $region63: #{vision_encoder_efficient.1} parent=11 // pred_region
        _
      $region64: #{vision_encoder_efficient.1} parent=11 // pred_fallthru
        _
      // Predicated region
      $region65: #{vision_encoder_efficient.1} parent=11 // pred_check
        %p421 = pneg %p341
      $region66: #{vision_encoder_efficient.1} parent=11 // pred_check_branch
        %423 = sbr.rel (%p421) target = $region68
      $region67: #{vision_encoder_efficient.1} parent=11 // pred_region
        _
      $region68: #{vision_encoder_efficient.1} parent=11 // pred_fallthru
        _
    $region12: #{vision_encoder_efficient.1} parent=5 // pred_fallthru
      _
    %p424 = scmp.lt.s32.totalorder %s21, 2
    // Predicated region
    $region69: #{vision_encoder_efficient.1} parent=5 // pred_check
      %p425 = pneg %p424
    $region70: #{vision_encoder_efficient.1} parent=5 // pred_check_branch
      %427 = sbr.rel (%p425) target = $region72
    $region71: #{vision_encoder_efficient.1} parent=5 // pred_region
      // Predicated region
      $region73: #{vision_encoder_efficient.1} parent=71 // pred_check
        %p428 = pneg %p41
      $region74: #{vision_encoder_efficient.1} parent=71 // pred_check_branch
        %430 = sbr.rel (%p428) target = $region76
      $region75: #{vision_encoder_efficient.1} parent=71 // pred_region
        %p431 = scmp.lt.s32.totalorder %s21, 1
        %s432 = scalar_select %p431, %s21, 1
        %s433 = smul.addr %s432, 8
        %s434 = smul.addr %s433, 8
        %s435 = scalar_lea.vmem %s0, %s434
      $region76: #{vision_encoder_efficient.1} parent=71 // pred_fallthru
        _
    $region72: #{vision_encoder_efficient.1} parent=5 // pred_fallthru
      _
    %p436 = scmp.le.s32.totalorder 1, %s21
    %p437 = scmp.lt.s32.totalorder %s21, 3
    %p438 = pnand %p436, %p437
    %p439 = pneg %p438
    // Predicated region
    $region77: #{vision_encoder_efficient.1} parent=5 // pred_check
      _
    $region78: #{vision_encoder_efficient.1} parent=5 // pred_check_branch
      %441 = sbr.rel (%p438) target = $region80
    $region79: #{vision_encoder_efficient.1} parent=5 // pred_region
      %s442 = ssub.s32 %s21, 1
      %p443 = scmp.lt.s32.totalorder %s26, 1
      %s444 = scalar_select %p443, %s26, 1
      %s445 = smul.addr %s444, 8
      %s446 = smul.addr %s445, 8
      %s447 = scalar_lea.vmem %s0, %s446
      %p448 = pneg %p47
      %p449 = pneg %p44
      %p450 = pneg %p68
      %p451 = pneg %p65
      %p452 = pneg %p89
      %p453 = pneg %p86
      %p454 = pneg %p110
      %p455 = pneg %p107
      %p456 = pneg %p131
      %p457 = pneg %p128
      %p458 = pneg %p152
      %p459 = pneg %p149
      %p460 = pneg %p173
      %p461 = pneg %p170
      %p462 = pneg %p194
      %p463 = pneg %p191
      %p464 = pneg %p215
      %p465 = pneg %p212
      %p466 = pneg %p236
      %p467 = pneg %p233
      %p468 = pneg %p257
      %p469 = pneg %p254
      %p470 = pneg %p278
      %p471 = pneg %p275
      %p472 = pneg %p299
      %p473 = pneg %p296
      %p474 = pneg %p320
      %p475 = pneg %p317
      %p476 = pneg %p341
      %p477 = pneg %p338
      %p478 = pneg %p367
      %p479 = pneg %p364
      %p480 = scmp.lt.s32.totalorder %s26, 1
      %s481 = scalar_select %p480, %s26, 1
      %s482 = smul.addr %s481, 2
      %s483 = scalar_lea.vmem %s15, %s482
      %p484 = scmp.lt.s32.totalorder %s26, 1
      %s485 = scalar_select %p484, %s26, 1
      %s486 = smul.addr %s485, 8
      %s487 = smul.addr %s486, 8
      %s488 = scalar_lea.vmem %s0, %s487
      %p489 = scmp.lt.s32.totalorder %s26, 1
      %s490 = scalar_select %p489, %s26, 1
      %s491 = smul.addr %s490, 2
      %s492 = scalar_lea.vmem %s15, %s491
      %v494 = vld [vmem:[%s488] sm:$0xff]
      %v495 = vld [vmem:[%s488 + $0x8] sm:$0xff]
      %v496 = vld [vmem:[%s488 + $0x10] sm:$0xff]
      %v497 = vld [vmem:[%s488 + $0x18] sm:$0xff]
      %v498 = vld [vmem:[%s488 + $0x20] sm:$0xff]
      %v499 = vld [vmem:[%s488 + $0x28] sm:$0xff]
      %v500 = vld [vmem:[%s488 + $0x30] sm:$0xff]
      %v501 = vld [vmem:[%s488 + $0x38] sm:$0xff]
      %v502 = vld [vmem:[%s1] sm:$0xf]
      %v503 = vld [vmem:[%s1 + $0x4] sm:$0xf]
      %v504 = vld [vmem:[%s1 + $0x8] sm:$0xf]
      %v505 = vld [vmem:[%s1 + $0xc] sm:$0x3]
      %v506 = vpack.c.bf16 %v495, %v494
      %v507 = vpack.c.bf16 %v497, %v496
      %v508 = vpack.c.bf16 %v499, %v498
      %v509 = vpack.c.bf16 %v501, %v500
      %v510 = vld [vmem:[%s2] sm:$0x1]
      %v512 = vlaneseq
      %v513 = vshrl.u32 %v512, 7
      %v514 = vsub.s32 0, %v513
      %v515 = vrot.slane %v510, %v514
      %v521 = vunpack.c.l.b16 %v502
      %v522 = vunpack.c.l.b16 %v503
      %v523 = vunpack.c.l.b16 %v504
      %v524 = vunpack.c.l.b16 %v505
      %v525 = vpack.c.b16 %v522, %v521
      %v526 = vpack.c.b16 %v524, %v523
      %vm528 = vcmask 220160
      %v530 = vsel %vm528, %v506, 0
      %v533 = vsel %vm528, %v507, 0
      %v536 = vsel %vm528, %v508, 0
      %v539 = vsel %vm528, %v509, 0
      %vm541 = vcmask 1044480
      %vm542 = vcmask 1045504
      %v543 = vsel %vm541, 4294967295, 65535
      %v544 = vsel %vm542, %v543, 0
      %v546 = vand.u32 %v526, %v544
      %548 = vmatprep.subr.bf16.mxu0 0
      %549 = vmatpush1.bf16.msra.mxu0 0
      %550 = vmatprep.subr.bf16.mxu0 0
      %551 = vmatpush1.bf16.msra.mxu0 0
      %552 = vmatprep.subr.bf16.mxu0 0
      %553 = vmatpush1.bf16.msra.mxu0 0
      %554 = vmatprep.subr.bf16.mxu0 0
      %555 = vmatpush1.bf16.msra.mxu0 0
      %556 = vmatprep.subr.bf16.mxu0 0
      %557 = vmatpush1.bf16.msra.mxu0 0
      %558 = vmatprep.subr.bf16.mxu0 0
      %559 = vmatpush1.bf16.msra.mxu0 0
      %560 = vmatprep.subr.bf16.mxu0 0
      %561 = vmatpush1.bf16.msra.mxu0 %v546
      %562 = vmatprep.subr.bf16.mxu0 0
      %563 = vmatpush1.bf16.msra.mxu0 %v525
      %564 = vmatprep.subr.bf16.mxu0 0
      %565 = vmatpush2.bf16.msra.mxu0 0
      %566 = vmatprep.subr.bf16.mxu0 0
      %567 = vmatpush2.bf16.msra.mxu0 0
      %568 = vmatprep.subr.bf16.mxu0 0
      %569 = vmatpush2.bf16.msra.mxu0 0
      %570 = vmatprep.subr.bf16.mxu0 0
      %571 = vmatpush2.bf16.msra.mxu0 0
      %572 = vmatprep.subr.bf16.mxu0 0
      %573 = vmatpush2.bf16.msra.mxu0 0
      %574 = vmatprep.subr.bf16.mxu0 0
      %575 = vmatpush2.bf16.msra.mxu0 0
      %576 = vmatprep.subr.bf16.mxu0 0
      %577 = vmatpush2.bf16.msra.mxu0 0
      %578 = vmatprep.subr.bf16.mxu0 0
      %579 = vmatpush2.bf16.msra.mxu0 0
      %580 = vmatprep.mubr.bf16.mxu0 0
      %581 = vmatmul.mubr.bf16.gmra.mxu0 %v530
      %v582 = vpop.f32.mrf.mxu0
      %v583 = vadd.f32 %v515, %v582
      %v584 = vpop.f32.mrf.mxu0
      %v585 = vpop.f32.mrf.mxu0
      %v586 = vadd.f32 %v515, %v585
      %v587 = vpop.f32.mrf.mxu0
      %588 = vmatprep.mubr.bf16.mxu0 0
      %589 = vmatmul.mubr.bf16.gmra.mxu0 %v533
      %v590 = vpop.f32.mrf.mxu0
      %v591 = vadd.f32 %v515, %v590
      %v592 = vpop.f32.mrf.mxu0
      %v593 = vpop.f32.mrf.mxu0
      %v594 = vadd.f32 %v515, %v593
      %v595 = vpop.f32.mrf.mxu0
      %596 = vmatprep.mubr.bf16.mxu0 0
      %597 = vmatmul.mubr.bf16.gmra.mxu0 %v536
      %v598 = vpop.f32.mrf.mxu0
      %v599 = vadd.f32 %v515, %v598
      %v600 = vpop.f32.mrf.mxu0
      %v601 = vpop.f32.mrf.mxu0
      %v602 = vadd.f32 %v515, %v601
      %v603 = vpop.f32.mrf.mxu0
      %604 = vmatprep.mubr.bf16.mxu0 0
      %605 = vmatmul.mubr.bf16.gmra.mxu0 %v539
      %v606 = vpop.f32.mrf.mxu0
      %v607 = vadd.f32 %v515, %v606
      %v608 = vpop.f32.mrf.mxu0
      %v609 = vpop.f32.mrf.mxu0
      %v610 = vadd.f32 %v515, %v609
      %v611 = vpop.f32.mrf.mxu0
      %612 = vdwg.mxu0
      %v613 = vxor.u32 %v583, 2147483648
      %v614 = vxor.u32 %v586, 2147483648
      %v615 = vxor.u32 %v591, 2147483648
      %v616 = vxor.u32 %v594, 2147483648
      %v617 = vxor.u32 %v599, 2147483648
      %v618 = vxor.u32 %v602, 2147483648
      %v619 = vxor.u32 %v607, 2147483648
      %v620 = vxor.u32 %v610, 2147483648
      %v621 = vmul.f32 %v613, 1.442695
      %v622 = vpow.pop %v621
      %v623 = vmul.f32 %v614, 1.442695
      %v624 = vpow.pop %v623
      %v625 = vmul.f32 %v615, 1.442695
      %v626 = vpow.pop %v625
      %v627 = vmul.f32 %v616, 1.442695
      %v628 = vpow.pop %v627
      %v629 = vmul.f32 %v617, 1.442695
      %v630 = vpow.pop %v629
      %v631 = vmul.f32 %v618, 1.442695
      %v632 = vpow.pop %v631
      %v633 = vmul.f32 %v619, 1.442695
      %v634 = vpow.pop %v633
      %v635 = vmul.f32 %v620, 1.442695
      %v636 = vpow.pop %v635
      %v637 = vadd.f32 %v622, 1.0
      %v638 = vadd.f32 %v624, 1.0
      %v639 = vadd.f32 %v626, 1.0
      %v640 = vadd.f32 %v628, 1.0
      %v641 = vadd.f32 %v630, 1.0
      %v642 = vadd.f32 %v632, 1.0
      %v643 = vadd.f32 %v634, 1.0
      %v644 = vadd.f32 %v636, 1.0
      %v645 = vrcp.pop %v637
      %v646 = vmul.f32 1.0, %v645
      %v647 = vrcp.pop %v638
      %v648 = vmul.f32 1.0, %v647
      %v649 = vrcp.pop %v639
      %v650 = vmul.f32 1.0, %v649
      %v651 = vrcp.pop %v640
      %v652 = vmul.f32 1.0, %v651
      %v653 = vrcp.pop %v641
      %v654 = vmul.f32 1.0, %v653
      %v655 = vrcp.pop %v642
      %v656 = vmul.f32 1.0, %v655
      %v657 = vrcp.pop %v643
      %v658 = vmul.f32 1.0, %v657
      %v659 = vrcp.pop %v644
      %v660 = vmul.f32 1.0, %v659
      %v661 = vmul.f32 %v583, %v646
      %v662 = vmul.f32 %v586, %v648
      %v663 = vmul.f32 %v591, %v650
      %v664 = vmul.f32 %v594, %v652
      %v665 = vmul.f32 %v599, %v654
      %v666 = vmul.f32 %v602, %v656
      %v667 = vmul.f32 %v607, %v658
      %v668 = vmul.f32 %v610, %v660
      %v669 = vld [vmem:[%s3] sm:$0xff]
      %v670 = vld [vmem:[%s3 + $0x8] sm:$0xff]
      %v671 = vld [vmem:[%s3 + $0x10] sm:$0xff]
      %v672 = vld [vmem:[%s3 + $0x18] sm:$0xff]
      %v673 = vld [vmem:[%s3 + $0x20] sm:$0xff]
      %v674 = vld [vmem:[%s3 + $0x28] sm:$0xff]
      %v675 = vld [vmem:[%s3 + $0x30] sm:$0xff]
      %v676 = vld [vmem:[%s3 + $0x38] sm:$0xff]
      %v677 = vld [vmem:[%s3 + $0x40] sm:$0xff]
      %v678 = vld [vmem:[%s3 + $0x48] sm:$0xff]
      %v679 = vld [vmem:[%s3 + $0x50] sm:$0xff]
      %v680 = vld [vmem:[%s3 + $0x58] sm:$0xff]
      %v681 = vld [vmem:[%s3 + $0x60] sm:$0xff]
      %v682 = vld [vmem:[%s3 + $0x68] sm:$0xff]
      %v683 = vld [vmem:[%s3 + $0x70] sm:$0xff]
      %v684 = vld [vmem:[%s3 + $0x78] sm:$0xff]
      %v685 = vld [vmem:[%s3 + $0x80] sm:$0xff]
      %v686 = vld [vmem:[%s3 + $0x88] sm:$0xff]
      %v687 = vld [vmem:[%s3 + $0x90] sm:$0xff]
      %v688 = vld [vmem:[%s3 + $0x98] sm:$0xff]
      %v689 = vld [vmem:[%s3 + $0xa0] sm:$0xff]
      %v690 = vld [vmem:[%s3 + $0xa8] sm:$0xff]
      %v691 = vld [vmem:[%s3 + $0xb0] sm:$0xff]
      %v692 = vld [vmem:[%s3 + $0xb8] sm:$0xff]
      %v693 = vld [vmem:[%s3 + $0xc0] sm:$0xff]
      %v694 = vld [vmem:[%s3 + $0xc8] sm:$0xff]
      %v695 = vld [vmem:[%s3 + $0xd0] sm:$0xff]
      %v696 = vld [vmem:[%s3 + $0xd8] sm:$0xff]
      %v697 = vld [vmem:[%s3 + $0xe0] sm:$0xff]
      %v698 = vld [vmem:[%s3 + $0xe8] sm:$0xff]
      %v699 = vld [vmem:[%s3 + $0xf0] sm:$0xff]
      %v700 = vld [vmem:[%s3 + $0xf8] sm:$0xff]
      %v701 = vpack.c.bf16 %v662, %v661
      %v702 = vpack.c.bf16 %v664, %v663
      %v703 = vpack.c.bf16 %v666, %v665
      %v704 = vpack.c.bf16 %v668, %v667
      %v705 = vld [vmem:[%s4] sm:$0xf]
      %v707 = vlaneseq
      %v708 = vshrl.u32 %v707, 7
      %v709 = vsub.s32 0, %v708
      %v710 = vrot.slane %v705, %v709
      %v711 = vlaneseq
      %v712 = vshrl.u32 %v711, 7
      %v713 = vsub.s32 1, %v712
      %v714 = vrot.slane %v705, %v713
      %v715 = vlaneseq
      %v716 = vshrl.u32 %v715, 7
      %v717 = vsub.s32 2, %v716
      %v718 = vrot.slane %v705, %v717
      %v719 = vlaneseq
      %v720 = vshrl.u32 %v719, 7
      %v721 = vsub.s32 3, %v720
      %v722 = vrot.slane %v705, %v721
      %v759 = vunpack.c.l.b16 %v669
      %v760 = vunpack.c.h.b16 %v669
      %v761 = vunpack.c.l.b16 %v670
      %v762 = vunpack.c.h.b16 %v670
      %v763 = vunpack.c.l.b16 %v671
      %v764 = vunpack.c.h.b16 %v671
      %v765 = vunpack.c.l.b16 %v672
      %v766 = vunpack.c.h.b16 %v672
      %v767 = vunpack.c.l.b16 %v673
      %v768 = vunpack.c.h.b16 %v673
      %v769 = vunpack.c.l.b16 %v674
      %v770 = vunpack.c.h.b16 %v674
      %v771 = vunpack.c.l.b16 %v675
      %v772 = vunpack.c.h.b16 %v675
      %v773 = vunpack.c.l.b16 %v676
      %v774 = vunpack.c.h.b16 %v676
      %v775 = vunpack.c.l.b16 %v677
      %v776 = vunpack.c.h.b16 %v677
      %v777 = vunpack.c.l.b16 %v678
      %v778 = vunpack.c.h.b16 %v678
      %v779 = vunpack.c.l.b16 %v679
      %v780 = vunpack.c.h.b16 %v679
      %v781 = vunpack.c.l.b16 %v680
      %v782 = vunpack.c.h.b16 %v680
      %v783 = vunpack.c.l.b16 %v681
      %v784 = vunpack.c.h.b16 %v681
      %v785 = vunpack.c.l.b16 %v682
      %v786 = vunpack.c.h.b16 %v682
      %v787 = vunpack.c.l.b16 %v683
      %v788 = vunpack.c.h.b16 %v683
      %v789 = vunpack.c.l.b16 %v684
      %v790 = vunpack.c.h.b16 %v684
      %v791 = vunpack.c.l.b16 %v685
      %v792 = vunpack.c.h.b16 %v685
      %v793 = vunpack.c.l.b16 %v686
      %v794 = vunpack.c.h.b16 %v686
      %v795 = vunpack.c.l.b16 %v687
      %v796 = vunpack.c.h.b16 %v687
      %v797 = vunpack.c.l.b16 %v688
      %v798 = vunpack.c.h.b16 %v688
      %v799 = vunpack.c.l.b16 %v689
      %v800 = vunpack.c.h.b16 %v689
      %v801 = vunpack.c.l.b16 %v690
      %v802 = vunpack.c.h.b16 %v690
      %v803 = vunpack.c.l.b16 %v691
      %v804 = vunpack.c.h.b16 %v691
      %v805 = vunpack.c.l.b16 %v692
      %v806 = vunpack.c.h.b16 %v692
      %v807 = vunpack.c.l.b16 %v693
      %v808 = vunpack.c.h.b16 %v693
      %v809 = vunpack.c.l.b16 %v694
      %v810 = vunpack.c.h.b16 %v694
      %v811 = vunpack.c.l.b16 %v695
      %v812 = vunpack.c.h.b16 %v695
      %v813 = vunpack.c.l.b16 %v696
      %v814 = vunpack.c.h.b16 %v696
      %v815 = vunpack.c.l.b16 %v697
      %v816 = vunpack.c.h.b16 %v697
      %v817 = vunpack.c.l.b16 %v698
      %v818 = vunpack.c.h.b16 %v698
      %v819 = vunpack.c.l.b16 %v699
      %v820 = vunpack.c.h.b16 %v699
      %v821 = vunpack.c.l.b16 %v700
      %v822 = vunpack.c.h.b16 %v700
      %v823 = vpack.c.b16 %v763, %v759
      %v824 = vpack.c.b16 %v764, %v760
      %v825 = vpack.c.b16 %v765, %v761
      %v826 = vpack.c.b16 %v766, %v762
      %v827 = vpack.c.b16 %v771, %v767
      %v828 = vpack.c.b16 %v772, %v768
      %v829 = vpack.c.b16 %v773, %v769
      %v830 = vpack.c.b16 %v774, %v770
      %v831 = vpack.c.b16 %v779, %v775
      %v832 = vpack.c.b16 %v780, %v776
      %v833 = vpack.c.b16 %v781, %v777
      %v834 = vpack.c.b16 %v782, %v778
      %v835 = vpack.c.b16 %v787, %v783
      %v836 = vpack.c.b16 %v788, %v784
      %v837 = vpack.c.b16 %v789, %v785
      %v838 = vpack.c.b16 %v790, %v786
      %v839 = vpack.c.b16 %v795, %v791
      %v840 = vpack.c.b16 %v796, %v792
      %v841 = vpack.c.b16 %v797, %v793
      %v842 = vpack.c.b16 %v798, %v794
      %v843 = vpack.c.b16 %v803, %v799
      %v844 = vpack.c.b16 %v804, %v800
      %v845 = vpack.c.b16 %v805, %v801
      %v846 = vpack.c.b16 %v806, %v802
      %v847 = vpack.c.b16 %v811, %v807
      %v848 = vpack.c.b16 %v812, %v808
      %v849 = vpack.c.b16 %v813, %v809
      %v850 = vpack.c.b16 %v814, %v810
      %v851 = vpack.c.b16 %v819, %v815
      %v852 = vpack.c.b16 %v820, %v816
      %v853 = vpack.c.b16 %v821, %v817
      %v854 = vpack.c.b16 %v822, %v818
      %887 = vmatprep.subr.bf16.mxu0 %v852
      %888 = vmatpush1.bf16.msra.mxu0 %v851
      %889 = vmatprep.subr.bf16.mxu0 %v848
      %890 = vmatpush1.bf16.msra.mxu0 %v847
      %891 = vmatprep.subr.bf16.mxu0 %v844
      %892 = vmatpush1.bf16.msra.mxu0 %v843
      %893 = vmatprep.subr.bf16.mxu0 %v840
      %894 = vmatpush1.bf16.msra.mxu0 %v839
      %895 = vmatprep.subr.bf16.mxu0 %v836
      %896 = vmatpush1.bf16.msra.mxu0 %v835
      %897 = vmatprep.subr.bf16.mxu0 %v832
      %898 = vmatpush1.bf16.msra.mxu0 %v831
      %899 = vmatprep.subr.bf16.mxu0 %v828
      %900 = vmatpush1.bf16.msra.mxu0 %v827
      %901 = vmatprep.subr.bf16.mxu0 %v824
      %902 = vmatpush1.bf16.msra.mxu0 %v823
      %903 = vmatprep.subr.bf16.mxu0 0
      %904 = vmatpush2.bf16.msra.mxu0 0
      %905 = vmatprep.subr.bf16.mxu0 0
      %906 = vmatpush2.bf16.msra.mxu0 0
      %907 = vmatprep.subr.bf16.mxu0 0
      %908 = vmatpush2.bf16.msra.mxu0 0
      %909 = vmatprep.subr.bf16.mxu0 0
      %910 = vmatpush2.bf16.msra.mxu0 0
      %911 = vmatprep.subr.bf16.mxu0 0
      %912 = vmatpush2.bf16.msra.mxu0 0
      %913 = vmatprep.subr.bf16.mxu0 0
      %914 = vmatpush2.bf16.msra.mxu0 0
      %915 = vmatprep.subr.bf16.mxu0 0
      %916 = vmatpush2.bf16.msra.mxu0 0
      %917 = vmatprep.subr.bf16.mxu0 0
      %918 = vmatpush2.bf16.msra.mxu0 0
      %919 = vmatprep.mubr.bf16.mxu0 0
      %920 = vmatmul.mubr.bf16.gmra.mxu0 %v701
      %v921 = vpop.f32.mrf.mxu0
      %v922 = vadd.f32 %v710, %v921
      %v923 = vpop.f32.mrf.mxu0
      %v924 = vadd.f32 %v714, %v923
      %v925 = vpop.f32.mrf.mxu0
      %v926 = vadd.f32 %v710, %v925
      %v927 = vpop.f32.mrf.mxu0
      %v928 = vadd.f32 %v714, %v927
      %929 = vmatprep.mubr.bf16.mxu0 0
      %930 = vmatmul.mubr.bf16.gmra.mxu0 %v702
      %v931 = vpop.f32.mrf.mxu0
      %v932 = vadd.f32 %v710, %v931
      %v933 = vpop.f32.mrf.mxu0
      %v934 = vadd.f32 %v714, %v933
      %v935 = vpop.f32.mrf.mxu0
      %v936 = vadd.f32 %v710, %v935
      %v937 = vpop.f32.mrf.mxu0
      %v938 = vadd.f32 %v714, %v937
      %939 = vmatprep.mubr.bf16.mxu0 0
      %940 = vmatmul.mubr.bf16.gmra.mxu0 %v703
      %v941 = vpop.f32.mrf.mxu0
      %v942 = vadd.f32 %v710, %v941
      %v943 = vpop.f32.mrf.mxu0
      %v944 = vadd.f32 %v714, %v943
      %v945 = vpop.f32.mrf.mxu0
      %v946 = vadd.f32 %v710, %v945
      %v947 = vpop.f32.mrf.mxu0
      %v948 = vadd.f32 %v714, %v947
      %949 = vmatprep.mubr.bf16.mxu0 0
      %950 = vmatmul.mubr.bf16.gmra.mxu0 %v704
      %v951 = vpop.f32.mrf.mxu0
      %v952 = vadd.f32 %v710, %v951
      %v953 = vpop.f32.mrf.mxu0
      %v954 = vadd.f32 %v714, %v953
      %v955 = vpop.f32.mrf.mxu0
      %v956 = vadd.f32 %v710, %v955
      %v957 = vpop.f32.mrf.mxu0
      %v958 = vadd.f32 %v714, %v957
      %959 = vdwg.mxu0
      %960 = vmatprep.subr.bf16.mxu0 %v854
      %961 = vmatpush1.bf16.msra.mxu0 %v853
      %962 = vmatprep.subr.bf16.mxu0 %v850
      %963 = vmatpush1.bf16.msra.mxu0 %v849
      %964 = vmatprep.subr.bf16.mxu0 %v846
      %965 = vmatpush1.bf16.msra.mxu0 %v845
      %966 = vmatprep.subr.bf16.mxu0 %v842
      %967 = vmatpush1.bf16.msra.mxu0 %v841
      %968 = vmatprep.subr.bf16.mxu0 %v838
      %969 = vmatpush1.bf16.msra.mxu0 %v837
      %970 = vmatprep.subr.bf16.mxu0 %v834
      %971 = vmatpush1.bf16.msra.mxu0 %v833
      %972 = vmatprep.subr.bf16.mxu0 %v830
      %973 = vmatpush1.bf16.msra.mxu0 %v829
      %974 = vmatprep.subr.bf16.mxu0 %v826
      %975 = vmatpush1.bf16.msra.mxu0 %v825
      %976 = vmatprep.subr.bf16.mxu0 0
      %977 = vmatpush2.bf16.msra.mxu0 0
      %978 = vmatprep.subr.bf16.mxu0 0
      %979 = vmatpush2.bf16.msra.mxu0 0
      %980 = vmatprep.subr.bf16.mxu0 0
      %981 = vmatpush2.bf16.msra.mxu0 0
      %982 = vmatprep.subr.bf16.mxu0 0
      %983 = vmatpush2.bf16.msra.mxu0 0
      %984 = vmatprep.subr.bf16.mxu0 0
      %985 = vmatpush2.bf16.msra.mxu0 0
      %986 = vmatprep.subr.bf16.mxu0 0
      %987 = vmatpush2.bf16.msra.mxu0 0
      %988 = vmatprep.subr.bf16.mxu0 0
      %989 = vmatpush2.bf16.msra.mxu0 0
      %990 = vmatprep.subr.bf16.mxu0 0
      %991 = vmatpush2.bf16.msra.mxu0 0
      %992 = vmatprep.mubr.bf16.mxu0 0
      %993 = vmatmul.mubr.bf16.gmra.mxu0 %v701
      %v994 = vpop.f32.mrf.mxu0
      %v995 = vadd.f32 %v718, %v994
      %v996 = vpop.f32.mrf.mxu0
      %v997 = vadd.f32 %v722, %v996
      %v998 = vpop.f32.mrf.mxu0
      %v999 = vadd.f32 %v718, %v998
      %v1000 = vpop.f32.mrf.mxu0
      %v1001 = vadd.f32 %v722, %v1000
      %1002 = vmatprep.mubr.bf16.mxu0 0
      %1003 = vmatmul.mubr.bf16.gmra.mxu0 %v702
      %v1004 = vpop.f32.mrf.mxu0
      %v1005 = vadd.f32 %v718, %v1004
      %v1006 = vpop.f32.mrf.mxu0
      %v1007 = vadd.f32 %v722, %v1006
      %v1008 = vpop.f32.mrf.mxu0
      %v1009 = vadd.f32 %v718, %v1008
      %v1010 = vpop.f32.mrf.mxu0
      %v1011 = vadd.f32 %v722, %v1010
      %1012 = vmatprep.mubr.bf16.mxu0 0
      %1013 = vmatmul.mubr.bf16.gmra.mxu0 %v703
      %v1014 = vpop.f32.mrf.mxu0
      %v1015 = vadd.f32 %v718, %v1014
      %v1016 = vpop.f32.mrf.mxu0
      %v1017 = vadd.f32 %v722, %v1016
      %v1018 = vpop.f32.mrf.mxu0
      %v1019 = vadd.f32 %v718, %v1018
      %v1020 = vpop.f32.mrf.mxu0
      %v1021 = vadd.f32 %v722, %v1020
      %1022 = vmatprep.mubr.bf16.mxu0 0
      %1023 = vmatmul.mubr.bf16.gmra.mxu0 %v704
      %v1024 = vpop.f32.mrf.mxu0
      %v1025 = vadd.f32 %v718, %v1024
      %v1026 = vpop.f32.mrf.mxu0
      %v1027 = vadd.f32 %v722, %v1026
      %v1028 = vpop.f32.mrf.mxu0
      %v1029 = vadd.f32 %v718, %v1028
      %v1030 = vpop.f32.mrf.mxu0
      %v1031 = vadd.f32 %v722, %v1030
      %1032 = vdwg.mxu0
      %v1033 = vxor.u32 %v922, 2147483648
      %v1034 = vxor.u32 %v924, 2147483648
      %v1035 = vxor.u32 %v995, 2147483648
      %v1036 = vxor.u32 %v997, 2147483648
      %v1037 = vxor.u32 %v926, 2147483648
      %v1038 = vxor.u32 %v928, 2147483648
      %v1039 = vxor.u32 %v999, 2147483648
      %v1040 = vxor.u32 %v1001, 2147483648
      %v1041 = vxor.u32 %v932, 2147483648
      %v1042 = vxor.u32 %v934, 2147483648
      %v1043 = vxor.u32 %v1005, 2147483648
      %v1044 = vxor.u32 %v1007, 2147483648
      %v1045 = vxor.u32 %v936, 2147483648
      %v1046 = vxor.u32 %v938, 2147483648
      %v1047 = vxor.u32 %v1009, 2147483648
      %v1048 = vxor.u32 %v1011, 2147483648
      %v1049 = vxor.u32 %v942, 2147483648
      %v1050 = vxor.u32 %v944, 2147483648
      %v1051 = vxor.u32 %v1015, 2147483648
      %v1052 = vxor.u32 %v1017, 2147483648
      %v1053 = vxor.u32 %v946, 2147483648
      %v1054 = vxor.u32 %v948, 2147483648
      %v1055 = vxor.u32 %v1019, 2147483648
      %v1056 = vxor.u32 %v1021, 2147483648
      %v1057 = vxor.u32 %v952, 2147483648
      %v1058 = vxor.u32 %v954, 2147483648
      %v1059 = vxor.u32 %v1025, 2147483648
      %v1060 = vxor.u32 %v1027, 2147483648
      %v1061 = vxor.u32 %v956, 2147483648
      %v1062 = vxor.u32 %v958, 2147483648
      %v1063 = vxor.u32 %v1029, 2147483648
      %v1064 = vxor.u32 %v1031, 2147483648
      %v1065 = vmul.f32 %v1033, 1.442695
      %v1066 = vpow.pop %v1065
      %v1067 = vmul.f32 %v1034, 1.442695
      %v1068 = vpow.pop %v1067
      %v1069 = vmul.f32 %v1035, 1.442695
      %v1070 = vpow.pop %v1069
      %v1071 = vmul.f32 %v1036, 1.442695
      %v1072 = vpow.pop %v1071
      %v1073 = vmul.f32 %v1037, 1.442695
      %v1074 = vpow.pop %v1073
      %v1075 = vmul.f32 %v1038, 1.442695
      %v1076 = vpow.pop %v1075
      %v1077 = vmul.f32 %v1039, 1.442695
      %v1078 = vpow.pop %v1077
      %v1079 = vmul.f32 %v1040, 1.442695
      %v1080 = vpow.pop %v1079
      %v1081 = vmul.f32 %v1041, 1.442695
      %v1082 = vpow.pop %v1081
      %v1083 = vmul.f32 %v1042, 1.442695
      %v1084 = vpow.pop %v1083
      %v1085 = vmul.f32 %v1043, 1.442695
      %v1086 = vpow.pop %v1085
      %v1087 = vmul.f32 %v1044, 1.442695
      %v1088 = vpow.pop %v1087
      %v1089 = vmul.f32 %v1045, 1.442695
      %v1090 = vpow.pop %v1089
      %v1091 = vmul.f32 %v1046, 1.442695
      %v1092 = vpow.pop %v1091
      %v1093 = vmul.f32 %v1047, 1.442695
      %v1094 = vpow.pop %v1093
      %v1095 = vmul.f32 %v1048, 1.442695
      %v1096 = vpow.pop %v1095
      %v1097 = vmul.f32 %v1049, 1.442695
      %v1098 = vpow.pop %v1097
      %v1099 = vmul.f32 %v1050, 1.442695
      %v1100 = vpow.pop %v1099
      %v1101 = vmul.f32 %v1051, 1.442695
      %v1102 = vpow.pop %v1101
      %v1103 = vmul.f32 %v1052, 1.442695
      %v1104 = vpow.pop %v1103
      %v1105 = vmul.f32 %v1053, 1.442695
      %v1106 = vpow.pop %v1105
      %v1107 = vmul.f32 %v1054, 1.442695
      %v1108 = vpow.pop %v1107
      %v1109 = vmul.f32 %v1055, 1.442695
      %v1110 = vpow.pop %v1109
      %v1111 = vmul.f32 %v1056, 1.442695
      %v1112 = vpow.pop %v1111
      %v1113 = vmul.f32 %v1057, 1.442695
      %v1114 = vpow.pop %v1113
      %v1115 = vmul.f32 %v1058, 1.442695
      %v1116 = vpow.pop %v1115
      %v1117 = vmul.f32 %v1059, 1.442695
      %v1118 = vpow.pop %v1117
      %v1119 = vmul.f32 %v1060, 1.442695
      %v1120 = vpow.pop %v1119
      %v1121 = vmul.f32 %v1061, 1.442695
      %v1122 = vpow.pop %v1121
      %v1123 = vmul.f32 %v1062, 1.442695
      %v1124 = vpow.pop %v1123
      %v1125 = vmul.f32 %v1063, 1.442695
      %v1126 = vpow.pop %v1125
      %v1127 = vmul.f32 %v1064, 1.442695
      %v1128 = vpow.pop %v1127
      %v1129 = vadd.f32 %v1066, 1.0
      %v1130 = vadd.f32 %v1068, 1.0
      %v1131 = vadd.f32 %v1070, 1.0
      %v1132 = vadd.f32 %v1072, 1.0
      %v1133 = vadd.f32 %v1074, 1.0
      %v1134 = vadd.f32 %v1076, 1.0
      %v1135 = vadd.f32 %v1078, 1.0
      %v1136 = vadd.f32 %v1080, 1.0
      %v1137 = vadd.f32 %v1082, 1.0
      %v1138 = vadd.f32 %v1084, 1.0
      %v1139 = vadd.f32 %v1086, 1.0
      %v1140 = vadd.f32 %v1088, 1.0
      %v1141 = vadd.f32 %v1090, 1.0
      %v1142 = vadd.f32 %v1092, 1.0
      %v1143 = vadd.f32 %v1094, 1.0
      %v1144 = vadd.f32 %v1096, 1.0
      %v1145 = vadd.f32 %v1098, 1.0
      %v1146 = vadd.f32 %v1100, 1.0
      %v1147 = vadd.f32 %v1102, 1.0
      %v1148 = vadd.f32 %v1104, 1.0
      %v1149 = vadd.f32 %v1106, 1.0
      %v1150 = vadd.f32 %v1108, 1.0
      %v1151 = vadd.f32 %v1110, 1.0
      %v1152 = vadd.f32 %v1112, 1.0
      %v1153 = vadd.f32 %v1114, 1.0
      %v1154 = vadd.f32 %v1116, 1.0
      %v1155 = vadd.f32 %v1118, 1.0
      %v1156 = vadd.f32 %v1120, 1.0
      %v1157 = vadd.f32 %v1122, 1.0
      %v1158 = vadd.f32 %v1124, 1.0
      %v1159 = vadd.f32 %v1126, 1.0
      %v1160 = vadd.f32 %v1128, 1.0
      %v1161 = vrcp.pop %v1129
      %v1162 = vmul.f32 1.0, %v1161
      %v1163 = vrcp.pop %v1130
      %v1164 = vmul.f32 1.0, %v1163
      %v1165 = vrcp.pop %v1131
      %v1166 = vmul.f32 1.0, %v1165
      %v1167 = vrcp.pop %v1132
      %v1168 = vmul.f32 1.0, %v1167
      %v1169 = vrcp.pop %v1133
      %v1170 = vmul.f32 1.0, %v1169
      %v1171 = vrcp.pop %v1134
      %v1172 = vmul.f32 1.0, %v1171
      %v1173 = vrcp.pop %v1135
      %v1174 = vmul.f32 1.0, %v1173
      %v1175 = vrcp.pop %v1136
      %v1176 = vmul.f32 1.0, %v1175
      %v1177 = vrcp.pop %v1137
      %v1178 = vmul.f32 1.0, %v1177
      %v1179 = vrcp.pop %v1138
      %v1180 = vmul.f32 1.0, %v1179
      %v1181 = vrcp.pop %v1139
      %v1182 = vmul.f32 1.0, %v1181
      %v1183 = vrcp.pop %v1140
      %v1184 = vmul.f32 1.0, %v1183
      %v1185 = vrcp.pop %v1141
      %v1186 = vmul.f32 1.0, %v1185
      %v1187 = vrcp.pop %v1142
      %v1188 = vmul.f32 1.0, %v1187
      %v1189 = vrcp.pop %v1143
      %v1190 = vmul.f32 1.0, %v1189
      %v1191 = vrcp.pop %v1144
      %v1192 = vmul.f32 1.0, %v1191
      %v1193 = vrcp.pop %v1145
      %v1194 = vmul.f32 1.0, %v1193
      %v1195 = vrcp.pop %v1146
      %v1196 = vmul.f32 1.0, %v1195
      %v1197 = vrcp.pop %v1147
      %v1198 = vmul.f32 1.0, %v1197
      %v1199 = vrcp.pop %v1148
      %v1200 = vmul.f32 1.0, %v1199
      %v1201 = vrcp.pop %v1149
      %v1202 = vmul.f32 1.0, %v1201
      %v1203 = vrcp.pop %v1150
      %v1204 = vmul.f32 1.0, %v1203
      %v1205 = vrcp.pop %v1151
      %v1206 = vmul.f32 1.0, %v1205
      %v1207 = vrcp.pop %v1152
      %v1208 = vmul.f32 1.0, %v1207
      %v1209 = vrcp.pop %v1153
      %v1210 = vmul.f32 1.0, %v1209
      %v1211 = vrcp.pop %v1154
      %v1212 = vmul.f32 1.0, %v1211
      %v1213 = vrcp.pop %v1155
      %v1214 = vmul.f32 1.0, %v1213
      %v1215 = vrcp.pop %v1156
      %v1216 = vmul.f32 1.0, %v1215
      %v1217 = vrcp.pop %v1157
      %v1218 = vmul.f32 1.0, %v1217
      %v1219 = vrcp.pop %v1158
      %v1220 = vmul.f32 1.0, %v1219
      %v1221 = vrcp.pop %v1159
      %v1222 = vmul.f32 1.0, %v1221
      %v1223 = vrcp.pop %v1160
      %v1224 = vmul.f32 1.0, %v1223
      %v1225 = vmul.f32 %v922, %v1162
      %v1226 = vmul.f32 %v924, %v1164
      %v1227 = vmul.f32 %v995, %v1166
      %v1228 = vmul.f32 %v997, %v1168
      %v1229 = vmul.f32 %v926, %v1170
      %v1230 = vmul.f32 %v928, %v1172
      %v1231 = vmul.f32 %v999, %v1174
      %v1232 = vmul.f32 %v1001, %v1176
      %v1233 = vmul.f32 %v932, %v1178
      %v1234 = vmul.f32 %v934, %v1180
      %v1235 = vmul.f32 %v1005, %v1182
      %v1236 = vmul.f32 %v1007, %v1184
      %v1237 = vmul.f32 %v936, %v1186
      %v1238 = vmul.f32 %v938, %v1188
      %v1239 = vmul.f32 %v1009, %v1190
      %v1240 = vmul.f32 %v1011, %v1192
      %v1241 = vmul.f32 %v942, %v1194
      %v1242 = vmul.f32 %v944, %v1196
      %v1243 = vmul.f32 %v1015, %v1198
      %v1244 = vmul.f32 %v1017, %v1200
      %v1245 = vmul.f32 %v946, %v1202
      %v1246 = vmul.f32 %v948, %v1204
      %v1247 = vmul.f32 %v1019, %v1206
      %v1248 = vmul.f32 %v1021, %v1208
      %v1249 = vmul.f32 %v952, %v1210
      %v1250 = vmul.f32 %v954, %v1212
      %v1251 = vmul.f32 %v1025, %v1214
      %v1252 = vmul.f32 %v1027, %v1216
      %v1253 = vmul.f32 %v956, %v1218
      %v1254 = vmul.f32 %v958, %v1220
      %v1255 = vmul.f32 %v1029, %v1222
      %v1256 = vmul.f32 %v1031, %v1224
      %1257 = vst [vmem:[#allocation2] sm:$0xff] 0.0
      %1258 = vst [vmem:[#allocation2 + $0x8] sm:$0xff] 0.0
      %1259 = vst [vmem:[#allocation2 + $0x10] sm:$0xff] 0.0
      %1260 = vst [vmem:[#allocation2 + $0x18] sm:$0xff] 0.0
      %1261 = vst [vmem:[#allocation2 + $0x20] sm:$0x3] 0.0
      %1262 = vst [vmem:[#allocation2 + $0x28] sm:$0x3] 0.0
      %1263 = vst [vmem:[#allocation2 + $0x30] sm:$0x3] 0.0
      %1264 = vst [vmem:[#allocation2 + $0x38] sm:$0x3] 0.0
      %1265 = vst [vmem:[#allocation2 + $0x40] sm:$0xff] 0.0
      %1266 = vst [vmem:[#allocation2 + $0x48] sm:$0xff] 0.0
      %1267 = vst [vmem:[#allocation2 + $0x50] sm:$0xff] 0.0
      %1268 = vst [vmem:[#allocation2 + $0x58] sm:$0xff] 0.0
      %1269 = vst [vmem:[#allocation2 + $0x60] sm:$0x3] 0.0
      %1270 = vst [vmem:[#allocation2 + $0x68] sm:$0x3] 0.0
      %1271 = vst [vmem:[#allocation2 + $0x70] sm:$0x3] 0.0
      %1272 = vst [vmem:[#allocation2 + $0x78] sm:$0x3] 0.0
      %1273 = vst [vmem:[#allocation2 + $0x80] sm:$0xff] 0.0
      %1274 = vst [vmem:[#allocation2 + $0x88] sm:$0xff] 0.0
      %1275 = vst [vmem:[#allocation2 + $0x90] sm:$0xff] 0.0
      %1276 = vst [vmem:[#allocation2 + $0x98] sm:$0xff] 0.0
      %1277 = vst [vmem:[#allocation2 + $0xa0] sm:$0x3] 0.0
      %1278 = vst [vmem:[#allocation2 + $0xa8] sm:$0x3] 0.0
      %1279 = vst [vmem:[#allocation2 + $0xb0] sm:$0x3] 0.0
      %1280 = vst [vmem:[#allocation2 + $0xb8] sm:$0x3] 0.0
      %1281 = vst [vmem:[#allocation2 + $0xc0] sm:$0xff] 0.0
      %1282 = vst [vmem:[#allocation2 + $0xc8] sm:$0xff] 0.0
      %1283 = vst [vmem:[#allocation2 + $0xd0] sm:$0xff] 0.0
      %1284 = vst [vmem:[#allocation2 + $0xd8] sm:$0xff] 0.0
      %1285 = vst [vmem:[#allocation2 + $0xe0] sm:$0x3] 0.0
      %1286 = vst [vmem:[#allocation2 + $0xe8] sm:$0x3] 0.0
      %1287 = vst [vmem:[#allocation2 + $0xf0] sm:$0x3] 0.0
      %1288 = vst [vmem:[#allocation2 + $0xf8] sm:$0x3] 0.0
      %1289 = vst [vmem:[#allocation2 + $0x100] sm:$0xff] 0.0
      %1290 = vst [vmem:[#allocation2 + $0x108] sm:$0xff] 0.0
      %1291 = vst [vmem:[#allocation2 + $0x110] sm:$0xff] 0.0
      %1292 = vst [vmem:[#allocation2 + $0x118] sm:$0xff] 0.0
      %1293 = vst [vmem:[#allocation2 + $0x120] sm:$0x3] 0.0
      %1294 = vst [vmem:[#allocation2 + $0x128] sm:$0x3] 0.0
      %1295 = vst [vmem:[#allocation2 + $0x130] sm:$0x3] 0.0
      %1296 = vst [vmem:[#allocation2 + $0x138] sm:$0x3] 0.0
      %1297 = vst [vmem:[#allocation2 + $0x140] sm:$0xff] 0.0
      %1298 = vst [vmem:[#allocation2 + $0x148] sm:$0xff] 0.0
      %1299 = vst [vmem:[#allocation2 + $0x150] sm:$0xff] 0.0
      %1300 = vst [vmem:[#allocation2 + $0x158] sm:$0xff] 0.0
      %1301 = vst [vmem:[#allocation2 + $0x160] sm:$0x3] 0.0
      %1302 = vst [vmem:[#allocation2 + $0x168] sm:$0x3] 0.0
      %1303 = vst [vmem:[#allocation2 + $0x170] sm:$0x3] 0.0
      %1304 = vst [vmem:[#allocation2 + $0x178] sm:$0x3] 0.0
      %1305 = vst [vmem:[#allocation2 + $0x180] sm:$0xff] 0.0
      %1306 = vst [vmem:[#allocation2 + $0x188] sm:$0xff] 0.0
      %1307 = vst [vmem:[#allocation2 + $0x190] sm:$0xff] 0.0
      %1308 = vst [vmem:[#allocation2 + $0x198] sm:$0xff] 0.0
      %1309 = vst [vmem:[#allocation2 + $0x1a0] sm:$0x3] 0.0
      %1310 = vst [vmem:[#allocation2 + $0x1a8] sm:$0x3] 0.0
      %1311 = vst [vmem:[#allocation2 + $0x1b0] sm:$0x3] 0.0
      %1312 = vst [vmem:[#allocation2 + $0x1b8] sm:$0x3] 0.0
      %1313 = vst [vmem:[#allocation2 + $0x1c0] sm:$0xff] 0.0
      %1314 = vst [vmem:[#allocation2 + $0x1c8] sm:$0xff] 0.0
      %1315 = vst [vmem:[#allocation2 + $0x1d0] sm:$0xff] 0.0
      %1316 = vst [vmem:[#allocation2 + $0x1d8] sm:$0xff] 0.0
      %1317 = vst [vmem:[#allocation2 + $0x1e0] sm:$0x3] 0.0
      %1318 = vst [vmem:[#allocation2 + $0x1e8] sm:$0x3] 0.0
      %1319 = vst [vmem:[#allocation2 + $0x1f0] sm:$0x3] 0.0
      %1320 = vst [vmem:[#allocation2 + $0x1f8] sm:$0x3] 0.0
      %1321 = vst [vmem:[#allocation2 + $0x200] sm:$0xff] 0.0
      %1322 = vst [vmem:[#allocation2 + $0x208] sm:$0xff] 0.0
      %1323 = vst [vmem:[#allocation2 + $0x210] sm:$0xff] 0.0
      %1324 = vst [vmem:[#allocation2 + $0x218] sm:$0xff] 0.0
      %1325 = vst [vmem:[#allocation2 + $0x220] sm:$0x3] 0.0
      %1326 = vst [vmem:[#allocation2 + $0x228] sm:$0x3] 0.0
      %1327 = vst [vmem:[#allocation2 + $0x230] sm:$0x3] 0.0
      %1328 = vst [vmem:[#allocation2 + $0x238] sm:$0x3] 0.0
      %1329 = vst [vmem:[#allocation2 + $0x240] sm:$0xff] 0.0
      %1330 = vst [vmem:[#allocation2 + $0x248] sm:$0xff] 0.0
      %1331 = vst [vmem:[#allocation2 + $0x250] sm:$0xff] 0.0
      %1332 = vst [vmem:[#allocation2 + $0x258] sm:$0xff] 0.0
      %1333 = vst [vmem:[#allocation2 + $0x260] sm:$0x3] 0.0
      %1334 = vst [vmem:[#allocation2 + $0x268] sm:$0x3] 0.0
      %1335 = vst [vmem:[#allocation2 + $0x270] sm:$0x3] 0.0
      %1336 = vst [vmem:[#allocation2 + $0x278] sm:$0x3] 0.0
      %v1369 = vrot.slane %v1225, 7
      %v1370 = vrot.slane %v1226, 7
      %v1371 = vrot.slane %v1227, 7
      %v1372 = vrot.slane %v1228, 7
      %v1373 = vrot.slane %v1229, 7
      %v1374 = vrot.slane %v1230, 7
      %v1375 = vrot.slane %v1231, 7
      %v1376 = vrot.slane %v1232, 7
      %v1377 = vrot.slane %v1233, 7
      %v1378 = vrot.slane %v1234, 7
      %v1379 = vrot.slane %v1235, 7
      %v1380 = vrot.slane %v1236, 7
      %v1381 = vrot.slane %v1237, 7
      %v1382 = vrot.slane %v1238, 7
      %v1383 = vrot.slane %v1239, 7
      %v1384 = vrot.slane %v1240, 7
      %v1385 = vrot.slane %v1241, 7
      %v1386 = vrot.slane %v1242, 7
      %v1387 = vrot.slane %v1243, 7
      %v1388 = vrot.slane %v1244, 7
      %v1389 = vrot.slane %v1245, 7
      %v1390 = vrot.slane %v1246, 7
      %v1391 = vrot.slane %v1247, 7
      %v1392 = vrot.slane %v1248, 7
      %v1393 = vrot.slane %v1249, 7
      %v1394 = vrot.slane %v1250, 7
      %v1395 = vrot.slane %v1251, 7
      %v1396 = vrot.slane %v1252, 7
      %v1397 = vrot.slane %v1253, 7
      %v1398 = vrot.slane %v1254, 7
      %v1399 = vrot.slane %v1255, 7
      %v1400 = vrot.slane %v1256, 7
      %s1433 = scalar_lea.vmem [#allocation2], 64
      %1434 = vst [vmem:[%s1433] sm:$0xfe] %v1369
      %1435 = vst [vmem:[%s1433 + $0x8] sm:$0xfe] %v1370
      %1436 = vst [vmem:[%s1433 + $0x10] sm:$0xfe] %v1371
      %1437 = vst [vmem:[%s1433 + $0x18] sm:$0xfe] %v1372
      %1438 = vst [vmem:[%s1433 + $0x20] sm:$0x1] %v1369
      %1439 = vst [vmem:[%s1433 + $0x28] sm:$0x1] %v1370
      %1440 = vst [vmem:[%s1433 + $0x30] sm:$0x1] %v1371
      %1441 = vst [vmem:[%s1433 + $0x38] sm:$0x1] %v1372
      %1442 = vst [vmem:[%s1433 + $0x40] sm:$0xfe] %v1373
      %1443 = vst [vmem:[%s1433 + $0x48] sm:$0xfe] %v1374
      %1444 = vst [vmem:[%s1433 + $0x50] sm:$0xfe] %v1375
      %1445 = vst [vmem:[%s1433 + $0x58] sm:$0xfe] %v1376
      %1446 = vst [vmem:[%s1433 + $0x60] sm:$0x1] %v1373
      %1447 = vst [vmem:[%s1433 + $0x68] sm:$0x1] %v1374
      %1448 = vst [vmem:[%s1433 + $0x70] sm:$0x1] %v1375
      %1449 = vst [vmem:[%s1433 + $0x78] sm:$0x1] %v1376
      %1450 = vst [vmem:[%s1433 + $0x80] sm:$0xfe] %v1377
      %1451 = vst [vmem:[%s1433 + $0x88] sm:$0xfe] %v1378
      %1452 = vst [vmem:[%s1433 + $0x90] sm:$0xfe] %v1379
      %1453 = vst [vmem:[%s1433 + $0x98] sm:$0xfe] %v1380
      %1454 = vst [vmem:[%s1433 + $0xa0] sm:$0x1] %v1377
      %1455 = vst [vmem:[%s1433 + $0xa8] sm:$0x1] %v1378
      %1456 = vst [vmem:[%s1433 + $0xb0] sm:$0x1] %v1379
      %1457 = vst [vmem:[%s1433 + $0xb8] sm:$0x1] %v1380
      %1458 = vst [vmem:[%s1433 + $0xc0] sm:$0xfe] %v1381
      %1459 = vst [vmem:[%s1433 + $0xc8] sm:$0xfe] %v1382
      %1460 = vst [vmem:[%s1433 + $0xd0] sm:$0xfe] %v1383
      %1461 = vst [vmem:[%s1433 + $0xd8] sm:$0xfe] %v1384
      %1462 = vst [vmem:[%s1433 + $0xe0] sm:$0x1] %v1381
      %1463 = vst [vmem:[%s1433 + $0xe8] sm:$0x1] %v1382
      %1464 = vst [vmem:[%s1433 + $0xf0] sm:$0x1] %v1383
      %1465 = vst [vmem:[%s1433 + $0xf8] sm:$0x1] %v1384
      %1466 = vst [vmem:[%s1433 + $0x100] sm:$0xfe] %v1385
      %1467 = vst [vmem:[%s1433 + $0x108] sm:$0xfe] %v1386
      %1468 = vst [vmem:[%s1433 + $0x110] sm:$0xfe] %v1387
      %1469 = vst [vmem:[%s1433 + $0x118] sm:$0xfe] %v1388
      %1470 = vst [vmem:[%s1433 + $0x120] sm:$0x1] %v1385
      %1471 = vst [vmem:[%s1433 + $0x128] sm:$0x1] %v1386
      %1472 = vst [vmem:[%s1433 + $0x130] sm:$0x1] %v1387
      %1473 = vst [vmem:[%s1433 + $0x138] sm:$0x1] %v1388
      %1474 = vst [vmem:[%s1433 + $0x140] sm:$0xfe] %v1389
      %1475 = vst [vmem:[%s1433 + $0x148] sm:$0xfe] %v1390
      %1476 = vst [vmem:[%s1433 + $0x150] sm:$0xfe] %v1391
      %1477 = vst [vmem:[%s1433 + $0x158] sm:$0xfe] %v1392
      %1478 = vst [vmem:[%s1433 + $0x160] sm:$0x1] %v1389
      %1479 = vst [vmem:[%s1433 + $0x168] sm:$0x1] %v1390
      %1480 = vst [vmem:[%s1433 + $0x170] sm:$0x1] %v1391
      %1481 = vst [vmem:[%s1433 + $0x178] sm:$0x1] %v1392
      %1482 = vst [vmem:[%s1433 + $0x180] sm:$0xfe] %v1393
      %1483 = vst [vmem:[%s1433 + $0x188] sm:$0xfe] %v1394
      %1484 = vst [vmem:[%s1433 + $0x190] sm:$0xfe] %v1395
      %1485 = vst [vmem:[%s1433 + $0x198] sm:$0xfe] %v1396
      %1486 = vst [vmem:[%s1433 + $0x1a0] sm:$0x1] %v1393
      %1487 = vst [vmem:[%s1433 + $0x1a8] sm:$0x1] %v1394
      %1488 = vst [vmem:[%s1433 + $0x1b0] sm:$0x1] %v1395
      %1489 = vst [vmem:[%s1433 + $0x1b8] sm:$0x1] %v1396
      %1490 = vst [vmem:[%s1433 + $0x1c0] sm:$0xfe] %v1397
      %1491 = vst [vmem:[%s1433 + $0x1c8] sm:$0xfe] %v1398
      %1492 = vst [vmem:[%s1433 + $0x1d0] sm:$0xfe] %v1399
      %1493 = vst [vmem:[%s1433 + $0x1d8] sm:$0xfe] %v1400
      %1494 = vst [vmem:[%s1433 + $0x1e0] sm:$0x1] %v1397
      %1495 = vst [vmem:[%s1433 + $0x1e8] sm:$0x1] %v1398
      %1496 = vst [vmem:[%s1433 + $0x1f0] sm:$0x1] %v1399
      %1497 = vst [vmem:[%s1433 + $0x1f8] sm:$0x1] %v1400
      %v1498 = vld [vmem:[%s5] sm:$0xff]
      %v1499 = vld [vmem:[%s5 + $0x8] sm:$0xff]
      %v1500 = vld [vmem:[%s5 + $0x10] sm:$0xff]
      %v1501 = vld [vmem:[%s5 + $0x18] sm:$0xff]
      %v1502 = vld [vmem:[%s5 + $0x20] sm:$0x1]
      %v1503 = vld [vmem:[%s5 + $0x28] sm:$0x1]
      %v1504 = vld [vmem:[%s5 + $0x30] sm:$0x1]
      %v1505 = vld [vmem:[%s5 + $0x38] sm:$0x1]
      %v1506 = vld [vmem:[#allocation2] sm:$0xff]
      %v1507 = vld [vmem:[#allocation2 + $0x8] sm:$0xff]
      %v1508 = vld [vmem:[#allocation2 + $0x10] sm:$0xff]
      %v1509 = vld [vmem:[#allocation2 + $0x18] sm:$0xff]
      %v1510 = vld [vmem:[#allocation2 + $0x40] sm:$0xff]
      %v1511 = vld [vmem:[#allocation2 + $0x48] sm:$0xff]
      %v1512 = vld [vmem:[#allocation2 + $0x50] sm:$0xff]
      %v1513 = vld [vmem:[#allocation2 + $0x58] sm:$0xff]
      %v1514 = vld [vmem:[#allocation2 + $0x80] sm:$0xff]
      %v1515 = vld [vmem:[#allocation2 + $0x88] sm:$0xff]
      %v1516 = vld [vmem:[#allocation2 + $0x90] sm:$0xff]
      %v1517 = vld [vmem:[#allocation2 + $0x98] sm:$0xff]
      %v1518 = vld [vmem:[#allocation2 + $0xc0] sm:$0xff]
      %v1519 = vld [vmem:[#allocation2 + $0xc8] sm:$0xff]
      %v1520 = vld [vmem:[#allocation2 + $0xd0] sm:$0xff]
      %v1521 = vld [vmem:[#allocation2 + $0xd8] sm:$0xff]
      %v1522 = vld [vmem:[#allocation2 + $0x100] sm:$0xff]
      %v1523 = vld [vmem:[#allocation2 + $0x108] sm:$0xff]
      %v1524 = vld [vmem:[#allocation2 + $0x110] sm:$0xff]
      %v1525 = vld [vmem:[#allocation2 + $0x118] sm:$0xff]
      %v1526 = vld [vmem:[#allocation2 + $0x140] sm:$0xff]
      %v1527 = vld [vmem:[#allocation2 + $0x148] sm:$0xff]
      %v1528 = vld [vmem:[#allocation2 + $0x150] sm:$0xff]
      %v1529 = vld [vmem:[#allocation2 + $0x158] sm:$0xff]
      %v1530 = vld [vmem:[#allocation2 + $0x180] sm:$0xff]
      %v1531 = vld [vmem:[#allocation2 + $0x188] sm:$0xff]
      %v1532 = vld [vmem:[#allocation2 + $0x190] sm:$0xff]
      %v1533 = vld [vmem:[#allocation2 + $0x198] sm:$0xff]
      %v1534 = vld [vmem:[#allocation2 + $0x1c0] sm:$0xff]
      %v1535 = vld [vmem:[#allocation2 + $0x1c8] sm:$0xff]
      %v1536 = vld [vmem:[#allocation2 + $0x1d0] sm:$0xff]
      %v1537 = vld [vmem:[#allocation2 + $0x1d8] sm:$0xff]
      %v1538 = vlaneseq
      %v1539 = vshrl.u32 %v1538, 7
      %v1540 = vsub.s32 0, %v1539
      %v1541 = vrot.slane %v1498, %v1540
      %v1542 = vlaneseq
      %v1543 = vshrl.u32 %v1542, 7
      %v1544 = vsub.s32 0, %v1543
      %v1545 = vrot.slane %v1499, %v1544
      %v1546 = vlaneseq
      %v1547 = vshrl.u32 %v1546, 7
      %v1548 = vsub.s32 0, %v1547
      %v1549 = vrot.slane %v1500, %v1548
      %v1550 = vlaneseq
      %v1551 = vshrl.u32 %v1550, 7
      %v1552 = vsub.s32 0, %v1551
      %v1553 = vrot.slane %v1501, %v1552
      %v1554 = vmul.f32 %v1506, %v1541
      %v1555 = vmul.f32 %v1507, %v1545
      %v1556 = vmul.f32 %v1508, %v1549
      %v1557 = vmul.f32 %v1509, %v1553
      %v1558 = vmul.f32 %v1510, %v1541
      %v1559 = vmul.f32 %v1511, %v1545
      %v1560 = vmul.f32 %v1512, %v1549
      %v1561 = vmul.f32 %v1513, %v1553
      %v1562 = vmul.f32 %v1514, %v1541
      %v1563 = vmul.f32 %v1515, %v1545
      %v1564 = vmul.f32 %v1516, %v1549
      %v1565 = vmul.f32 %v1517, %v1553
      %v1566 = vmul.f32 %v1518, %v1541
      %v1567 = vmul.f32 %v1519, %v1545
      %v1568 = vmul.f32 %v1520, %v1549
      %v1569 = vmul.f32 %v1521, %v1553
      %v1570 = vmul.f32 %v1522, %v1541
      %v1571 = vmul.f32 %v1523, %v1545
      %v1572 = vmul.f32 %v1524, %v1549
      %v1573 = vmul.f32 %v1525, %v1553
      %v1574 = vmul.f32 %v1526, %v1541
      %v1575 = vmul.f32 %v1527, %v1545
      %v1576 = vmul.f32 %v1528, %v1549
      %v1577 = vmul.f32 %v1529, %v1553
      %v1578 = vmul.f32 %v1530, %v1541
      %v1579 = vmul.f32 %v1531, %v1545
      %v1580 = vmul.f32 %v1532, %v1549
      %v1581 = vmul.f32 %v1533, %v1553
      %v1582 = vmul.f32 %v1534, %v1541
      %v1583 = vmul.f32 %v1535, %v1545
      %v1584 = vmul.f32 %v1536, %v1549
      %v1585 = vmul.f32 %v1537, %v1553
      %v1586 = vadd.f32 %v1554, 0.0
      %v1587 = vadd.f32 %v1555, 0.0
      %v1588 = vadd.f32 %v1556, 0.0
      %v1589 = vadd.f32 %v1557, 0.0
      %v1590 = vadd.f32 %v1558, 0.0
      %v1591 = vadd.f32 %v1559, 0.0
      %v1592 = vadd.f32 %v1560, 0.0
      %v1593 = vadd.f32 %v1561, 0.0
      %v1594 = vadd.f32 %v1562, 0.0
      %v1595 = vadd.f32 %v1563, 0.0
      %v1596 = vadd.f32 %v1564, 0.0
      %v1597 = vadd.f32 %v1565, 0.0
      %v1598 = vadd.f32 %v1566, 0.0
      %v1599 = vadd.f32 %v1567, 0.0
      %v1600 = vadd.f32 %v1568, 0.0
      %v1601 = vadd.f32 %v1569, 0.0
      %v1602 = vadd.f32 %v1570, 0.0
      %v1603 = vadd.f32 %v1571, 0.0
      %v1604 = vadd.f32 %v1572, 0.0
      %v1605 = vadd.f32 %v1573, 0.0
      %v1606 = vadd.f32 %v1574, 0.0
      %v1607 = vadd.f32 %v1575, 0.0
      %v1608 = vadd.f32 %v1576, 0.0
      %v1609 = vadd.f32 %v1577, 0.0
      %v1610 = vadd.f32 %v1578, 0.0
      %v1611 = vadd.f32 %v1579, 0.0
      %v1612 = vadd.f32 %v1580, 0.0
      %v1613 = vadd.f32 %v1581, 0.0
      %v1614 = vadd.f32 %v1582, 0.0
      %v1615 = vadd.f32 %v1583, 0.0
      %v1616 = vadd.f32 %v1584, 0.0
      %v1617 = vadd.f32 %v1585, 0.0
      %v1618 = vld [vmem:[#allocation2] sm:$0xfe]
      %v1619 = vld [vmem:[#allocation2 + $0x8] sm:$0xfe]
      %v1620 = vld [vmem:[#allocation2 + $0x10] sm:$0xfe]
      %v1621 = vld [vmem:[#allocation2 + $0x18] sm:$0xfe]
      %v1622 = vld [vmem:[#allocation2 + $0x20] sm:$0x1]
      %v1623 = vld [vmem:[#allocation2 + $0x28] sm:$0x1]
      %v1624 = vld [vmem:[#allocation2 + $0x30] sm:$0x1]
      %v1625 = vld [vmem:[#allocation2 + $0x38] sm:$0x1]
      %v1626 = vld [vmem:[#allocation2 + $0x40] sm:$0xfe]
      %v1627 = vld [vmem:[#allocation2 + $0x48] sm:$0xfe]
      %v1628 = vld [vmem:[#allocation2 + $0x50] sm:$0xfe]
      %v1629 = vld [vmem:[#allocation2 + $0x58] sm:$0xfe]
      %v1630 = vld [vmem:[#allocation2 + $0x60] sm:$0x1]
      %v1631 = vld [vmem:[#allocation2 + $0x68] sm:$0x1]
      %v1632 = vld [vmem:[#allocation2 + $0x70] sm:$0x1]
      %v1633 = vld [vmem:[#allocation2 + $0x78] sm:$0x1]
      %v1634 = vld [vmem:[#allocation2 + $0x80] sm:$0xfe]
      %v1635 = vld [vmem:[#allocation2 + $0x88] sm:$0xfe]
      %v1636 = vld [vmem:[#allocation2 + $0x90] sm:$0xfe]
      %v1637 = vld [vmem:[#allocation2 + $0x98] sm:$0xfe]
      %v1638 = vld [vmem:[#allocation2 + $0xa0] sm:$0x1]
      %v1639 = vld [vmem:[#allocation2 + $0xa8] sm:$0x1]
      %v1640 = vld [vmem:[#allocation2 + $0xb0] sm:$0x1]
      %v1641 = vld [vmem:[#allocation2 + $0xb8] sm:$0x1]
      %v1642 = vld [vmem:[#allocation2 + $0xc0] sm:$0xfe]
      %v1643 = vld [vmem:[#allocation2 + $0xc8] sm:$0xfe]
      %v1644 = vld [vmem:[#allocation2 + $0xd0] sm:$0xfe]
      %v1645 = vld [vmem:[#allocation2 + $0xd8] sm:$0xfe]
      %v1646 = vld [vmem:[#allocation2 + $0xe0] sm:$0x1]
      %v1647 = vld [vmem:[#allocation2 + $0xe8] sm:$0x1]
      %v1648 = vld [vmem:[#allocation2 + $0xf0] sm:$0x1]
      %v1649 = vld [vmem:[#allocation2 + $0xf8] sm:$0x1]
      %v1650 = vld [vmem:[#allocation2 + $0x100] sm:$0xfe]
      %v1651 = vld [vmem:[#allocation2 + $0x108] sm:$0xfe]
      %v1652 = vld [vmem:[#allocation2 + $0x110] sm:$0xfe]
      %v1653 = vld [vmem:[#allocation2 + $0x118] sm:$0xfe]
      %v1654 = vld [vmem:[#allocation2 + $0x120] sm:$0x1]
      %v1655 = vld [vmem:[#allocation2 + $0x128] sm:$0x1]
      %v1656 = vld [vmem:[#allocation2 + $0x130] sm:$0x1]
      %v1657 = vld [vmem:[#allocation2 + $0x138] sm:$0x1]
      %v1658 = vld [vmem:[#allocation2 + $0x140] sm:$0xfe]
      %v1659 = vld [vmem:[#allocation2 + $0x148] sm:$0xfe]
      %v1660 = vld [vmem:[#allocation2 + $0x150] sm:$0xfe]
      %v1661 = vld [vmem:[#allocation2 + $0x158] sm:$0xfe]
      %v1662 = vld [vmem:[#allocation2 + $0x160] sm:$0x1]
      %v1663 = vld [vmem:[#allocation2 + $0x168] sm:$0x1]
      %v1664 = vld [vmem:[#allocation2 + $0x170] sm:$0x1]
      %v1665 = vld [vmem:[#allocation2 + $0x178] sm:$0x1]
      %v1666 = vld [vmem:[#allocation2 + $0x180] sm:$0xfe]
      %v1667 = vld [vmem:[#allocation2 + $0x188] sm:$0xfe]
      %v1668 = vld [vmem:[#allocation2 + $0x190] sm:$0xfe]
      %v1669 = vld [vmem:[#allocation2 + $0x198] sm:$0xfe]
      %v1670 = vld [vmem:[#allocation2 + $0x1a0] sm:$0x1]
      %v1671 = vld [vmem:[#allocation2 + $0x1a8] sm:$0x1]
      %v1672 = vld [vmem:[#allocation2 + $0x1b0] sm:$0x1]
      %v1673 = vld [vmem:[#allocation2 + $0x1b8] sm:$0x1]
      %v1674 = vld [vmem:[#allocation2 + $0x1c0] sm:$0xfe]
      %v1675 = vld [vmem:[#allocation2 + $0x1c8] sm:$0xfe]
      %v1676 = vld [vmem:[#allocation2 + $0x1d0] sm:$0xfe]
      %v1677 = vld [vmem:[#allocation2 + $0x1d8] sm:$0xfe]
      %v1678 = vld [vmem:[#allocation2 + $0x1e0] sm:$0x1]
      %v1679 = vld [vmem:[#allocation2 + $0x1e8] sm:$0x1]
      %v1680 = vld [vmem:[#allocation2 + $0x1f0] sm:$0x1]
      %v1681 = vld [vmem:[#allocation2 + $0x1f8] sm:$0x1]
      %v1682 = vlaneseq
      %v1683 = vshrl.u32 %v1682, 7
      %v1684 = vsub.s32 1, %v1683
      %v1685 = vrot.slane %v1498, %v1684
      %v1686 = vlaneseq
      %v1687 = vshrl.u32 %v1686, 7
      %v1688 = vsub.s32 1, %v1687
      %v1689 = vrot.slane %v1499, %v1688
      %v1690 = vlaneseq
      %v1691 = vshrl.u32 %v1690, 7
      %v1692 = vsub.s32 1, %v1691
      %v1693 = vrot.slane %v1500, %v1692
      %v1694 = vlaneseq
      %v1695 = vshrl.u32 %v1694, 7
      %v1696 = vsub.s32 1, %v1695
      %v1697 = vrot.slane %v1501, %v1696
      %v1698 = vmul.f32 %v1618, %v1685
      %v1699 = vmul.f32 %v1619, %v1689
      %v1700 = vmul.f32 %v1620, %v1693
      %v1701 = vmul.f32 %v1621, %v1697
      %v1702 = vmul.f32 %v1622, %v1685
      %v1703 = vmul.f32 %v1623, %v1689
      %v1704 = vmul.f32 %v1624, %v1693
      %v1705 = vmul.f32 %v1625, %v1697
      %v1706 = vmul.f32 %v1626, %v1685
      %v1707 = vmul.f32 %v1627, %v1689
      %v1708 = vmul.f32 %v1628, %v1693
      %v1709 = vmul.f32 %v1629, %v1697
      %v1710 = vmul.f32 %v1630, %v1685
      %v1711 = vmul.f32 %v1631, %v1689
      %v1712 = vmul.f32 %v1632, %v1693
      %v1713 = vmul.f32 %v1633, %v1697
      %v1714 = vmul.f32 %v1634, %v1685
      %v1715 = vmul.f32 %v1635, %v1689
      %v1716 = vmul.f32 %v1636, %v1693
      %v1717 = vmul.f32 %v1637, %v1697
      %v1718 = vmul.f32 %v1638, %v1685
      %v1719 = vmul.f32 %v1639, %v1689
      %v1720 = vmul.f32 %v1640, %v1693
      %v1721 = vmul.f32 %v1641, %v1697
      %v1722 = vmul.f32 %v1642, %v1685
      %v1723 = vmul.f32 %v1643, %v1689
      %v1724 = vmul.f32 %v1644, %v1693
      %v1725 = vmul.f32 %v1645, %v1697
      %v1726 = vmul.f32 %v1646, %v1685
      %v1727 = vmul.f32 %v1647, %v1689
      %v1728 = vmul.f32 %v1648, %v1693
      %v1729 = vmul.f32 %v1649, %v1697
      %v1730 = vmul.f32 %v1650, %v1685
      %v1731 = vmul.f32 %v1651, %v1689
      %v1732 = vmul.f32 %v1652, %v1693
      %v1733 = vmul.f32 %v1653, %v1697
      %v1734 = vmul.f32 %v1654, %v1685
      %v1735 = vmul.f32 %v1655, %v1689
      %v1736 = vmul.f32 %v1656, %v1693
      %v1737 = vmul.f32 %v1657, %v1697
      %v1738 = vmul.f32 %v1658, %v1685
      %v1739 = vmul.f32 %v1659, %v1689
      %v1740 = vmul.f32 %v1660, %v1693
      %v1741 = vmul.f32 %v1661, %v1697
      %v1742 = vmul.f32 %v1662, %v1685
      %v1743 = vmul.f32 %v1663, %v1689
      %v1744 = vmul.f32 %v1664, %v1693
      %v1745 = vmul.f32 %v1665, %v1697
      %v1746 = vmul.f32 %v1666, %v1685
      %v1747 = vmul.f32 %v1667, %v1689
      %v1748 = vmul.f32 %v1668, %v1693
      %v1749 = vmul.f32 %v1669, %v1697
      %v1750 = vmul.f32 %v1670, %v1685
      %v1751 = vmul.f32 %v1671, %v1689
      %v1752 = vmul.f32 %v1672, %v1693
      %v1753 = vmul.f32 %v1673, %v1697
      %v1754 = vmul.f32 %v1674, %v1685
      %v1755 = vmul.f32 %v1675, %v1689
      %v1756 = vmul.f32 %v1676, %v1693
      %v1757 = vmul.f32 %v1677, %v1697
      %v1758 = vmul.f32 %v1678, %v1685
      %v1759 = vmul.f32 %v1679, %v1689
      %v1760 = vmul.f32 %v1680, %v1693
      %v1761 = vmul.f32 %v1681, %v1697
      %vm1826 = vcmask 1046528
      %v1827 = vrot.slane %v1698, 1
      %v1828 = vrot.slane %v1702, 1
      %v1829 = vsel %vm1826, %v1827, %v1828
      %v1830 = vrot.slane %v1699, 1
      %v1831 = vrot.slane %v1703, 1
      %v1832 = vsel %vm1826, %v1830, %v1831
      %v1833 = vrot.slane %v1700, 1
      %v1834 = vrot.slane %v1704, 1
      %v1835 = vsel %vm1826, %v1833, %v1834
      %v1836 = vrot.slane %v1701, 1
      %v1837 = vrot.slane %v1705, 1
      %v1838 = vsel %vm1826, %v1836, %v1837
      %v1839 = vrot.slane %v1706, 1
      %v1840 = vrot.slane %v1710, 1
      %v1841 = vsel %vm1826, %v1839, %v1840
      %v1842 = vrot.slane %v1707, 1
      %v1843 = vrot.slane %v1711, 1
      %v1844 = vsel %vm1826, %v1842, %v1843
      %v1845 = vrot.slane %v1708, 1
      %v1846 = vrot.slane %v1712, 1
      %v1847 = vsel %vm1826, %v1845, %v1846
      %v1848 = vrot.slane %v1709, 1
      %v1849 = vrot.slane %v1713, 1
      %v1850 = vsel %vm1826, %v1848, %v1849
      %v1851 = vrot.slane %v1714, 1
      %v1852 = vrot.slane %v1718, 1
      %v1853 = vsel %vm1826, %v1851, %v1852
      %v1854 = vrot.slane %v1715, 1
      %v1855 = vrot.slane %v1719, 1
      %v1856 = vsel %vm1826, %v1854, %v1855
      %v1857 = vrot.slane %v1716, 1
      %v1858 = vrot.slane %v1720, 1
      %v1859 = vsel %vm1826, %v1857, %v1858
      %v1860 = vrot.slane %v1717, 1
      %v1861 = vrot.slane %v1721, 1
      %v1862 = vsel %vm1826, %v1860, %v1861
      %v1863 = vrot.slane %v1722, 1
      %v1864 = vrot.slane %v1726, 1
      %v1865 = vsel %vm1826, %v1863, %v1864
      %v1866 = vrot.slane %v1723, 1
      %v1867 = vrot.slane %v1727, 1
      %v1868 = vsel %vm1826, %v1866, %v1867
      %v1869 = vrot.slane %v1724, 1
      %v1870 = vrot.slane %v1728, 1
      %v1871 = vsel %vm1826, %v1869, %v1870
      %v1872 = vrot.slane %v1725, 1
      %v1873 = vrot.slane %v1729, 1
      %v1874 = vsel %vm1826, %v1872, %v1873
      %v1875 = vrot.slane %v1730, 1
      %v1876 = vrot.slane %v1734, 1
      %v1877 = vsel %vm1826, %v1875, %v1876
      %v1878 = vrot.slane %v1731, 1
      %v1879 = vrot.slane %v1735, 1
      %v1880 = vsel %vm1826, %v1878, %v1879
      %v1881 = vrot.slane %v1732, 1
      %v1882 = vrot.slane %v1736, 1
      %v1883 = vsel %vm1826, %v1881, %v1882
      %v1884 = vrot.slane %v1733, 1
      %v1885 = vrot.slane %v1737, 1
      %v1886 = vsel %vm1826, %v1884, %v1885
      %v1887 = vrot.slane %v1738, 1
      %v1888 = vrot.slane %v1742, 1
      %v1889 = vsel %vm1826, %v1887, %v1888
      %v1890 = vrot.slane %v1739, 1
      %v1891 = vrot.slane %v1743, 1
      %v1892 = vsel %vm1826, %v1890, %v1891
      %v1893 = vrot.slane %v1740, 1
      %v1894 = vrot.slane %v1744, 1
      %v1895 = vsel %vm1826, %v1893, %v1894
      %v1896 = vrot.slane %v1741, 1
      %v1897 = vrot.slane %v1745, 1
      %v1898 = vsel %vm1826, %v1896, %v1897
      %v1899 = vrot.slane %v1746, 1
      %v1900 = vrot.slane %v1750, 1
      %v1901 = vsel %vm1826, %v1899, %v1900
      %v1902 = vrot.slane %v1747, 1
      %v1903 = vrot.slane %v1751, 1
      %v1904 = vsel %vm1826, %v1902, %v1903
      %v1905 = vrot.slane %v1748, 1
      %v1906 = vrot.slane %v1752, 1
      %v1907 = vsel %vm1826, %v1905, %v1906
      %v1908 = vrot.slane %v1749, 1
      %v1909 = vrot.slane %v1753, 1
      %v1910 = vsel %vm1826, %v1908, %v1909
      %v1911 = vrot.slane %v1754, 1
      %v1912 = vrot.slane %v1758, 1
      %v1913 = vsel %vm1826, %v1911, %v1912
      %v1914 = vrot.slane %v1755, 1
      %v1915 = vrot.slane %v1759, 1
      %v1916 = vsel %vm1826, %v1914, %v1915
      %v1917 = vrot.slane %v1756, 1
      %v1918 = vrot.slane %v1760, 1
      %v1919 = vsel %vm1826, %v1917, %v1918
      %v1920 = vrot.slane %v1757, 1
      %v1921 = vrot.slane %v1761, 1
      %v1922 = vsel %vm1826, %v1920, %v1921
      %v1955 = vadd.f32 %v1586, %v1829
      %v1956 = vadd.f32 %v1587, %v1832
      %v1957 = vadd.f32 %v1588, %v1835
      %v1958 = vadd.f32 %v1589, %v1838
      %v1959 = vadd.f32 %v1590, %v1841
      %v1960 = vadd.f32 %v1591, %v1844
      %v1961 = vadd.f32 %v1592, %v1847
      %v1962 = vadd.f32 %v1593, %v1850
      %v1963 = vadd.f32 %v1594, %v1853
      %v1964 = vadd.f32 %v1595, %v1856
      %v1965 = vadd.f32 %v1596, %v1859
      %v1966 = vadd.f32 %v1597, %v1862
      %v1967 = vadd.f32 %v1598, %v1865
      %v1968 = vadd.f32 %v1599, %v1868
      %v1969 = vadd.f32 %v1600, %v1871
      %v1970 = vadd.f32 %v1601, %v1874
      %v1971 = vadd.f32 %v1602, %v1877
      %v1972 = vadd.f32 %v1603, %v1880
      %v1973 = vadd.f32 %v1604, %v1883
      %v1974 = vadd.f32 %v1605, %v1886
      %v1975 = vadd.f32 %v1606, %v1889
      %v1976 = vadd.f32 %v1607, %v1892
      %v1977 = vadd.f32 %v1608, %v1895
      %v1978 = vadd.f32 %v1609, %v1898
      %v1979 = vadd.f32 %v1610, %v1901
      %v1980 = vadd.f32 %v1611, %v1904
      %v1981 = vadd.f32 %v1612, %v1907
      %v1982 = vadd.f32 %v1613, %v1910
      %v1983 = vadd.f32 %v1614, %v1913
      %v1984 = vadd.f32 %v1615, %v1916
      %v1985 = vadd.f32 %v1616, %v1919
      %v1986 = vadd.f32 %v1617, %v1922
      %v1987 = vld [vmem:[#allocation2] sm:$0xfc]
      %v1988 = vld [vmem:[#allocation2 + $0x8] sm:$0xfc]
      %v1989 = vld [vmem:[#allocation2 + $0x10] sm:$0xfc]
      %v1990 = vld [vmem:[#allocation2 + $0x18] sm:$0xfc]
      %v1991 = vld [vmem:[#allocation2 + $0x20] sm:$0x3]
      %v1992 = vld [vmem:[#allocation2 + $0x28] sm:$0x3]
      %v1993 = vld [vmem:[#allocation2 + $0x30] sm:$0x3]
      %v1994 = vld [vmem:[#allocation2 + $0x38] sm:$0x3]
      %v1995 = vld [vmem:[#allocation2 + $0x40] sm:$0xfc]
      %v1996 = vld [vmem:[#allocation2 + $0x48] sm:$0xfc]
      %v1997 = vld [vmem:[#allocation2 + $0x50] sm:$0xfc]
      %v1998 = vld [vmem:[#allocation2 + $0x58] sm:$0xfc]
      %v1999 = vld [vmem:[#allocation2 + $0x60] sm:$0x3]
      %v2000 = vld [vmem:[#allocation2 + $0x68] sm:$0x3]
      %v2001 = vld [vmem:[#allocation2 + $0x70] sm:$0x3]
      %v2002 = vld [vmem:[#allocation2 + $0x78] sm:$0x3]
      %v2003 = vld [vmem:[#allocation2 + $0x80] sm:$0xfc]
      %v2004 = vld [vmem:[#allocation2 + $0x88] sm:$0xfc]
      %v2005 = vld [vmem:[#allocation2 + $0x90] sm:$0xfc]
      %v2006 = vld [vmem:[#allocation2 + $0x98] sm:$0xfc]
      %v2007 = vld [vmem:[#allocation2 + $0xa0] sm:$0x3]
      %v2008 = vld [vmem:[#allocation2 + $0xa8] sm:$0x3]
      %v2009 = vld [vmem:[#allocation2 + $0xb0] sm:$0x3]
      %v2010 = vld [vmem:[#allocation2 + $0xb8] sm:$0x3]
      %v2011 = vld [vmem:[#allocation2 + $0xc0] sm:$0xfc]
      %v2012 = vld [vmem:[#allocation2 + $0xc8] sm:$0xfc]
      %v2013 = vld [vmem:[#allocation2 + $0xd0] sm:$0xfc]
      %v2014 = vld [vmem:[#allocation2 + $0xd8] sm:$0xfc]
      %v2015 = vld [vmem:[#allocation2 + $0xe0] sm:$0x3]
      %v2016 = vld [vmem:[#allocation2 + $0xe8] sm:$0x3]
      %v2017 = vld [vmem:[#allocation2 + $0xf0] sm:$0x3]
      %v2018 = vld [vmem:[#allocation2 + $0xf8] sm:$0x3]
      %v2019 = vld [vmem:[#allocation2 + $0x100] sm:$0xfc]
      %v2020 = vld [vmem:[#allocation2 + $0x108] sm:$0xfc]
      %v2021 = vld [vmem:[#allocation2 + $0x110] sm:$0xfc]
      %v2022 = vld [vmem:[#allocation2 + $0x118] sm:$0xfc]
      %v2023 = vld [vmem:[#allocation2 + $0x120] sm:$0x3]
      %v2024 = vld [vmem:[#allocation2 + $0x128] sm:$0x3]
      %v2025 = vld [vmem:[#allocation2 + $0x130] sm:$0x3]
      %v2026 = vld [vmem:[#allocation2 + $0x138] sm:$0x3]
      %v2027 = vld [vmem:[#allocation2 + $0x140] sm:$0xfc]
      %v2028 = vld [vmem:[#allocation2 + $0x148] sm:$0xfc]
      %v2029 = vld [vmem:[#allocation2 + $0x150] sm:$0xfc]
      %v2030 = vld [vmem:[#allocation2 + $0x158] sm:$0xfc]
      %v2031 = vld [vmem:[#allocation2 + $0x160] sm:$0x3]
      %v2032 = vld [vmem:[#allocation2 + $0x168] sm:$0x3]
      %v2033 = vld [vmem:[#allocation2 + $0x170] sm:$0x3]
      %v2034 = vld [vmem:[#allocation2 + $0x178] sm:$0x3]
      %v2035 = vld [vmem:[#allocation2 + $0x180] sm:$0xfc]
      %v2036 = vld [vmem:[#allocation2 + $0x188] sm:$0xfc]
      %v2037 = vld [vmem:[#allocation2 + $0x190] sm:$0xfc]
      %v2038 = vld [vmem:[#allocation2 + $0x198] sm:$0xfc]
      %v2039 = vld [vmem:[#allocation2 + $0x1a0] sm:$0x3]
      %v2040 = vld [vmem:[#allocation2 + $0x1a8] sm:$0x3]
      %v2041 = vld [vmem:[#allocation2 + $0x1b0] sm:$0x3]
      %v2042 = vld [vmem:[#allocation2 + $0x1b8] sm:$0x3]
      %v2043 = vld [vmem:[#allocation2 + $0x1c0] sm:$0xfc]
      %v2044 = vld [vmem:[#allocation2 + $0x1c8] sm:$0xfc]
      %v2045 = vld [vmem:[#allocation2 + $0x1d0] sm:$0xfc]
      %v2046 = vld [vmem:[#allocation2 + $0x1d8] sm:$0xfc]
      %v2047 = vld [vmem:[#allocation2 + $0x1e0] sm:$0x3]
      %v2048 = vld [vmem:[#allocation2 + $0x1e8] sm:$0x3]
      %v2049 = vld [vmem:[#allocation2 + $0x1f0] sm:$0x3]
      %v2050 = vld [vmem:[#allocation2 + $0x1f8] sm:$0x3]
      %v2051 = vlaneseq
      %v2052 = vshrl.u32 %v2051, 7
      %v2053 = vsub.s32 2, %v2052
      %v2054 = vrot.slane %v1498, %v2053
      %v2055 = vlaneseq
      %v2056 = vshrl.u32 %v2055, 7
      %v2057 = vsub.s32 2, %v2056
      %v2058 = vrot.slane %v1499, %v2057
      %v2059 = vlaneseq
      %v2060 = vshrl.u32 %v2059, 7
      %v2061 = vsub.s32 2, %v2060
      %v2062 = vrot.slane %v1500, %v2061
      %v2063 = vlaneseq
      %v2064 = vshrl.u32 %v2063, 7
      %v2065 = vsub.s32 2, %v2064
      %v2066 = vrot.slane %v1501, %v2065
      %v2067 = vmul.f32 %v1987, %v2054
      %v2068 = vmul.f32 %v1988, %v2058
      %v2069 = vmul.f32 %v1989, %v2062
      %v2070 = vmul.f32 %v1990, %v2066
      %v2071 = vmul.f32 %v1991, %v2054
      %v2072 = vmul.f32 %v1992, %v2058
      %v2073 = vmul.f32 %v1993, %v2062
      %v2074 = vmul.f32 %v1994, %v2066
      %v2075 = vmul.f32 %v1995, %v2054
      %v2076 = vmul.f32 %v1996, %v2058
      %v2077 = vmul.f32 %v1997, %v2062
      %v2078 = vmul.f32 %v1998, %v2066
      %v2079 = vmul.f32 %v1999, %v2054
      %v2080 = vmul.f32 %v2000, %v2058
      %v2081 = vmul.f32 %v2001, %v2062
      %v2082 = vmul.f32 %v2002, %v2066
      %v2083 = vmul.f32 %v2003, %v2054
      %v2084 = vmul.f32 %v2004, %v2058
      %v2085 = vmul.f32 %v2005, %v2062
      %v2086 = vmul.f32 %v2006, %v2066
      %v2087 = vmul.f32 %v2007, %v2054
      %v2088 = vmul.f32 %v2008, %v2058
      %v2089 = vmul.f32 %v2009, %v2062
      %v2090 = vmul.f32 %v2010, %v2066
      %v2091 = vmul.f32 %v2011, %v2054
      %v2092 = vmul.f32 %v2012, %v2058
      %v2093 = vmul.f32 %v2013, %v2062
      %v2094 = vmul.f32 %v2014, %v2066
      %v2095 = vmul.f32 %v2015, %v2054
      %v2096 = vmul.f32 %v2016, %v2058
      %v2097 = vmul.f32 %v2017, %v2062
      %v2098 = vmul.f32 %v2018, %v2066
      %v2099 = vmul.f32 %v2019, %v2054
      %v2100 = vmul.f32 %v2020, %v2058
      %v2101 = vmul.f32 %v2021, %v2062
      %v2102 = vmul.f32 %v2022, %v2066
      %v2103 = vmul.f32 %v2023, %v2054
      %v2104 = vmul.f32 %v2024, %v2058
      %v2105 = vmul.f32 %v2025, %v2062
      %v2106 = vmul.f32 %v2026, %v2066
      %v2107 = vmul.f32 %v2027, %v2054
      %v2108 = vmul.f32 %v2028, %v2058
      %v2109 = vmul.f32 %v2029, %v2062
      %v2110 = vmul.f32 %v2030, %v2066
      %v2111 = vmul.f32 %v2031, %v2054
      %v2112 = vmul.f32 %v2032, %v2058
      %v2113 = vmul.f32 %v2033, %v2062
      %v2114 = vmul.f32 %v2034, %v2066
      %v2115 = vmul.f32 %v2035, %v2054
      %v2116 = vmul.f32 %v2036, %v2058
      %v2117 = vmul.f32 %v2037, %v2062
      %v2118 = vmul.f32 %v2038, %v2066
      %v2119 = vmul.f32 %v2039, %v2054
      %v2120 = vmul.f32 %v2040, %v2058
      %v2121 = vmul.f32 %v2041, %v2062
      %v2122 = vmul.f32 %v2042, %v2066
      %v2123 = vmul.f32 %v2043, %v2054
      %v2124 = vmul.f32 %v2044, %v2058
      %v2125 = vmul.f32 %v2045, %v2062
      %v2126 = vmul.f32 %v2046, %v2066
      %v2127 = vmul.f32 %v2047, %v2054
      %v2128 = vmul.f32 %v2048, %v2058
      %v2129 = vmul.f32 %v2049, %v2062
      %v2130 = vmul.f32 %v2050, %v2066
      %v2195 = vrot.slane %v2067, 2
      %v2196 = vrot.slane %v2071, 2
      %v2197 = vsel %vm542, %v2195, %v2196
      %v2198 = vrot.slane %v2068, 2
      %v2199 = vrot.slane %v2072, 2
      %v2200 = vsel %vm542, %v2198, %v2199
      %v2201 = vrot.slane %v2069, 2
      %v2202 = vrot.slane %v2073, 2
      %v2203 = vsel %vm542, %v2201, %v2202
      %v2204 = vrot.slane %v2070, 2
      %v2205 = vrot.slane %v2074, 2
      %v2206 = vsel %vm542, %v2204, %v2205
      %v2207 = vrot.slane %v2075, 2
      %v2208 = vrot.slane %v2079, 2
      %v2209 = vsel %vm542, %v2207, %v2208
      %v2210 = vrot.slane %v2076, 2
      %v2211 = vrot.slane %v2080, 2
      %v2212 = vsel %vm542, %v2210, %v2211
      %v2213 = vrot.slane %v2077, 2
      %v2214 = vrot.slane %v2081, 2
      %v2215 = vsel %vm542, %v2213, %v2214
      %v2216 = vrot.slane %v2078, 2
      %v2217 = vrot.slane %v2082, 2
      %v2218 = vsel %vm542, %v2216, %v2217
      %v2219 = vrot.slane %v2083, 2
      %v2220 = vrot.slane %v2087, 2
      %v2221 = vsel %vm542, %v2219, %v2220
      %v2222 = vrot.slane %v2084, 2
      %v2223 = vrot.slane %v2088, 2
      %v2224 = vsel %vm542, %v2222, %v2223
      %v2225 = vrot.slane %v2085, 2
      %v2226 = vrot.slane %v2089, 2
      %v2227 = vsel %vm542, %v2225, %v2226
      %v2228 = vrot.slane %v2086, 2
      %v2229 = vrot.slane %v2090, 2
      %v2230 = vsel %vm542, %v2228, %v2229
      %v2231 = vrot.slane %v2091, 2
      %v2232 = vrot.slane %v2095, 2
      %v2233 = vsel %vm542, %v2231, %v2232
      %v2234 = vrot.slane %v2092, 2
      %v2235 = vrot.slane %v2096, 2
      %v2236 = vsel %vm542, %v2234, %v2235
      %v2237 = vrot.slane %v2093, 2
      %v2238 = vrot.slane %v2097, 2
      %v2239 = vsel %vm542, %v2237, %v2238
      %v2240 = vrot.slane %v2094, 2
      %v2241 = vrot.slane %v2098, 2
      %v2242 = vsel %vm542, %v2240, %v2241
      %v2243 = vrot.slane %v2099, 2
      %v2244 = vrot.slane %v2103, 2
      %v2245 = vsel %vm542, %v2243, %v2244
      %v2246 = vrot.slane %v2100, 2
      %v2247 = vrot.slane %v2104, 2
      %v2248 = vsel %vm542, %v2246, %v2247
      %v2249 = vrot.slane %v2101, 2
      %v2250 = vrot.slane %v2105, 2
      %v2251 = vsel %vm542, %v2249, %v2250
      %v2252 = vrot.slane %v2102, 2
      %v2253 = vrot.slane %v2106, 2
      %v2254 = vsel %vm542, %v2252, %v2253
      %v2255 = vrot.slane %v2107, 2
      %v2256 = vrot.slane %v2111, 2
      %v2257 = vsel %vm542, %v2255, %v2256
      %v2258 = vrot.slane %v2108, 2
      %v2259 = vrot.slane %v2112, 2
      %v2260 = vsel %vm542, %v2258, %v2259
      %v2261 = vrot.slane %v2109, 2
      %v2262 = vrot.slane %v2113, 2
      %v2263 = vsel %vm542, %v2261, %v2262
      %v2264 = vrot.slane %v2110, 2
      %v2265 = vrot.slane %v2114, 2
      %v2266 = vsel %vm542, %v2264, %v2265
      %v2267 = vrot.slane %v2115, 2
      %v2268 = vrot.slane %v2119, 2
      %v2269 = vsel %vm542, %v2267, %v2268
      %v2270 = vrot.slane %v2116, 2
      %v2271 = vrot.slane %v2120, 2
      %v2272 = vsel %vm542, %v2270, %v2271
      %v2273 = vrot.slane %v2117, 2
      %v2274 = vrot.slane %v2121, 2
      %v2275 = vsel %vm542, %v2273, %v2274
      %v2276 = vrot.slane %v2118, 2
      %v2277 = vrot.slane %v2122, 2
      %v2278 = vsel %vm542, %v2276, %v2277
      %v2279 = vrot.slane %v2123, 2
      %v2280 = vrot.slane %v2127, 2
      %v2281 = vsel %vm542, %v2279, %v2280
      %v2282 = vrot.slane %v2124, 2
      %v2283 = vrot.slane %v2128, 2
      %v2284 = vsel %vm542, %v2282, %v2283
      %v2285 = vrot.slane %v2125, 2
      %v2286 = vrot.slane %v2129, 2
      %v2287 = vsel %vm542, %v2285, %v2286
      %v2288 = vrot.slane %v2126, 2
      %v2289 = vrot.slane %v2130, 2
      %v2290 = vsel %vm542, %v2288, %v2289
      %v2323 = vadd.f32 %v1955, %v2197
      %v2324 = vadd.f32 %v1956, %v2200
      %v2325 = vadd.f32 %v1957, %v2203
      %v2326 = vadd.f32 %v1958, %v2206
      %v2327 = vadd.f32 %v1959, %v2209
      %v2328 = vadd.f32 %v1960, %v2212
      %v2329 = vadd.f32 %v1961, %v2215
      %v2330 = vadd.f32 %v1962, %v2218
      %v2331 = vadd.f32 %v1963, %v2221
      %v2332 = vadd.f32 %v1964, %v2224
      %v2333 = vadd.f32 %v1965, %v2227
      %v2334 = vadd.f32 %v1966, %v2230
      %v2335 = vadd.f32 %v1967, %v2233
      %v2336 = vadd.f32 %v1968, %v2236
      %v2337 = vadd.f32 %v1969, %v2239
      %v2338 = vadd.f32 %v1970, %v2242
      %v2339 = vadd.f32 %v1971, %v2245
      %v2340 = vadd.f32 %v1972, %v2248
      %v2341 = vadd.f32 %v1973, %v2251
      %v2342 = vadd.f32 %v1974, %v2254
      %v2343 = vadd.f32 %v1975, %v2257
      %v2344 = vadd.f32 %v1976, %v2260
      %v2345 = vadd.f32 %v1977, %v2263
      %v2346 = vadd.f32 %v1978, %v2266
      %v2347 = vadd.f32 %v1979, %v2269
      %v2348 = vadd.f32 %v1980, %v2272
      %v2349 = vadd.f32 %v1981, %v2275
      %v2350 = vadd.f32 %v1982, %v2278
      %v2351 = vadd.f32 %v1983, %v2281
      %v2352 = vadd.f32 %v1984, %v2284
      %v2353 = vadd.f32 %v1985, %v2287
      %v2354 = vadd.f32 %v1986, %v2290
      %v2355 = vld [vmem:[%s1433] sm:$0xff]
      %v2356 = vld [vmem:[%s1433 + $0x8] sm:$0xff]
      %v2357 = vld [vmem:[%s1433 + $0x10] sm:$0xff]
      %v2358 = vld [vmem:[%s1433 + $0x18] sm:$0xff]
      %v2359 = vld [vmem:[%s1433 + $0x40] sm:$0xff]
      %v2360 = vld [vmem:[%s1433 + $0x48] sm:$0xff]
      %v2361 = vld [vmem:[%s1433 + $0x50] sm:$0xff]
      %v2362 = vld [vmem:[%s1433 + $0x58] sm:$0xff]
      %v2363 = vld [vmem:[%s1433 + $0x80] sm:$0xff]
      %v2364 = vld [vmem:[%s1433 + $0x88] sm:$0xff]
      %v2365 = vld [vmem:[%s1433 + $0x90] sm:$0xff]
      %v2366 = vld [vmem:[%s1433 + $0x98] sm:$0xff]
      %v2367 = vld [vmem:[%s1433 + $0xc0] sm:$0xff]
      %v2368 = vld [vmem:[%s1433 + $0xc8] sm:$0xff]
      %v2369 = vld [vmem:[%s1433 + $0xd0] sm:$0xff]
      %v2370 = vld [vmem:[%s1433 + $0xd8] sm:$0xff]
      %v2371 = vld [vmem:[%s1433 + $0x100] sm:$0xff]
      %v2372 = vld [vmem:[%s1433 + $0x108] sm:$0xff]
      %v2373 = vld [vmem:[%s1433 + $0x110] sm:$0xff]
      %v2374 = vld [vmem:[%s1433 + $0x118] sm:$0xff]
      %v2375 = vld [vmem:[%s1433 + $0x140] sm:$0xff]
      %v2376 = vld [vmem:[%s1433 + $0x148] sm:$0xff]
      %v2377 = vld [vmem:[%s1433 + $0x150] sm:$0xff]
      %v2378 = vld [vmem:[%s1433 + $0x158] sm:$0xff]
      %v2379 = vld [vmem:[%s1433 + $0x180] sm:$0xff]
      %v2380 = vld [vmem:[%s1433 + $0x188] sm:$0xff]
      %v2381 = vld [vmem:[%s1433 + $0x190] sm:$0xff]
      %v2382 = vld [vmem:[%s1433 + $0x198] sm:$0xff]
      %v2383 = vld [vmem:[%s1433 + $0x1c0] sm:$0xff]
      %v2384 = vld [vmem:[%s1433 + $0x1c8] sm:$0xff]
      %v2385 = vld [vmem:[%s1433 + $0x1d0] sm:$0xff]
      %v2386 = vld [vmem:[%s1433 + $0x1d8] sm:$0xff]
      %v2387 = vlaneseq
      %v2388 = vshrl.u32 %v2387, 7
      %v2389 = vsub.s32 3, %v2388
      %v2390 = vrot.slane %v1498, %v2389
      %v2391 = vlaneseq
      %v2392 = vshrl.u32 %v2391, 7
      %v2393 = vsub.s32 3, %v2392
      %v2394 = vrot.slane %v1499, %v2393
      %v2395 = vlaneseq
      %v2396 = vshrl.u32 %v2395, 7
      %v2397 = vsub.s32 3, %v2396
      %v2398 = vrot.slane %v1500, %v2397
      %v2399 = vlaneseq
      %v2400 = vshrl.u32 %v2399, 7
      %v2401 = vsub.s32 3, %v2400
      %v2402 = vrot.slane %v1501, %v2401
      %v2403 = vmul.f32 %v2355, %v2390
      %v2404 = vmul.f32 %v2356, %v2394
      %v2405 = vmul.f32 %v2357, %v2398
      %v2406 = vmul.f32 %v2358, %v2402
      %v2407 = vmul.f32 %v2359, %v2390
      %v2408 = vmul.f32 %v2360, %v2394
      %v2409 = vmul.f32 %v2361, %v2398
      %v2410 = vmul.f32 %v2362, %v2402
      %v2411 = vmul.f32 %v2363, %v2390
      %v2412 = vmul.f32 %v2364, %v2394
      %v2413 = vmul.f32 %v2365, %v2398
      %v2414 = vmul.f32 %v2366, %v2402
      %v2415 = vmul.f32 %v2367, %v2390
      %v2416 = vmul.f32 %v2368, %v2394
      %v2417 = vmul.f32 %v2369, %v2398
      %v2418 = vmul.f32 %v2370, %v2402
      %v2419 = vmul.f32 %v2371, %v2390
      %v2420 = vmul.f32 %v2372, %v2394
      %v2421 = vmul.f32 %v2373, %v2398
      %v2422 = vmul.f32 %v2374, %v2402
      %v2423 = vmul.f32 %v2375, %v2390
      %v2424 = vmul.f32 %v2376, %v2394
      %v2425 = vmul.f32 %v2377, %v2398
      %v2426 = vmul.f32 %v2378, %v2402
      %v2427 = vmul.f32 %v2379, %v2390
      %v2428 = vmul.f32 %v2380, %v2394
      %v2429 = vmul.f32 %v2381, %v2398
      %v2430 = vmul.f32 %v2382, %v2402
      %v2431 = vmul.f32 %v2383, %v2390
      %v2432 = vmul.f32 %v2384, %v2394
      %v2433 = vmul.f32 %v2385, %v2398
      %v2434 = vmul.f32 %v2386, %v2402
      %v2435 = vadd.f32 %v2323, %v2403
      %v2436 = vadd.f32 %v2324, %v2404
      %v2437 = vadd.f32 %v2325, %v2405
      %v2438 = vadd.f32 %v2326, %v2406
      %v2439 = vadd.f32 %v2327, %v2407
      %v2440 = vadd.f32 %v2328, %v2408
      %v2441 = vadd.f32 %v2329, %v2409
      %v2442 = vadd.f32 %v2330, %v2410
      %v2443 = vadd.f32 %v2331, %v2411
      %v2444 = vadd.f32 %v2332, %v2412
      %v2445 = vadd.f32 %v2333, %v2413
      %v2446 = vadd.f32 %v2334, %v2414
      %v2447 = vadd.f32 %v2335, %v2415
      %v2448 = vadd.f32 %v2336, %v2416
      %v2449 = vadd.f32 %v2337, %v2417
      %v2450 = vadd.f32 %v2338, %v2418
      %v2451 = vadd.f32 %v2339, %v2419
      %v2452 = vadd.f32 %v2340, %v2420
      %v2453 = vadd.f32 %v2341, %v2421
      %v2454 = vadd.f32 %v2342, %v2422
      %v2455 = vadd.f32 %v2343, %v2423
      %v2456 = vadd.f32 %v2344, %v2424
      %v2457 = vadd.f32 %v2345, %v2425
      %v2458 = vadd.f32 %v2346, %v2426
      %v2459 = vadd.f32 %v2347, %v2427
      %v2460 = vadd.f32 %v2348, %v2428
      %v2461 = vadd.f32 %v2349, %v2429
      %v2462 = vadd.f32 %v2350, %v2430
      %v2463 = vadd.f32 %v2351, %v2431
      %v2464 = vadd.f32 %v2352, %v2432
      %v2465 = vadd.f32 %v2353, %v2433
      %v2466 = vadd.f32 %v2354, %v2434
      %v2467 = vld [vmem:[%s1433] sm:$0xfe]
      %v2468 = vld [vmem:[%s1433 + $0x8] sm:$0xfe]
      %v2469 = vld [vmem:[%s1433 + $0x10] sm:$0xfe]
      %v2470 = vld [vmem:[%s1433 + $0x18] sm:$0xfe]
      %v2471 = vld [vmem:[%s1433 + $0x20] sm:$0x1]
      %v2472 = vld [vmem:[%s1433 + $0x28] sm:$0x1]
      %v2473 = vld [vmem:[%s1433 + $0x30] sm:$0x1]
      %v2474 = vld [vmem:[%s1433 + $0x38] sm:$0x1]
      %v2475 = vld [vmem:[%s1433 + $0x40] sm:$0xfe]
      %v2476 = vld [vmem:[%s1433 + $0x48] sm:$0xfe]
      %v2477 = vld [vmem:[%s1433 + $0x50] sm:$0xfe]
      %v2478 = vld [vmem:[%s1433 + $0x58] sm:$0xfe]
      %v2479 = vld [vmem:[%s1433 + $0x60] sm:$0x1]
      %v2480 = vld [vmem:[%s1433 + $0x68] sm:$0x1]
      %v2481 = vld [vmem:[%s1433 + $0x70] sm:$0x1]
      %v2482 = vld [vmem:[%s1433 + $0x78] sm:$0x1]
      %v2483 = vld [vmem:[%s1433 + $0x80] sm:$0xfe]
      %v2484 = vld [vmem:[%s1433 + $0x88] sm:$0xfe]
      %v2485 = vld [vmem:[%s1433 + $0x90] sm:$0xfe]
      %v2486 = vld [vmem:[%s1433 + $0x98] sm:$0xfe]
      %v2487 = vld [vmem:[%s1433 + $0xa0] sm:$0x1]
      %v2488 = vld [vmem:[%s1433 + $0xa8] sm:$0x1]
      %v2489 = vld [vmem:[%s1433 + $0xb0] sm:$0x1]
      %v2490 = vld [vmem:[%s1433 + $0xb8] sm:$0x1]
      %v2491 = vld [vmem:[%s1433 + $0xc0] sm:$0xfe]
      %v2492 = vld [vmem:[%s1433 + $0xc8] sm:$0xfe]
      %v2493 = vld [vmem:[%s1433 + $0xd0] sm:$0xfe]
      %v2494 = vld [vmem:[%s1433 + $0xd8] sm:$0xfe]
      %v2495 = vld [vmem:[%s1433 + $0xe0] sm:$0x1]
      %v2496 = vld [vmem:[%s1433 + $0xe8] sm:$0x1]
      %v2497 = vld [vmem:[%s1433 + $0xf0] sm:$0x1]
      %v2498 = vld [vmem:[%s1433 + $0xf8] sm:$0x1]
      %v2499 = vld [vmem:[%s1433 + $0x100] sm:$0xfe]
      %v2500 = vld [vmem:[%s1433 + $0x108] sm:$0xfe]
      %v2501 = vld [vmem:[%s1433 + $0x110] sm:$0xfe]
      %v2502 = vld [vmem:[%s1433 + $0x118] sm:$0xfe]
      %v2503 = vld [vmem:[%s1433 + $0x120] sm:$0x1]
      %v2504 = vld [vmem:[%s1433 + $0x128] sm:$0x1]
      %v2505 = vld [vmem:[%s1433 + $0x130] sm:$0x1]
      %v2506 = vld [vmem:[%s1433 + $0x138] sm:$0x1]
      %v2507 = vld [vmem:[%s1433 + $0x140] sm:$0xfe]
      %v2508 = vld [vmem:[%s1433 + $0x148] sm:$0xfe]
      %v2509 = vld [vmem:[%s1433 + $0x150] sm:$0xfe]
      %v2510 = vld [vmem:[%s1433 + $0x158] sm:$0xfe]
      %v2511 = vld [vmem:[%s1433 + $0x160] sm:$0x1]
      %v2512 = vld [vmem:[%s1433 + $0x168] sm:$0x1]
      %v2513 = vld [vmem:[%s1433 + $0x170] sm:$0x1]
      %v2514 = vld [vmem:[%s1433 + $0x178] sm:$0x1]
      %v2515 = vld [vmem:[%s1433 + $0x180] sm:$0xfe]
      %v2516 = vld [vmem:[%s1433 + $0x188] sm:$0xfe]
      %v2517 = vld [vmem:[%s1433 + $0x190] sm:$0xfe]
      %v2518 = vld [vmem:[%s1433 + $0x198] sm:$0xfe]
      %v2519 = vld [vmem:[%s1433 + $0x1a0] sm:$0x1]
      %v2520 = vld [vmem:[%s1433 + $0x1a8] sm:$0x1]
      %v2521 = vld [vmem:[%s1433 + $0x1b0] sm:$0x1]
      %v2522 = vld [vmem:[%s1433 + $0x1b8] sm:$0x1]
      %v2523 = vld [vmem:[%s1433 + $0x1c0] sm:$0xfe]
      %v2524 = vld [vmem:[%s1433 + $0x1c8] sm:$0xfe]
      %v2525 = vld [vmem:[%s1433 + $0x1d0] sm:$0xfe]
      %v2526 = vld [vmem:[%s1433 + $0x1d8] sm:$0xfe]
      %v2527 = vld [vmem:[%s1433 + $0x1e0] sm:$0x1]
      %v2528 = vld [vmem:[%s1433 + $0x1e8] sm:$0x1]
      %v2529 = vld [vmem:[%s1433 + $0x1f0] sm:$0x1]
      %v2530 = vld [vmem:[%s1433 + $0x1f8] sm:$0x1]
      %v2531 = vlaneseq
      %v2532 = vshrl.u32 %v2531, 7
      %v2533 = vsub.s32 4, %v2532
      %v2534 = vrot.slane %v1498, %v2533
      %v2535 = vlaneseq
      %v2536 = vshrl.u32 %v2535, 7
      %v2537 = vsub.s32 4, %v2536
      %v2538 = vrot.slane %v1499, %v2537
      %v2539 = vlaneseq
      %v2540 = vshrl.u32 %v2539, 7
      %v2541 = vsub.s32 4, %v2540
      %v2542 = vrot.slane %v1500, %v2541
      %v2543 = vlaneseq
      %v2544 = vshrl.u32 %v2543, 7
      %v2545 = vsub.s32 4, %v2544
      %v2546 = vrot.slane %v1501, %v2545
      %v2547 = vmul.f32 %v2467, %v2534
      %v2548 = vmul.f32 %v2468, %v2538
      %v2549 = vmul.f32 %v2469, %v2542
      %v2550 = vmul.f32 %v2470, %v2546
      %v2551 = vmul.f32 %v2471, %v2534
      %v2552 = vmul.f32 %v2472, %v2538
      %v2553 = vmul.f32 %v2473, %v2542
      %v2554 = vmul.f32 %v2474, %v2546
      %v2555 = vmul.f32 %v2475, %v2534
      %v2556 = vmul.f32 %v2476, %v2538
      %v2557 = vmul.f32 %v2477, %v2542
      %v2558 = vmul.f32 %v2478, %v2546
      %v2559 = vmul.f32 %v2479, %v2534
      %v2560 = vmul.f32 %v2480, %v2538
      %v2561 = vmul.f32 %v2481, %v2542
      %v2562 = vmul.f32 %v2482, %v2546
      %v2563 = vmul.f32 %v2483, %v2534
      %v2564 = vmul.f32 %v2484, %v2538
      %v2565 = vmul.f32 %v2485, %v2542
      %v2566 = vmul.f32 %v2486, %v2546
      %v2567 = vmul.f32 %v2487, %v2534
      %v2568 = vmul.f32 %v2488, %v2538
      %v2569 = vmul.f32 %v2489, %v2542
      %v2570 = vmul.f32 %v2490, %v2546
      %v2571 = vmul.f32 %v2491, %v2534
      %v2572 = vmul.f32 %v2492, %v2538
      %v2573 = vmul.f32 %v2493, %v2542
      %v2574 = vmul.f32 %v2494, %v2546
      %v2575 = vmul.f32 %v2495, %v2534
      %v2576 = vmul.f32 %v2496, %v2538
      %v2577 = vmul.f32 %v2497, %v2542
      %v2578 = vmul.f32 %v2498, %v2546
      %v2579 = vmul.f32 %v2499, %v2534
      %v2580 = vmul.f32 %v2500, %v2538
      %v2581 = vmul.f32 %v2501, %v2542
      %v2582 = vmul.f32 %v2502, %v2546
      %v2583 = vmul.f32 %v2503, %v2534
      %v2584 = vmul.f32 %v2504, %v2538
      %v2585 = vmul.f32 %v2505, %v2542
      %v2586 = vmul.f32 %v2506, %v2546
      %v2587 = vmul.f32 %v2507, %v2534
      %v2588 = vmul.f32 %v2508, %v2538
      %v2589 = vmul.f32 %v2509, %v2542
      %v2590 = vmul.f32 %v2510, %v2546
      %v2591 = vmul.f32 %v2511, %v2534
      %v2592 = vmul.f32 %v2512, %v2538
      %v2593 = vmul.f32 %v2513, %v2542
      %v2594 = vmul.f32 %v2514, %v2546
      %v2595 = vmul.f32 %v2515, %v2534
      %v2596 = vmul.f32 %v2516, %v2538
      %v2597 = vmul.f32 %v2517, %v2542
      %v2598 = vmul.f32 %v2518, %v2546
      %v2599 = vmul.f32 %v2519, %v2534
      %v2600 = vmul.f32 %v2520, %v2538
      %v2601 = vmul.f32 %v2521, %v2542
      %v2602 = vmul.f32 %v2522, %v2546
      %v2603 = vmul.f32 %v2523, %v2534
      %v2604 = vmul.f32 %v2524, %v2538
      %v2605 = vmul.f32 %v2525, %v2542
      %v2606 = vmul.f32 %v2526, %v2546
      %v2607 = vmul.f32 %v2527, %v2534
      %v2608 = vmul.f32 %v2528, %v2538
      %v2609 = vmul.f32 %v2529, %v2542
      %v2610 = vmul.f32 %v2530, %v2546
      %v2675 = vrot.slane %v2547, 1
      %v2676 = vrot.slane %v2551, 1
      %v2677 = vsel %vm1826, %v2675, %v2676
      %v2678 = vrot.slane %v2548, 1
      %v2679 = vrot.slane %v2552, 1
      %v2680 = vsel %vm1826, %v2678, %v2679
      %v2681 = vrot.slane %v2549, 1
      %v2682 = vrot.slane %v2553, 1
      %v2683 = vsel %vm1826, %v2681, %v2682
      %v2684 = vrot.slane %v2550, 1
      %v2685 = vrot.slane %v2554, 1
      %v2686 = vsel %vm1826, %v2684, %v2685
      %v2687 = vrot.slane %v2555, 1
      %v2688 = vrot.slane %v2559, 1
      %v2689 = vsel %vm1826, %v2687, %v2688
      %v2690 = vrot.slane %v2556, 1
      %v2691 = vrot.slane %v2560, 1
      %v2692 = vsel %vm1826, %v2690, %v2691
      %v2693 = vrot.slane %v2557, 1
      %v2694 = vrot.slane %v2561, 1
      %v2695 = vsel %vm1826, %v2693, %v2694
      %v2696 = vrot.slane %v2558, 1
      %v2697 = vrot.slane %v2562, 1
      %v2698 = vsel %vm1826, %v2696, %v2697
      %v2699 = vrot.slane %v2563, 1
      %v2700 = vrot.slane %v2567, 1
      %v2701 = vsel %vm1826, %v2699, %v2700
      %v2702 = vrot.slane %v2564, 1
      %v2703 = vrot.slane %v2568, 1
      %v2704 = vsel %vm1826, %v2702, %v2703
      %v2705 = vrot.slane %v2565, 1
      %v2706 = vrot.slane %v2569, 1
      %v2707 = vsel %vm1826, %v2705, %v2706
      %v2708 = vrot.slane %v2566, 1
      %v2709 = vrot.slane %v2570, 1
      %v2710 = vsel %vm1826, %v2708, %v2709
      %v2711 = vrot.slane %v2571, 1
      %v2712 = vrot.slane %v2575, 1
      %v2713 = vsel %vm1826, %v2711, %v2712
      %v2714 = vrot.slane %v2572, 1
      %v2715 = vrot.slane %v2576, 1
      %v2716 = vsel %vm1826, %v2714, %v2715
      %v2717 = vrot.slane %v2573, 1
      %v2718 = vrot.slane %v2577, 1
      %v2719 = vsel %vm1826, %v2717, %v2718
      %v2720 = vrot.slane %v2574, 1
      %v2721 = vrot.slane %v2578, 1
      %v2722 = vsel %vm1826, %v2720, %v2721
      %v2723 = vrot.slane %v2579, 1
      %v2724 = vrot.slane %v2583, 1
      %v2725 = vsel %vm1826, %v2723, %v2724
      %v2726 = vrot.slane %v2580, 1
      %v2727 = vrot.slane %v2584, 1
      %v2728 = vsel %vm1826, %v2726, %v2727
      %v2729 = vrot.slane %v2581, 1
      %v2730 = vrot.slane %v2585, 1
      %v2731 = vsel %vm1826, %v2729, %v2730
      %v2732 = vrot.slane %v2582, 1
      %v2733 = vrot.slane %v2586, 1
      %v2734 = vsel %vm1826, %v2732, %v2733
      %v2735 = vrot.slane %v2587, 1
      %v2736 = vrot.slane %v2591, 1
      %v2737 = vsel %vm1826, %v2735, %v2736
      %v2738 = vrot.slane %v2588, 1
      %v2739 = vrot.slane %v2592, 1
      %v2740 = vsel %vm1826, %v2738, %v2739
      %v2741 = vrot.slane %v2589, 1
      %v2742 = vrot.slane %v2593, 1
      %v2743 = vsel %vm1826, %v2741, %v2742
      %v2744 = vrot.slane %v2590, 1
      %v2745 = vrot.slane %v2594, 1
      %v2746 = vsel %vm1826, %v2744, %v2745
      %v2747 = vrot.slane %v2595, 1
      %v2748 = vrot.slane %v2599, 1
      %v2749 = vsel %vm1826, %v2747, %v2748
      %v2750 = vrot.slane %v2596, 1
      %v2751 = vrot.slane %v2600, 1
      %v2752 = vsel %vm1826, %v2750, %v2751
      %v2753 = vrot.slane %v2597, 1
      %v2754 = vrot.slane %v2601, 1
      %v2755 = vsel %vm1826, %v2753, %v2754
      %v2756 = vrot.slane %v2598, 1
      %v2757 = vrot.slane %v2602, 1
      %v2758 = vsel %vm1826, %v2756, %v2757
      %v2759 = vrot.slane %v2603, 1
      %v2760 = vrot.slane %v2607, 1
      %v2761 = vsel %vm1826, %v2759, %v2760
      %v2762 = vrot.slane %v2604, 1
      %v2763 = vrot.slane %v2608, 1
      %v2764 = vsel %vm1826, %v2762, %v2763
      %v2765 = vrot.slane %v2605, 1
      %v2766 = vrot.slane %v2609, 1
      %v2767 = vsel %vm1826, %v2765, %v2766
      %v2768 = vrot.slane %v2606, 1
      %v2769 = vrot.slane %v2610, 1
      %v2770 = vsel %vm1826, %v2768, %v2769
      %v2803 = vadd.f32 %v2435, %v2677
      %v2804 = vadd.f32 %v2436, %v2680
      %v2805 = vadd.f32 %v2437, %v2683
      %v2806 = vadd.f32 %v2438, %v2686
      %v2807 = vadd.f32 %v2439, %v2689
      %v2808 = vadd.f32 %v2440, %v2692
      %v2809 = vadd.f32 %v2441, %v2695
      %v2810 = vadd.f32 %v2442, %v2698
      %v2811 = vadd.f32 %v2443, %v2701
      %v2812 = vadd.f32 %v2444, %v2704
      %v2813 = vadd.f32 %v2445, %v2707
      %v2814 = vadd.f32 %v2446, %v2710
      %v2815 = vadd.f32 %v2447, %v2713
      %v2816 = vadd.f32 %v2448, %v2716
      %v2817 = vadd.f32 %v2449, %v2719
      %v2818 = vadd.f32 %v2450, %v2722
      %v2819 = vadd.f32 %v2451, %v2725
      %v2820 = vadd.f32 %v2452, %v2728
      %v2821 = vadd.f32 %v2453, %v2731
      %v2822 = vadd.f32 %v2454, %v2734
      %v2823 = vadd.f32 %v2455, %v2737
      %v2824 = vadd.f32 %v2456, %v2740
      %v2825 = vadd.f32 %v2457, %v2743
      %v2826 = vadd.f32 %v2458, %v2746
      %v2827 = vadd.f32 %v2459, %v2749
      %v2828 = vadd.f32 %v2460, %v2752
      %v2829 = vadd.f32 %v2461, %v2755
      %v2830 = vadd.f32 %v2462, %v2758
      %v2831 = vadd.f32 %v2463, %v2761
      %v2832 = vadd.f32 %v2464, %v2764
      %v2833 = vadd.f32 %v2465, %v2767
      %v2834 = vadd.f32 %v2466, %v2770
      %v2835 = vld [vmem:[%s1433] sm:$0xfc]
      %v2836 = vld [vmem:[%s1433 + $0x8] sm:$0xfc]
      %v2837 = vld [vmem:[%s1433 + $0x10] sm:$0xfc]
      %v2838 = vld [vmem:[%s1433 + $0x18] sm:$0xfc]
      %v2839 = vld [vmem:[%s1433 + $0x20] sm:$0x3]
      %v2840 = vld [vmem:[%s1433 + $0x28] sm:$0x3]
      %v2841 = vld [vmem:[%s1433 + $0x30] sm:$0x3]
      %v2842 = vld [vmem:[%s1433 + $0x38] sm:$0x3]
      %v2843 = vld [vmem:[%s1433 + $0x40] sm:$0xfc]
      %v2844 = vld [vmem:[%s1433 + $0x48] sm:$0xfc]
      %v2845 = vld [vmem:[%s1433 + $0x50] sm:$0xfc]
      %v2846 = vld [vmem:[%s1433 + $0x58] sm:$0xfc]
      %v2847 = vld [vmem:[%s1433 + $0x60] sm:$0x3]
      %v2848 = vld [vmem:[%s1433 + $0x68] sm:$0x3]
      %v2849 = vld [vmem:[%s1433 + $0x70] sm:$0x3]
      %v2850 = vld [vmem:[%s1433 + $0x78] sm:$0x3]
      %v2851 = vld [vmem:[%s1433 + $0x80] sm:$0xfc]
      %v2852 = vld [vmem:[%s1433 + $0x88] sm:$0xfc]
      %v2853 = vld [vmem:[%s1433 + $0x90] sm:$0xfc]
      %v2854 = vld [vmem:[%s1433 + $0x98] sm:$0xfc]
      %v2855 = vld [vmem:[%s1433 + $0xa0] sm:$0x3]
      %v2856 = vld [vmem:[%s1433 + $0xa8] sm:$0x3]
      %v2857 = vld [vmem:[%s1433 + $0xb0] sm:$0x3]
      %v2858 = vld [vmem:[%s1433 + $0xb8] sm:$0x3]
      %v2859 = vld [vmem:[%s1433 + $0xc0] sm:$0xfc]
      %v2860 = vld [vmem:[%s1433 + $0xc8] sm:$0xfc]
      %v2861 = vld [vmem:[%s1433 + $0xd0] sm:$0xfc]
      %v2862 = vld [vmem:[%s1433 + $0xd8] sm:$0xfc]
      %v2863 = vld [vmem:[%s1433 + $0xe0] sm:$0x3]
      %v2864 = vld [vmem:[%s1433 + $0xe8] sm:$0x3]
      %v2865 = vld [vmem:[%s1433 + $0xf0] sm:$0x3]
      %v2866 = vld [vmem:[%s1433 + $0xf8] sm:$0x3]
      %v2867 = vld [vmem:[%s1433 + $0x100] sm:$0xfc]
      %v2868 = vld [vmem:[%s1433 + $0x108] sm:$0xfc]
      %v2869 = vld [vmem:[%s1433 + $0x110] sm:$0xfc]
      %v2870 = vld [vmem:[%s1433 + $0x118] sm:$0xfc]
      %v2871 = vld [vmem:[%s1433 + $0x120] sm:$0x3]
      %v2872 = vld [vmem:[%s1433 + $0x128] sm:$0x3]
      %v2873 = vld [vmem:[%s1433 + $0x130] sm:$0x3]
      %v2874 = vld [vmem:[%s1433 + $0x138] sm:$0x3]
      %v2875 = vld [vmem:[%s1433 + $0x140] sm:$0xfc]
      %v2876 = vld [vmem:[%s1433 + $0x148] sm:$0xfc]
      %v2877 = vld [vmem:[%s1433 + $0x150] sm:$0xfc]
      %v2878 = vld [vmem:[%s1433 + $0x158] sm:$0xfc]
      %v2879 = vld [vmem:[%s1433 + $0x160] sm:$0x3]
      %v2880 = vld [vmem:[%s1433 + $0x168] sm:$0x3]
      %v2881 = vld [vmem:[%s1433 + $0x170] sm:$0x3]
      %v2882 = vld [vmem:[%s1433 + $0x178] sm:$0x3]
      %v2883 = vld [vmem:[%s1433 + $0x180] sm:$0xfc]
      %v2884 = vld [vmem:[%s1433 + $0x188] sm:$0xfc]
      %v2885 = vld [vmem:[%s1433 + $0x190] sm:$0xfc]
      %v2886 = vld [vmem:[%s1433 + $0x198] sm:$0xfc]
      %v2887 = vld [vmem:[%s1433 + $0x1a0] sm:$0x3]
      %v2888 = vld [vmem:[%s1433 + $0x1a8] sm:$0x3]
      %v2889 = vld [vmem:[%s1433 + $0x1b0] sm:$0x3]
      %v2890 = vld [vmem:[%s1433 + $0x1b8] sm:$0x3]
      %v2891 = vld [vmem:[%s1433 + $0x1c0] sm:$0xfc]
      %v2892 = vld [vmem:[%s1433 + $0x1c8] sm:$0xfc]
      %v2893 = vld [vmem:[%s1433 + $0x1d0] sm:$0xfc]
      %v2894 = vld [vmem:[%s1433 + $0x1d8] sm:$0xfc]
      %v2895 = vld [vmem:[%s1433 + $0x1e0] sm:$0x3]
      %v2896 = vld [vmem:[%s1433 + $0x1e8] sm:$0x3]
      %v2897 = vld [vmem:[%s1433 + $0x1f0] sm:$0x3]
      %v2898 = vld [vmem:[%s1433 + $0x1f8] sm:$0x3]
      %v2899 = vlaneseq
      %v2900 = vshrl.u32 %v2899, 7
      %v2901 = vsub.s32 5, %v2900
      %v2902 = vrot.slane %v1498, %v2901
      %v2903 = vlaneseq
      %v2904 = vshrl.u32 %v2903, 7
      %v2905 = vsub.s32 5, %v2904
      %v2906 = vrot.slane %v1499, %v2905
      %v2907 = vlaneseq
      %v2908 = vshrl.u32 %v2907, 7
      %v2909 = vsub.s32 5, %v2908
      %v2910 = vrot.slane %v1500, %v2909
      %v2911 = vlaneseq
      %v2912 = vshrl.u32 %v2911, 7
      %v2913 = vsub.s32 5, %v2912
      %v2914 = vrot.slane %v1501, %v2913
      %v2915 = vmul.f32 %v2835, %v2902
      %v2916 = vmul.f32 %v2836, %v2906
      %v2917 = vmul.f32 %v2837, %v2910
      %v2918 = vmul.f32 %v2838, %v2914
      %v2919 = vmul.f32 %v2839, %v2902
      %v2920 = vmul.f32 %v2840, %v2906
      %v2921 = vmul.f32 %v2841, %v2910
      %v2922 = vmul.f32 %v2842, %v2914
      %v2923 = vmul.f32 %v2843, %v2902
      %v2924 = vmul.f32 %v2844, %v2906
      %v2925 = vmul.f32 %v2845, %v2910
      %v2926 = vmul.f32 %v2846, %v2914
      %v2927 = vmul.f32 %v2847, %v2902
      %v2928 = vmul.f32 %v2848, %v2906
      %v2929 = vmul.f32 %v2849, %v2910
      %v2930 = vmul.f32 %v2850, %v2914
      %v2931 = vmul.f32 %v2851, %v2902
      %v2932 = vmul.f32 %v2852, %v2906
      %v2933 = vmul.f32 %v2853, %v2910
      %v2934 = vmul.f32 %v2854, %v2914
      %v2935 = vmul.f32 %v2855, %v2902
      %v2936 = vmul.f32 %v2856, %v2906
      %v2937 = vmul.f32 %v2857, %v2910
      %v2938 = vmul.f32 %v2858, %v2914
      %v2939 = vmul.f32 %v2859, %v2902
      %v2940 = vmul.f32 %v2860, %v2906
      %v2941 = vmul.f32 %v2861, %v2910
      %v2942 = vmul.f32 %v2862, %v2914
      %v2943 = vmul.f32 %v2863, %v2902
      %v2944 = vmul.f32 %v2864, %v2906
      %v2945 = vmul.f32 %v2865, %v2910
      %v2946 = vmul.f32 %v2866, %v2914
      %v2947 = vmul.f32 %v2867, %v2902
      %v2948 = vmul.f32 %v2868, %v2906
      %v2949 = vmul.f32 %v2869, %v2910
      %v2950 = vmul.f32 %v2870, %v2914
      %v2951 = vmul.f32 %v2871, %v2902
      %v2952 = vmul.f32 %v2872, %v2906
      %v2953 = vmul.f32 %v2873, %v2910
      %v2954 = vmul.f32 %v2874, %v2914
      %v2955 = vmul.f32 %v2875, %v2902
      %v2956 = vmul.f32 %v2876, %v2906
      %v2957 = vmul.f32 %v2877, %v2910
      %v2958 = vmul.f32 %v2878, %v2914
      %v2959 = vmul.f32 %v2879, %v2902
      %v2960 = vmul.f32 %v2880, %v2906
      %v2961 = vmul.f32 %v2881, %v2910
      %v2962 = vmul.f32 %v2882, %v2914
      %v2963 = vmul.f32 %v2883, %v2902
      %v2964 = vmul.f32 %v2884, %v2906
      %v2965 = vmul.f32 %v2885, %v2910
      %v2966 = vmul.f32 %v2886, %v2914
      %v2967 = vmul.f32 %v2887, %v2902
      %v2968 = vmul.f32 %v2888, %v2906
      %v2969 = vmul.f32 %v2889, %v2910
      %v2970 = vmul.f32 %v2890, %v2914
      %v2971 = vmul.f32 %v2891, %v2902
      %v2972 = vmul.f32 %v2892, %v2906
      %v2973 = vmul.f32 %v2893, %v2910
      %v2974 = vmul.f32 %v2894, %v2914
      %v2975 = vmul.f32 %v2895, %v2902
      %v2976 = vmul.f32 %v2896, %v2906
      %v2977 = vmul.f32 %v2897, %v2910
      %v2978 = vmul.f32 %v2898, %v2914
      %v3043 = vrot.slane %v2915, 2
      %v3044 = vrot.slane %v2919, 2
      %v3045 = vsel %vm542, %v3043, %v3044
      %v3046 = vrot.slane %v2916, 2
      %v3047 = vrot.slane %v2920, 2
      %v3048 = vsel %vm542, %v3046, %v3047
      %v3049 = vrot.slane %v2917, 2
      %v3050 = vrot.slane %v2921, 2
      %v3051 = vsel %vm542, %v3049, %v3050
      %v3052 = vrot.slane %v2918, 2
      %v3053 = vrot.slane %v2922, 2
      %v3054 = vsel %vm542, %v3052, %v3053
      %v3055 = vrot.slane %v2923, 2
      %v3056 = vrot.slane %v2927, 2
      %v3057 = vsel %vm542, %v3055, %v3056
      %v3058 = vrot.slane %v2924, 2
      %v3059 = vrot.slane %v2928, 2
      %v3060 = vsel %vm542, %v3058, %v3059
      %v3061 = vrot.slane %v2925, 2
      %v3062 = vrot.slane %v2929, 2
      %v3063 = vsel %vm542, %v3061, %v3062
      %v3064 = vrot.slane %v2926, 2
      %v3065 = vrot.slane %v2930, 2
      %v3066 = vsel %vm542, %v3064, %v3065
      %v3067 = vrot.slane %v2931, 2
      %v3068 = vrot.slane %v2935, 2
      %v3069 = vsel %vm542, %v3067, %v3068
      %v3070 = vrot.slane %v2932, 2
      %v3071 = vrot.slane %v2936, 2
      %v3072 = vsel %vm542, %v3070, %v3071
      %v3073 = vrot.slane %v2933, 2
      %v3074 = vrot.slane %v2937, 2
      %v3075 = vsel %vm542, %v3073, %v3074
      %v3076 = vrot.slane %v2934, 2
      %v3077 = vrot.slane %v2938, 2
      %v3078 = vsel %vm542, %v3076, %v3077
      %v3079 = vrot.slane %v2939, 2
      %v3080 = vrot.slane %v2943, 2
      %v3081 = vsel %vm542, %v3079, %v3080
      %v3082 = vrot.slane %v2940, 2
      %v3083 = vrot.slane %v2944, 2
      %v3084 = vsel %vm542, %v3082, %v3083
      %v3085 = vrot.slane %v2941, 2
      %v3086 = vrot.slane %v2945, 2
      %v3087 = vsel %vm542, %v3085, %v3086
      %v3088 = vrot.slane %v2942, 2
      %v3089 = vrot.slane %v2946, 2
      %v3090 = vsel %vm542, %v3088, %v3089
      %v3091 = vrot.slane %v2947, 2
      %v3092 = vrot.slane %v2951, 2
      %v3093 = vsel %vm542, %v3091, %v3092
      %v3094 = vrot.slane %v2948, 2
      %v3095 = vrot.slane %v2952, 2
      %v3096 = vsel %vm542, %v3094, %v3095
      %v3097 = vrot.slane %v2949, 2
      %v3098 = vrot.slane %v2953, 2
      %v3099 = vsel %vm542, %v3097, %v3098
      %v3100 = vrot.slane %v2950, 2
      %v3101 = vrot.slane %v2954, 2
      %v3102 = vsel %vm542, %v3100, %v3101
      %v3103 = vrot.slane %v2955, 2
      %v3104 = vrot.slane %v2959, 2
      %v3105 = vsel %vm542, %v3103, %v3104
      %v3106 = vrot.slane %v2956, 2
      %v3107 = vrot.slane %v2960, 2
      %v3108 = vsel %vm542, %v3106, %v3107
      %v3109 = vrot.slane %v2957, 2
      %v3110 = vrot.slane %v2961, 2
      %v3111 = vsel %vm542, %v3109, %v3110
      %v3112 = vrot.slane %v2958, 2
      %v3113 = vrot.slane %v2962, 2
      %v3114 = vsel %vm542, %v3112, %v3113
      %v3115 = vrot.slane %v2963, 2
      %v3116 = vrot.slane %v2967, 2
      %v3117 = vsel %vm542, %v3115, %v3116
      %v3118 = vrot.slane %v2964, 2
      %v3119 = vrot.slane %v2968, 2
      %v3120 = vsel %vm542, %v3118, %v3119
      %v3121 = vrot.slane %v2965, 2
      %v3122 = vrot.slane %v2969, 2
      %v3123 = vsel %vm542, %v3121, %v3122
      %v3124 = vrot.slane %v2966, 2
      %v3125 = vrot.slane %v2970, 2
      %v3126 = vsel %vm542, %v3124, %v3125
      %v3127 = vrot.slane %v2971, 2
      %v3128 = vrot.slane %v2975, 2
      %v3129 = vsel %vm542, %v3127, %v3128
      %v3130 = vrot.slane %v2972, 2
      %v3131 = vrot.slane %v2976, 2
      %v3132 = vsel %vm542, %v3130, %v3131
      %v3133 = vrot.slane %v2973, 2
      %v3134 = vrot.slane %v2977, 2
      %v3135 = vsel %vm542, %v3133, %v3134
      %v3136 = vrot.slane %v2974, 2
      %v3137 = vrot.slane %v2978, 2
      %v3138 = vsel %vm542, %v3136, %v3137
      %v3171 = vadd.f32 %v2803, %v3045
      %v3172 = vadd.f32 %v2804, %v3048
      %v3173 = vadd.f32 %v2805, %v3051
      %v3174 = vadd.f32 %v2806, %v3054
      %v3175 = vadd.f32 %v2807, %v3057
      %v3176 = vadd.f32 %v2808, %v3060
      %v3177 = vadd.f32 %v2809, %v3063
      %v3178 = vadd.f32 %v2810, %v3066
      %v3179 = vadd.f32 %v2811, %v3069
      %v3180 = vadd.f32 %v2812, %v3072
      %v3181 = vadd.f32 %v2813, %v3075
      %v3182 = vadd.f32 %v2814, %v3078
      %v3183 = vadd.f32 %v2815, %v3081
      %v3184 = vadd.f32 %v2816, %v3084
      %v3185 = vadd.f32 %v2817, %v3087
      %v3186 = vadd.f32 %v2818, %v3090
      %v3187 = vadd.f32 %v2819, %v3093
      %v3188 = vadd.f32 %v2820, %v3096
      %v3189 = vadd.f32 %v2821, %v3099
      %v3190 = vadd.f32 %v2822, %v3102
      %v3191 = vadd.f32 %v2823, %v3105
      %v3192 = vadd.f32 %v2824, %v3108
      %v3193 = vadd.f32 %v2825, %v3111
      %v3194 = vadd.f32 %v2826, %v3114
      %v3195 = vadd.f32 %v2827, %v3117
      %v3196 = vadd.f32 %v2828, %v3120
      %v3197 = vadd.f32 %v2829, %v3123
      %v3198 = vadd.f32 %v2830, %v3126
      %v3199 = vadd.f32 %v2831, %v3129
      %v3200 = vadd.f32 %v2832, %v3132
      %v3201 = vadd.f32 %v2833, %v3135
      %v3202 = vadd.f32 %v2834, %v3138
      %s3203 = scalar_lea.vmem [#allocation2], 128
      %v3204 = vld [vmem:[%s3203] sm:$0xff]
      %v3205 = vld [vmem:[%s3203 + $0x8] sm:$0xff]
      %v3206 = vld [vmem:[%s3203 + $0x10] sm:$0xff]
      %v3207 = vld [vmem:[%s3203 + $0x18] sm:$0xff]
      %v3208 = vld [vmem:[%s3203 + $0x40] sm:$0xff]
      %v3209 = vld [vmem:[%s3203 + $0x48] sm:$0xff]
      %v3210 = vld [vmem:[%s3203 + $0x50] sm:$0xff]
      %v3211 = vld [vmem:[%s3203 + $0x58] sm:$0xff]
      %v3212 = vld [vmem:[%s3203 + $0x80] sm:$0xff]
      %v3213 = vld [vmem:[%s3203 + $0x88] sm:$0xff]
      %v3214 = vld [vmem:[%s3203 + $0x90] sm:$0xff]
      %v3215 = vld [vmem:[%s3203 + $0x98] sm:$0xff]
      %v3216 = vld [vmem:[%s3203 + $0xc0] sm:$0xff]
      %v3217 = vld [vmem:[%s3203 + $0xc8] sm:$0xff]
      %v3218 = vld [vmem:[%s3203 + $0xd0] sm:$0xff]
      %v3219 = vld [vmem:[%s3203 + $0xd8] sm:$0xff]
      %v3220 = vld [vmem:[%s3203 + $0x100] sm:$0xff]
      %v3221 = vld [vmem:[%s3203 + $0x108] sm:$0xff]
      %v3222 = vld [vmem:[%s3203 + $0x110] sm:$0xff]
      %v3223 = vld [vmem:[%s3203 + $0x118] sm:$0xff]
      %v3224 = vld [vmem:[%s3203 + $0x140] sm:$0xff]
      %v3225 = vld [vmem:[%s3203 + $0x148] sm:$0xff]
      %v3226 = vld [vmem:[%s3203 + $0x150] sm:$0xff]
      %v3227 = vld [vmem:[%s3203 + $0x158] sm:$0xff]
      %v3228 = vld [vmem:[%s3203 + $0x180] sm:$0xff]
      %v3229 = vld [vmem:[%s3203 + $0x188] sm:$0xff]
      %v3230 = vld [vmem:[%s3203 + $0x190] sm:$0xff]
      %v3231 = vld [vmem:[%s3203 + $0x198] sm:$0xff]
      %v3232 = vld [vmem:[%s3203 + $0x1c0] sm:$0xff]
      %v3233 = vld [vmem:[%s3203 + $0x1c8] sm:$0xff]
      %v3234 = vld [vmem:[%s3203 + $0x1d0] sm:$0xff]
      %v3235 = vld [vmem:[%s3203 + $0x1d8] sm:$0xff]
      %v3236 = vlaneseq
      %v3237 = vshrl.u32 %v3236, 7
      %v3238 = vsub.s32 6, %v3237
      %v3239 = vrot.slane %v1498, %v3238
      %v3240 = vlaneseq
      %v3241 = vshrl.u32 %v3240, 7
      %v3242 = vsub.s32 6, %v3241
      %v3243 = vrot.slane %v1499, %v3242
      %v3244 = vlaneseq
      %v3245 = vshrl.u32 %v3244, 7
      %v3246 = vsub.s32 6, %v3245
      %v3247 = vrot.slane %v1500, %v3246
      %v3248 = vlaneseq
      %v3249 = vshrl.u32 %v3248, 7
      %v3250 = vsub.s32 6, %v3249
      %v3251 = vrot.slane %v1501, %v3250
      %v3252 = vmul.f32 %v3204, %v3239
      %v3253 = vmul.f32 %v3205, %v3243
      %v3254 = vmul.f32 %v3206, %v3247
      %v3255 = vmul.f32 %v3207, %v3251
      %v3256 = vmul.f32 %v3208, %v3239
      %v3257 = vmul.f32 %v3209, %v3243
      %v3258 = vmul.f32 %v3210, %v3247
      %v3259 = vmul.f32 %v3211, %v3251
      %v3260 = vmul.f32 %v3212, %v3239
      %v3261 = vmul.f32 %v3213, %v3243
      %v3262 = vmul.f32 %v3214, %v3247
      %v3263 = vmul.f32 %v3215, %v3251
      %v3264 = vmul.f32 %v3216, %v3239
      %v3265 = vmul.f32 %v3217, %v3243
      %v3266 = vmul.f32 %v3218, %v3247
      %v3267 = vmul.f32 %v3219, %v3251
      %v3268 = vmul.f32 %v3220, %v3239
      %v3269 = vmul.f32 %v3221, %v3243
      %v3270 = vmul.f32 %v3222, %v3247
      %v3271 = vmul.f32 %v3223, %v3251
      %v3272 = vmul.f32 %v3224, %v3239
      %v3273 = vmul.f32 %v3225, %v3243
      %v3274 = vmul.f32 %v3226, %v3247
      %v3275 = vmul.f32 %v3227, %v3251
      %v3276 = vmul.f32 %v3228, %v3239
      %v3277 = vmul.f32 %v3229, %v3243
      %v3278 = vmul.f32 %v3230, %v3247
      %v3279 = vmul.f32 %v3231, %v3251
      %v3280 = vmul.f32 %v3232, %v3239
      %v3281 = vmul.f32 %v3233, %v3243
      %v3282 = vmul.f32 %v3234, %v3247
      %v3283 = vmul.f32 %v3235, %v3251
      %v3284 = vadd.f32 %v3171, %v3252
      %v3285 = vadd.f32 %v3172, %v3253
      %v3286 = vadd.f32 %v3173, %v3254
      %v3287 = vadd.f32 %v3174, %v3255
      %v3288 = vadd.f32 %v3175, %v3256
      %v3289 = vadd.f32 %v3176, %v3257
      %v3290 = vadd.f32 %v3177, %v3258
      %v3291 = vadd.f32 %v3178, %v3259
      %v3292 = vadd.f32 %v3179, %v3260
      %v3293 = vadd.f32 %v3180, %v3261
      %v3294 = vadd.f32 %v3181, %v3262
      %v3295 = vadd.f32 %v3182, %v3263
      %v3296 = vadd.f32 %v3183, %v3264
      %v3297 = vadd.f32 %v3184, %v3265
      %v3298 = vadd.f32 %v3185, %v3266
      %v3299 = vadd.f32 %v3186, %v3267
      %v3300 = vadd.f32 %v3187, %v3268
      %v3301 = vadd.f32 %v3188, %v3269
      %v3302 = vadd.f32 %v3189, %v3270
      %v3303 = vadd.f32 %v3190, %v3271
      %v3304 = vadd.f32 %v3191, %v3272
      %v3305 = vadd.f32 %v3192, %v3273
      %v3306 = vadd.f32 %v3193, %v3274
      %v3307 = vadd.f32 %v3194, %v3275
      %v3308 = vadd.f32 %v3195, %v3276
      %v3309 = vadd.f32 %v3196, %v3277
      %v3310 = vadd.f32 %v3197, %v3278
      %v3311 = vadd.f32 %v3198, %v3279
      %v3312 = vadd.f32 %v3199, %v3280
      %v3313 = vadd.f32 %v3200, %v3281
      %v3314 = vadd.f32 %v3201, %v3282
      %v3315 = vadd.f32 %v3202, %v3283
      %v3316 = vld [vmem:[%s3203] sm:$0xfe]
      %v3317 = vld [vmem:[%s3203 + $0x8] sm:$0xfe]
      %v3318 = vld [vmem:[%s3203 + $0x10] sm:$0xfe]
      %v3319 = vld [vmem:[%s3203 + $0x18] sm:$0xfe]
      %v3320 = vld [vmem:[%s3203 + $0x20] sm:$0x1]
      %v3321 = vld [vmem:[%s3203 + $0x28] sm:$0x1]
      %v3322 = vld [vmem:[%s3203 + $0x30] sm:$0x1]
      %v3323 = vld [vmem:[%s3203 + $0x38] sm:$0x1]
      %v3324 = vld [vmem:[%s3203 + $0x40] sm:$0xfe]
      %v3325 = vld [vmem:[%s3203 + $0x48] sm:$0xfe]
      %v3326 = vld [vmem:[%s3203 + $0x50] sm:$0xfe]
      %v3327 = vld [vmem:[%s3203 + $0x58] sm:$0xfe]
      %v3328 = vld [vmem:[%s3203 + $0x60] sm:$0x1]
      %v3329 = vld [vmem:[%s3203 + $0x68] sm:$0x1]
      %v3330 = vld [vmem:[%s3203 + $0x70] sm:$0x1]
      %v3331 = vld [vmem:[%s3203 + $0x78] sm:$0x1]
      %v3332 = vld [vmem:[%s3203 + $0x80] sm:$0xfe]
      %v3333 = vld [vmem:[%s3203 + $0x88] sm:$0xfe]
      %v3334 = vld [vmem:[%s3203 + $0x90] sm:$0xfe]
      %v3335 = vld [vmem:[%s3203 + $0x98] sm:$0xfe]
      %v3336 = vld [vmem:[%s3203 + $0xa0] sm:$0x1]
      %v3337 = vld [vmem:[%s3203 + $0xa8] sm:$0x1]
      %v3338 = vld [vmem:[%s3203 + $0xb0] sm:$0x1]
      %v3339 = vld [vmem:[%s3203 + $0xb8] sm:$0x1]
      %v3340 = vld [vmem:[%s3203 + $0xc0] sm:$0xfe]
      %v3341 = vld [vmem:[%s3203 + $0xc8] sm:$0xfe]
      %v3342 = vld [vmem:[%s3203 + $0xd0] sm:$0xfe]
      %v3343 = vld [vmem:[%s3203 + $0xd8] sm:$0xfe]
      %v3344 = vld [vmem:[%s3203 + $0xe0] sm:$0x1]
      %v3345 = vld [vmem:[%s3203 + $0xe8] sm:$0x1]
      %v3346 = vld [vmem:[%s3203 + $0xf0] sm:$0x1]
      %v3347 = vld [vmem:[%s3203 + $0xf8] sm:$0x1]
      %v3348 = vld [vmem:[%s3203 + $0x100] sm:$0xfe]
      %v3349 = vld [vmem:[%s3203 + $0x108] sm:$0xfe]
      %v3350 = vld [vmem:[%s3203 + $0x110] sm:$0xfe]
      %v3351 = vld [vmem:[%s3203 + $0x118] sm:$0xfe]
      %v3352 = vld [vmem:[%s3203 + $0x120] sm:$0x1]
      %v3353 = vld [vmem:[%s3203 + $0x128] sm:$0x1]
      %v3354 = vld [vmem:[%s3203 + $0x130] sm:$0x1]
      %v3355 = vld [vmem:[%s3203 + $0x138] sm:$0x1]
      %v3356 = vld [vmem:[%s3203 + $0x140] sm:$0xfe]
      %v3357 = vld [vmem:[%s3203 + $0x148] sm:$0xfe]
      %v3358 = vld [vmem:[%s3203 + $0x150] sm:$0xfe]
      %v3359 = vld [vmem:[%s3203 + $0x158] sm:$0xfe]
      %v3360 = vld [vmem:[%s3203 + $0x160] sm:$0x1]
      %v3361 = vld [vmem:[%s3203 + $0x168] sm:$0x1]
      %v3362 = vld [vmem:[%s3203 + $0x170] sm:$0x1]
      %v3363 = vld [vmem:[%s3203 + $0x178] sm:$0x1]
      %v3364 = vld [vmem:[%s3203 + $0x180] sm:$0xfe]
      %v3365 = vld [vmem:[%s3203 + $0x188] sm:$0xfe]
      %v3366 = vld [vmem:[%s3203 + $0x190] sm:$0xfe]
      %v3367 = vld [vmem:[%s3203 + $0x198] sm:$0xfe]
      %v3368 = vld [vmem:[%s3203 + $0x1a0] sm:$0x1]
      %v3369 = vld [vmem:[%s3203 + $0x1a8] sm:$0x1]
      %v3370 = vld [vmem:[%s3203 + $0x1b0] sm:$0x1]
      %v3371 = vld [vmem:[%s3203 + $0x1b8] sm:$0x1]
      %v3372 = vld [vmem:[%s3203 + $0x1c0] sm:$0xfe]
      %v3373 = vld [vmem:[%s3203 + $0x1c8] sm:$0xfe]
      %v3374 = vld [vmem:[%s3203 + $0x1d0] sm:$0xfe]
      %v3375 = vld [vmem:[%s3203 + $0x1d8] sm:$0xfe]
      %v3376 = vld [vmem:[%s3203 + $0x1e0] sm:$0x1]
      %v3377 = vld [vmem:[%s3203 + $0x1e8] sm:$0x1]
      %v3378 = vld [vmem:[%s3203 + $0x1f0] sm:$0x1]
      %v3379 = vld [vmem:[%s3203 + $0x1f8] sm:$0x1]
      %v3380 = vlaneseq
      %v3381 = vshrl.u32 %v3380, 7
      %v3382 = vsub.s32 7, %v3381
      %v3383 = vrot.slane %v1498, %v3382
      %v3384 = vlaneseq
      %v3385 = vshrl.u32 %v3384, 7
      %v3386 = vsub.s32 7, %v3385
      %v3387 = vrot.slane %v1499, %v3386
      %v3388 = vlaneseq
      %v3389 = vshrl.u32 %v3388, 7
      %v3390 = vsub.s32 7, %v3389
      %v3391 = vrot.slane %v1500, %v3390
      %v3392 = vlaneseq
      %v3393 = vshrl.u32 %v3392, 7
      %v3394 = vsub.s32 7, %v3393
      %v3395 = vrot.slane %v1501, %v3394
      %v3396 = vmul.f32 %v3316, %v3383
      %v3397 = vmul.f32 %v3317, %v3387
      %v3398 = vmul.f32 %v3318, %v3391
      %v3399 = vmul.f32 %v3319, %v3395
      %v3400 = vmul.f32 %v3320, %v3383
      %v3401 = vmul.f32 %v3321, %v3387
      %v3402 = vmul.f32 %v3322, %v3391
      %v3403 = vmul.f32 %v3323, %v3395
      %v3404 = vmul.f32 %v3324, %v3383
      %v3405 = vmul.f32 %v3325, %v3387
      %v3406 = vmul.f32 %v3326, %v3391
      %v3407 = vmul.f32 %v3327, %v3395
      %v3408 = vmul.f32 %v3328, %v3383
      %v3409 = vmul.f32 %v3329, %v3387
      %v3410 = vmul.f32 %v3330, %v3391
      %v3411 = vmul.f32 %v3331, %v3395
      %v3412 = vmul.f32 %v3332, %v3383
      %v3413 = vmul.f32 %v3333, %v3387
      %v3414 = vmul.f32 %v3334, %v3391
      %v3415 = vmul.f32 %v3335, %v3395
      %v3416 = vmul.f32 %v3336, %v3383
      %v3417 = vmul.f32 %v3337, %v3387
      %v3418 = vmul.f32 %v3338, %v3391
      %v3419 = vmul.f32 %v3339, %v3395
      %v3420 = vmul.f32 %v3340, %v3383
      %v3421 = vmul.f32 %v3341, %v3387
      %v3422 = vmul.f32 %v3342, %v3391
      %v3423 = vmul.f32 %v3343, %v3395
      %v3424 = vmul.f32 %v3344, %v3383
      %v3425 = vmul.f32 %v3345, %v3387
      %v3426 = vmul.f32 %v3346, %v3391
      %v3427 = vmul.f32 %v3347, %v3395
      %v3428 = vmul.f32 %v3348, %v3383
      %v3429 = vmul.f32 %v3349, %v3387
      %v3430 = vmul.f32 %v3350, %v3391
      %v3431 = vmul.f32 %v3351, %v3395
      %v3432 = vmul.f32 %v3352, %v3383
      %v3433 = vmul.f32 %v3353, %v3387
      %v3434 = vmul.f32 %v3354, %v3391
      %v3435 = vmul.f32 %v3355, %v3395
      %v3436 = vmul.f32 %v3356, %v3383
      %v3437 = vmul.f32 %v3357, %v3387
      %v3438 = vmul.f32 %v3358, %v3391
      %v3439 = vmul.f32 %v3359, %v3395
      %v3440 = vmul.f32 %v3360, %v3383
      %v3441 = vmul.f32 %v3361, %v3387
      %v3442 = vmul.f32 %v3362, %v3391
      %v3443 = vmul.f32 %v3363, %v3395
      %v3444 = vmul.f32 %v3364, %v3383
      %v3445 = vmul.f32 %v3365, %v3387
      %v3446 = vmul.f32 %v3366, %v3391
      %v3447 = vmul.f32 %v3367, %v3395
      %v3448 = vmul.f32 %v3368, %v3383
      %v3449 = vmul.f32 %v3369, %v3387
      %v3450 = vmul.f32 %v3370, %v3391
      %v3451 = vmul.f32 %v3371, %v3395
      %v3452 = vmul.f32 %v3372, %v3383
      %v3453 = vmul.f32 %v3373, %v3387
      %v3454 = vmul.f32 %v3374, %v3391
      %v3455 = vmul.f32 %v3375, %v3395
      %v3456 = vmul.f32 %v3376, %v3383
      %v3457 = vmul.f32 %v3377, %v3387
      %v3458 = vmul.f32 %v3378, %v3391
      %v3459 = vmul.f32 %v3379, %v3395
      %v3524 = vrot.slane %v3396, 1
      %v3525 = vrot.slane %v3400, 1
      %v3526 = vsel %vm1826, %v3524, %v3525
      %v3527 = vrot.slane %v3397, 1
      %v3528 = vrot.slane %v3401, 1
      %v3529 = vsel %vm1826, %v3527, %v3528
      %v3530 = vrot.slane %v3398, 1
      %v3531 = vrot.slane %v3402, 1
      %v3532 = vsel %vm1826, %v3530, %v3531
      %v3533 = vrot.slane %v3399, 1
      %v3534 = vrot.slane %v3403, 1
      %v3535 = vsel %vm1826, %v3533, %v3534
      %v3536 = vrot.slane %v3404, 1
      %v3537 = vrot.slane %v3408, 1
      %v3538 = vsel %vm1826, %v3536, %v3537
      %v3539 = vrot.slane %v3405, 1
      %v3540 = vrot.slane %v3409, 1
      %v3541 = vsel %vm1826, %v3539, %v3540
      %v3542 = vrot.slane %v3406, 1
      %v3543 = vrot.slane %v3410, 1
      %v3544 = vsel %vm1826, %v3542, %v3543
      %v3545 = vrot.slane %v3407, 1
      %v3546 = vrot.slane %v3411, 1
      %v3547 = vsel %vm1826, %v3545, %v3546
      %v3548 = vrot.slane %v3412, 1
      %v3549 = vrot.slane %v3416, 1
      %v3550 = vsel %vm1826, %v3548, %v3549
      %v3551 = vrot.slane %v3413, 1
      %v3552 = vrot.slane %v3417, 1
      %v3553 = vsel %vm1826, %v3551, %v3552
      %v3554 = vrot.slane %v3414, 1
      %v3555 = vrot.slane %v3418, 1
      %v3556 = vsel %vm1826, %v3554, %v3555
      %v3557 = vrot.slane %v3415, 1
      %v3558 = vrot.slane %v3419, 1
      %v3559 = vsel %vm1826, %v3557, %v3558
      %v3560 = vrot.slane %v3420, 1
      %v3561 = vrot.slane %v3424, 1
      %v3562 = vsel %vm1826, %v3560, %v3561
      %v3563 = vrot.slane %v3421, 1
      %v3564 = vrot.slane %v3425, 1
      %v3565 = vsel %vm1826, %v3563, %v3564
      %v3566 = vrot.slane %v3422, 1
      %v3567 = vrot.slane %v3426, 1
      %v3568 = vsel %vm1826, %v3566, %v3567
      %v3569 = vrot.slane %v3423, 1
      %v3570 = vrot.slane %v3427, 1
      %v3571 = vsel %vm1826, %v3569, %v3570
      %v3572 = vrot.slane %v3428, 1
      %v3573 = vrot.slane %v3432, 1
      %v3574 = vsel %vm1826, %v3572, %v3573
      %v3575 = vrot.slane %v3429, 1
      %v3576 = vrot.slane %v3433, 1
      %v3577 = vsel %vm1826, %v3575, %v3576
      %v3578 = vrot.slane %v3430, 1
      %v3579 = vrot.slane %v3434, 1
      %v3580 = vsel %vm1826, %v3578, %v3579
      %v3581 = vrot.slane %v3431, 1
      %v3582 = vrot.slane %v3435, 1
      %v3583 = vsel %vm1826, %v3581, %v3582
      %v3584 = vrot.slane %v3436, 1
      %v3585 = vrot.slane %v3440, 1
      %v3586 = vsel %vm1826, %v3584, %v3585
      %v3587 = vrot.slane %v3437, 1
      %v3588 = vrot.slane %v3441, 1
      %v3589 = vsel %vm1826, %v3587, %v3588
      %v3590 = vrot.slane %v3438, 1
      %v3591 = vrot.slane %v3442, 1
      %v3592 = vsel %vm1826, %v3590, %v3591
      %v3593 = vrot.slane %v3439, 1
      %v3594 = vrot.slane %v3443, 1
      %v3595 = vsel %vm1826, %v3593, %v3594
      %v3596 = vrot.slane %v3444, 1
      %v3597 = vrot.slane %v3448, 1
      %v3598 = vsel %vm1826, %v3596, %v3597
      %v3599 = vrot.slane %v3445, 1
      %v3600 = vrot.slane %v3449, 1
      %v3601 = vsel %vm1826, %v3599, %v3600
      %v3602 = vrot.slane %v3446, 1
      %v3603 = vrot.slane %v3450, 1
      %v3604 = vsel %vm1826, %v3602, %v3603
      %v3605 = vrot.slane %v3447, 1
      %v3606 = vrot.slane %v3451, 1
      %v3607 = vsel %vm1826, %v3605, %v3606
      %v3608 = vrot.slane %v3452, 1
      %v3609 = vrot.slane %v3456, 1
      %v3610 = vsel %vm1826, %v3608, %v3609
      %v3611 = vrot.slane %v3453, 1
      %v3612 = vrot.slane %v3457, 1
      %v3613 = vsel %vm1826, %v3611, %v3612
      %v3614 = vrot.slane %v3454, 1
      %v3615 = vrot.slane %v3458, 1
      %v3616 = vsel %vm1826, %v3614, %v3615
      %v3617 = vrot.slane %v3455, 1
      %v3618 = vrot.slane %v3459, 1
      %v3619 = vsel %vm1826, %v3617, %v3618
      %v3652 = vadd.f32 %v3284, %v3526
      %v3653 = vadd.f32 %v3285, %v3529
      %v3654 = vadd.f32 %v3286, %v3532
      %v3655 = vadd.f32 %v3287, %v3535
      %v3656 = vadd.f32 %v3288, %v3538
      %v3657 = vadd.f32 %v3289, %v3541
      %v3658 = vadd.f32 %v3290, %v3544
      %v3659 = vadd.f32 %v3291, %v3547
      %v3660 = vadd.f32 %v3292, %v3550
      %v3661 = vadd.f32 %v3293, %v3553
      %v3662 = vadd.f32 %v3294, %v3556
      %v3663 = vadd.f32 %v3295, %v3559
      %v3664 = vadd.f32 %v3296, %v3562
      %v3665 = vadd.f32 %v3297, %v3565
      %v3666 = vadd.f32 %v3298, %v3568
      %v3667 = vadd.f32 %v3299, %v3571
      %v3668 = vadd.f32 %v3300, %v3574
      %v3669 = vadd.f32 %v3301, %v3577
      %v3670 = vadd.f32 %v3302, %v3580
      %v3671 = vadd.f32 %v3303, %v3583
      %v3672 = vadd.f32 %v3304, %v3586
      %v3673 = vadd.f32 %v3305, %v3589
      %v3674 = vadd.f32 %v3306, %v3592
      %v3675 = vadd.f32 %v3307, %v3595
      %v3676 = vadd.f32 %v3308, %v3598
      %v3677 = vadd.f32 %v3309, %v3601
      %v3678 = vadd.f32 %v3310, %v3604
      %v3679 = vadd.f32 %v3311, %v3607
      %v3680 = vadd.f32 %v3312, %v3610
      %v3681 = vadd.f32 %v3313, %v3613
      %v3682 = vadd.f32 %v3314, %v3616
      %v3683 = vadd.f32 %v3315, %v3619
      %v3684 = vld [vmem:[%s3203] sm:$0xfc]
      %v3685 = vld [vmem:[%s3203 + $0x8] sm:$0xfc]
      %v3686 = vld [vmem:[%s3203 + $0x10] sm:$0xfc]
      %v3687 = vld [vmem:[%s3203 + $0x18] sm:$0xfc]
      %v3688 = vld [vmem:[%s3203 + $0x20] sm:$0x3]
      %v3689 = vld [vmem:[%s3203 + $0x28] sm:$0x3]
      %v3690 = vld [vmem:[%s3203 + $0x30] sm:$0x3]
      %v3691 = vld [vmem:[%s3203 + $0x38] sm:$0x3]
      %v3692 = vld [vmem:[%s3203 + $0x40] sm:$0xfc]
      %v3693 = vld [vmem:[%s3203 + $0x48] sm:$0xfc]
      %v3694 = vld [vmem:[%s3203 + $0x50] sm:$0xfc]
      %v3695 = vld [vmem:[%s3203 + $0x58] sm:$0xfc]
      %v3696 = vld [vmem:[%s3203 + $0x60] sm:$0x3]
      %v3697 = vld [vmem:[%s3203 + $0x68] sm:$0x3]
      %v3698 = vld [vmem:[%s3203 + $0x70] sm:$0x3]
      %v3699 = vld [vmem:[%s3203 + $0x78] sm:$0x3]
      %v3700 = vld [vmem:[%s3203 + $0x80] sm:$0xfc]
      %v3701 = vld [vmem:[%s3203 + $0x88] sm:$0xfc]
      %v3702 = vld [vmem:[%s3203 + $0x90] sm:$0xfc]
      %v3703 = vld [vmem:[%s3203 + $0x98] sm:$0xfc]
      %v3704 = vld [vmem:[%s3203 + $0xa0] sm:$0x3]
      %v3705 = vld [vmem:[%s3203 + $0xa8] sm:$0x3]
      %v3706 = vld [vmem:[%s3203 + $0xb0] sm:$0x3]
      %v3707 = vld [vmem:[%s3203 + $0xb8] sm:$0x3]
      %v3708 = vld [vmem:[%s3203 + $0xc0] sm:$0xfc]
      %v3709 = vld [vmem:[%s3203 + $0xc8] sm:$0xfc]
      %v3710 = vld [vmem:[%s3203 + $0xd0] sm:$0xfc]
      %v3711 = vld [vmem:[%s3203 + $0xd8] sm:$0xfc]
      %v3712 = vld [vmem:[%s3203 + $0xe0] sm:$0x3]
      %v3713 = vld [vmem:[%s3203 + $0xe8] sm:$0x3]
      %v3714 = vld [vmem:[%s3203 + $0xf0] sm:$0x3]
      %v3715 = vld [vmem:[%s3203 + $0xf8] sm:$0x3]
      %v3716 = vld [vmem:[%s3203 + $0x100] sm:$0xfc]
      %v3717 = vld [vmem:[%s3203 + $0x108] sm:$0xfc]
      %v3718 = vld [vmem:[%s3203 + $0x110] sm:$0xfc]
      %v3719 = vld [vmem:[%s3203 + $0x118] sm:$0xfc]
      %v3720 = vld [vmem:[%s3203 + $0x120] sm:$0x3]
      %v3721 = vld [vmem:[%s3203 + $0x128] sm:$0x3]
      %v3722 = vld [vmem:[%s3203 + $0x130] sm:$0x3]
      %v3723 = vld [vmem:[%s3203 + $0x138] sm:$0x3]
      %v3724 = vld [vmem:[%s3203 + $0x140] sm:$0xfc]
      %v3725 = vld [vmem:[%s3203 + $0x148] sm:$0xfc]
      %v3726 = vld [vmem:[%s3203 + $0x150] sm:$0xfc]
      %v3727 = vld [vmem:[%s3203 + $0x158] sm:$0xfc]
      %v3728 = vld [vmem:[%s3203 + $0x160] sm:$0x3]
      %v3729 = vld [vmem:[%s3203 + $0x168] sm:$0x3]
      %v3730 = vld [vmem:[%s3203 + $0x170] sm:$0x3]
      %v3731 = vld [vmem:[%s3203 + $0x178] sm:$0x3]
      %v3732 = vld [vmem:[%s3203 + $0x180] sm:$0xfc]
      %v3733 = vld [vmem:[%s3203 + $0x188] sm:$0xfc]
      %v3734 = vld [vmem:[%s3203 + $0x190] sm:$0xfc]
      %v3735 = vld [vmem:[%s3203 + $0x198] sm:$0xfc]
      %v3736 = vld [vmem:[%s3203 + $0x1a0] sm:$0x3]
      %v3737 = vld [vmem:[%s3203 + $0x1a8] sm:$0x3]
      %v3738 = vld [vmem:[%s3203 + $0x1b0] sm:$0x3]
      %v3739 = vld [vmem:[%s3203 + $0x1b8] sm:$0x3]
      %v3740 = vld [vmem:[%s3203 + $0x1c0] sm:$0xfc]
      %v3741 = vld [vmem:[%s3203 + $0x1c8] sm:$0xfc]
      %v3742 = vld [vmem:[%s3203 + $0x1d0] sm:$0xfc]
      %v3743 = vld [vmem:[%s3203 + $0x1d8] sm:$0xfc]
      %v3744 = vld [vmem:[%s3203 + $0x1e0] sm:$0x3]
      %v3745 = vld [vmem:[%s3203 + $0x1e8] sm:$0x3]
      %v3746 = vld [vmem:[%s3203 + $0x1f0] sm:$0x3]
      %v3747 = vld [vmem:[%s3203 + $0x1f8] sm:$0x3]
      %v3748 = vlaneseq
      %v3749 = vshrl.u32 %v3748, 7
      %v3750 = vsub.s32 0, %v3749
      %v3751 = vrot.slane %v1502, %v3750
      %v3752 = vlaneseq
      %v3753 = vshrl.u32 %v3752, 7
      %v3754 = vsub.s32 0, %v3753
      %v3755 = vrot.slane %v1503, %v3754
      %v3756 = vlaneseq
      %v3757 = vshrl.u32 %v3756, 7
      %v3758 = vsub.s32 0, %v3757
      %v3759 = vrot.slane %v1504, %v3758
      %v3760 = vlaneseq
      %v3761 = vshrl.u32 %v3760, 7
      %v3762 = vsub.s32 0, %v3761
      %v3763 = vrot.slane %v1505, %v3762
      %v3764 = vmul.f32 %v3684, %v3751
      %v3765 = vmul.f32 %v3685, %v3755
      %v3766 = vmul.f32 %v3686, %v3759
      %v3767 = vmul.f32 %v3687, %v3763
      %v3768 = vmul.f32 %v3688, %v3751
      %v3769 = vmul.f32 %v3689, %v3755
      %v3770 = vmul.f32 %v3690, %v3759
      %v3771 = vmul.f32 %v3691, %v3763
      %v3772 = vmul.f32 %v3692, %v3751
      %v3773 = vmul.f32 %v3693, %v3755
      %v3774 = vmul.f32 %v3694, %v3759
      %v3775 = vmul.f32 %v3695, %v3763
      %v3776 = vmul.f32 %v3696, %v3751
      %v3777 = vmul.f32 %v3697, %v3755
      %v3778 = vmul.f32 %v3698, %v3759
      %v3779 = vmul.f32 %v3699, %v3763
      %v3780 = vmul.f32 %v3700, %v3751
      %v3781 = vmul.f32 %v3701, %v3755
      %v3782 = vmul.f32 %v3702, %v3759
      %v3783 = vmul.f32 %v3703, %v3763
      %v3784 = vmul.f32 %v3704, %v3751
      %v3785 = vmul.f32 %v3705, %v3755
      %v3786 = vmul.f32 %v3706, %v3759
      %v3787 = vmul.f32 %v3707, %v3763
      %v3788 = vmul.f32 %v3708, %v3751
      %v3789 = vmul.f32 %v3709, %v3755
      %v3790 = vmul.f32 %v3710, %v3759
      %v3791 = vmul.f32 %v3711, %v3763
      %v3792 = vmul.f32 %v3712, %v3751
      %v3793 = vmul.f32 %v3713, %v3755
      %v3794 = vmul.f32 %v3714, %v3759
      %v3795 = vmul.f32 %v3715, %v3763
      %v3796 = vmul.f32 %v3716, %v3751
      %v3797 = vmul.f32 %v3717, %v3755
      %v3798 = vmul.f32 %v3718, %v3759
      %v3799 = vmul.f32 %v3719, %v3763
      %v3800 = vmul.f32 %v3720, %v3751
      %v3801 = vmul.f32 %v3721, %v3755
      %v3802 = vmul.f32 %v3722, %v3759
      %v3803 = vmul.f32 %v3723, %v3763
      %v3804 = vmul.f32 %v3724, %v3751
      %v3805 = vmul.f32 %v3725, %v3755
      %v3806 = vmul.f32 %v3726, %v3759
      %v3807 = vmul.f32 %v3727, %v3763
      %v3808 = vmul.f32 %v3728, %v3751
      %v3809 = vmul.f32 %v3729, %v3755
      %v3810 = vmul.f32 %v3730, %v3759
      %v3811 = vmul.f32 %v3731, %v3763
      %v3812 = vmul.f32 %v3732, %v3751
      %v3813 = vmul.f32 %v3733, %v3755
      %v3814 = vmul.f32 %v3734, %v3759
      %v3815 = vmul.f32 %v3735, %v3763
      %v3816 = vmul.f32 %v3736, %v3751
      %v3817 = vmul.f32 %v3737, %v3755
      %v3818 = vmul.f32 %v3738, %v3759
      %v3819 = vmul.f32 %v3739, %v3763
      %v3820 = vmul.f32 %v3740, %v3751
      %v3821 = vmul.f32 %v3741, %v3755
      %v3822 = vmul.f32 %v3742, %v3759
      %v3823 = vmul.f32 %v3743, %v3763
      %v3824 = vmul.f32 %v3744, %v3751
      %v3825 = vmul.f32 %v3745, %v3755
      %v3826 = vmul.f32 %v3746, %v3759
      %v3827 = vmul.f32 %v3747, %v3763
      %v3892 = vrot.slane %v3764, 2
      %v3893 = vrot.slane %v3768, 2
      %v3894 = vsel %vm542, %v3892, %v3893
      %v3895 = vrot.slane %v3765, 2
      %v3896 = vrot.slane %v3769, 2
      %v3897 = vsel %vm542, %v3895, %v3896
      %v3898 = vrot.slane %v3766, 2
      %v3899 = vrot.slane %v3770, 2
      %v3900 = vsel %vm542, %v3898, %v3899
      %v3901 = vrot.slane %v3767, 2
      %v3902 = vrot.slane %v3771, 2
      %v3903 = vsel %vm542, %v3901, %v3902
      %v3904 = vrot.slane %v3772, 2
      %v3905 = vrot.slane %v3776, 2
      %v3906 = vsel %vm542, %v3904, %v3905
      %v3907 = vrot.slane %v3773, 2
      %v3908 = vrot.slane %v3777, 2
      %v3909 = vsel %vm542, %v3907, %v3908
      %v3910 = vrot.slane %v3774, 2
      %v3911 = vrot.slane %v3778, 2
      %v3912 = vsel %vm542, %v3910, %v3911
      %v3913 = vrot.slane %v3775, 2
      %v3914 = vrot.slane %v3779, 2
      %v3915 = vsel %vm542, %v3913, %v3914
      %v3916 = vrot.slane %v3780, 2
      %v3917 = vrot.slane %v3784, 2
      %v3918 = vsel %vm542, %v3916, %v3917
      %v3919 = vrot.slane %v3781, 2
      %v3920 = vrot.slane %v3785, 2
      %v3921 = vsel %vm542, %v3919, %v3920
      %v3922 = vrot.slane %v3782, 2
      %v3923 = vrot.slane %v3786, 2
      %v3924 = vsel %vm542, %v3922, %v3923
      %v3925 = vrot.slane %v3783, 2
      %v3926 = vrot.slane %v3787, 2
      %v3927 = vsel %vm542, %v3925, %v3926
      %v3928 = vrot.slane %v3788, 2
      %v3929 = vrot.slane %v3792, 2
      %v3930 = vsel %vm542, %v3928, %v3929
      %v3931 = vrot.slane %v3789, 2
      %v3932 = vrot.slane %v3793, 2
      %v3933 = vsel %vm542, %v3931, %v3932
      %v3934 = vrot.slane %v3790, 2
      %v3935 = vrot.slane %v3794, 2
      %v3936 = vsel %vm542, %v3934, %v3935
      %v3937 = vrot.slane %v3791, 2
      %v3938 = vrot.slane %v3795, 2
      %v3939 = vsel %vm542, %v3937, %v3938
      %v3940 = vrot.slane %v3796, 2
      %v3941 = vrot.slane %v3800, 2
      %v3942 = vsel %vm542, %v3940, %v3941
      %v3943 = vrot.slane %v3797, 2
      %v3944 = vrot.slane %v3801, 2
      %v3945 = vsel %vm542, %v3943, %v3944
      %v3946 = vrot.slane %v3798, 2
      %v3947 = vrot.slane %v3802, 2
      %v3948 = vsel %vm542, %v3946, %v3947
      %v3949 = vrot.slane %v3799, 2
      %v3950 = vrot.slane %v3803, 2
      %v3951 = vsel %vm542, %v3949, %v3950
      %v3952 = vrot.slane %v3804, 2
      %v3953 = vrot.slane %v3808, 2
      %v3954 = vsel %vm542, %v3952, %v3953
      %v3955 = vrot.slane %v3805, 2
      %v3956 = vrot.slane %v3809, 2
      %v3957 = vsel %vm542, %v3955, %v3956
      %v3958 = vrot.slane %v3806, 2
      %v3959 = vrot.slane %v3810, 2
      %v3960 = vsel %vm542, %v3958, %v3959
      %v3961 = vrot.slane %v3807, 2
      %v3962 = vrot.slane %v3811, 2
      %v3963 = vsel %vm542, %v3961, %v3962
      %v3964 = vrot.slane %v3812, 2
      %v3965 = vrot.slane %v3816, 2
      %v3966 = vsel %vm542, %v3964, %v3965
      %v3967 = vrot.slane %v3813, 2
      %v3968 = vrot.slane %v3817, 2
      %v3969 = vsel %vm542, %v3967, %v3968
      %v3970 = vrot.slane %v3814, 2
      %v3971 = vrot.slane %v3818, 2
      %v3972 = vsel %vm542, %v3970, %v3971
      %v3973 = vrot.slane %v3815, 2
      %v3974 = vrot.slane %v3819, 2
      %v3975 = vsel %vm542, %v3973, %v3974
      %v3976 = vrot.slane %v3820, 2
      %v3977 = vrot.slane %v3824, 2
      %v3978 = vsel %vm542, %v3976, %v3977
      %v3979 = vrot.slane %v3821, 2
      %v3980 = vrot.slane %v3825, 2
      %v3981 = vsel %vm542, %v3979, %v3980
      %v3982 = vrot.slane %v3822, 2
      %v3983 = vrot.slane %v3826, 2
      %v3984 = vsel %vm542, %v3982, %v3983
      %v3985 = vrot.slane %v3823, 2
      %v3986 = vrot.slane %v3827, 2
      %v3987 = vsel %vm542, %v3985, %v3986
      %v4020 = vadd.f32 %v3652, %v3894
      %v4021 = vadd.f32 %v3653, %v3897
      %v4022 = vadd.f32 %v3654, %v3900
      %v4023 = vadd.f32 %v3655, %v3903
      %v4024 = vadd.f32 %v3656, %v3906
      %v4025 = vadd.f32 %v3657, %v3909
      %v4026 = vadd.f32 %v3658, %v3912
      %v4027 = vadd.f32 %v3659, %v3915
      %v4028 = vadd.f32 %v3660, %v3918
      %v4029 = vadd.f32 %v3661, %v3921
      %v4030 = vadd.f32 %v3662, %v3924
      %v4031 = vadd.f32 %v3663, %v3927
      %v4032 = vadd.f32 %v3664, %v3930
      %v4033 = vadd.f32 %v3665, %v3933
      %v4034 = vadd.f32 %v3666, %v3936
      %v4035 = vadd.f32 %v3667, %v3939
      %v4036 = vadd.f32 %v3668, %v3942
      %v4037 = vadd.f32 %v3669, %v3945
      %v4038 = vadd.f32 %v3670, %v3948
      %v4039 = vadd.f32 %v3671, %v3951
      %v4040 = vadd.f32 %v3672, %v3954
      %v4041 = vadd.f32 %v3673, %v3957
      %v4042 = vadd.f32 %v3674, %v3960
      %v4043 = vadd.f32 %v3675, %v3963
      %v4044 = vadd.f32 %v3676, %v3966
      %v4045 = vadd.f32 %v3677, %v3969
      %v4046 = vadd.f32 %v3678, %v3972
      %v4047 = vadd.f32 %v3679, %v3975
      %v4048 = vadd.f32 %v3680, %v3978
      %v4049 = vadd.f32 %v3681, %v3981
      %v4050 = vadd.f32 %v3682, %v3984
      %v4051 = vadd.f32 %v3683, %v3987
      %v4052 = vld [vmem:[%s6] sm:$0xf]
      %v4054 = vlaneseq
      %v4055 = vshrl.u32 %v4054, 7
      %v4056 = vsub.s32 0, %v4055
      %v4057 = vrot.slane %v4052, %v4056
      %v4058 = vlaneseq
      %v4059 = vshrl.u32 %v4058, 7
      %v4060 = vsub.s32 1, %v4059
      %v4061 = vrot.slane %v4052, %v4060
      %v4062 = vlaneseq
      %v4063 = vshrl.u32 %v4062, 7
      %v4064 = vsub.s32 2, %v4063
      %v4065 = vrot.slane %v4052, %v4064
      %v4066 = vlaneseq
      %v4067 = vshrl.u32 %v4066, 7
      %v4068 = vsub.s32 3, %v4067
      %v4069 = vrot.slane %v4052, %v4068
      %v4074 = vadd.f32 %v4020, %v4057
      %v4075 = vadd.f32 %v4021, %v4061
      %v4076 = vadd.f32 %v4022, %v4065
      %v4077 = vadd.f32 %v4023, %v4069
      %v4078 = vadd.f32 %v4024, %v4057
      %v4079 = vadd.f32 %v4025, %v4061
      %v4080 = vadd.f32 %v4026, %v4065
      %v4081 = vadd.f32 %v4027, %v4069
      %v4082 = vadd.f32 %v4028, %v4057
      %v4083 = vadd.f32 %v4029, %v4061
      %v4084 = vadd.f32 %v4030, %v4065
      %v4085 = vadd.f32 %v4031, %v4069
      %v4086 = vadd.f32 %v4032, %v4057
      %v4087 = vadd.f32 %v4033, %v4061
      %v4088 = vadd.f32 %v4034, %v4065
      %v4089 = vadd.f32 %v4035, %v4069
      %v4090 = vadd.f32 %v4036, %v4057
      %v4091 = vadd.f32 %v4037, %v4061
      %v4092 = vadd.f32 %v4038, %v4065
      %v4093 = vadd.f32 %v4039, %v4069
      %v4094 = vadd.f32 %v4040, %v4057
      %v4095 = vadd.f32 %v4041, %v4061
      %v4096 = vadd.f32 %v4042, %v4065
      %v4097 = vadd.f32 %v4043, %v4069
      %v4098 = vadd.f32 %v4044, %v4057
      %v4099 = vadd.f32 %v4045, %v4061
      %v4100 = vadd.f32 %v4046, %v4065
      %v4101 = vadd.f32 %v4047, %v4069
      %v4102 = vadd.f32 %v4048, %v4057
      %v4103 = vadd.f32 %v4049, %v4061
      %v4104 = vadd.f32 %v4050, %v4065
      %v4105 = vadd.f32 %v4051, %v4069
      %v4106 = vxor.u32 %v4074, 2147483648
      %v4107 = vxor.u32 %v4075, 2147483648
      %v4108 = vxor.u32 %v4076, 2147483648
      %v4109 = vxor.u32 %v4077, 2147483648
      %v4110 = vxor.u32 %v4078, 2147483648
      %v4111 = vxor.u32 %v4079, 2147483648
      %v4112 = vxor.u32 %v4080, 2147483648
      %v4113 = vxor.u32 %v4081, 2147483648
      %v4114 = vxor.u32 %v4082, 2147483648
      %v4115 = vxor.u32 %v4083, 2147483648
      %v4116 = vxor.u32 %v4084, 2147483648
      %v4117 = vxor.u32 %v4085, 2147483648
      %v4118 = vxor.u32 %v4086, 2147483648
      %v4119 = vxor.u32 %v4087, 2147483648
      %v4120 = vxor.u32 %v4088, 2147483648
      %v4121 = vxor.u32 %v4089, 2147483648
      %v4122 = vxor.u32 %v4090, 2147483648
      %v4123 = vxor.u32 %v4091, 2147483648
      %v4124 = vxor.u32 %v4092, 2147483648
      %v4125 = vxor.u32 %v4093, 2147483648
      %v4126 = vxor.u32 %v4094, 2147483648
      %v4127 = vxor.u32 %v4095, 2147483648
      %v4128 = vxor.u32 %v4096, 2147483648
      %v4129 = vxor.u32 %v4097, 2147483648
      %v4130 = vxor.u32 %v4098, 2147483648
      %v4131 = vxor.u32 %v4099, 2147483648
      %v4132 = vxor.u32 %v4100, 2147483648
      %v4133 = vxor.u32 %v4101, 2147483648
      %v4134 = vxor.u32 %v4102, 2147483648
      %v4135 = vxor.u32 %v4103, 2147483648
      %v4136 = vxor.u32 %v4104, 2147483648
      %v4137 = vxor.u32 %v4105, 2147483648
      %v4138 = vmul.f32 %v4106, 1.442695
      %v4139 = vpow.pop %v4138
      %v4140 = vmul.f32 %v4107, 1.442695
      %v4141 = vpow.pop %v4140
      %v4142 = vmul.f32 %v4108, 1.442695
      %v4143 = vpow.pop %v4142
      %v4144 = vmul.f32 %v4109, 1.442695
      %v4145 = vpow.pop %v4144
      %v4146 = vmul.f32 %v4110, 1.442695
      %v4147 = vpow.pop %v4146
      %v4148 = vmul.f32 %v4111, 1.442695
      %v4149 = vpow.pop %v4148
      %v4150 = vmul.f32 %v4112, 1.442695
      %v4151 = vpow.pop %v4150
      %v4152 = vmul.f32 %v4113, 1.442695
      %v4153 = vpow.pop %v4152
      %v4154 = vmul.f32 %v4114, 1.442695
      %v4155 = vpow.pop %v4154
      %v4156 = vmul.f32 %v4115, 1.442695
      %v4157 = vpow.pop %v4156
      %v4158 = vmul.f32 %v4116, 1.442695
      %v4159 = vpow.pop %v4158
      %v4160 = vmul.f32 %v4117, 1.442695
      %v4161 = vpow.pop %v4160
      %v4162 = vmul.f32 %v4118, 1.442695
      %v4163 = vpow.pop %v4162
      %v4164 = vmul.f32 %v4119, 1.442695
      %v4165 = vpow.pop %v4164
      %v4166 = vmul.f32 %v4120, 1.442695
      %v4167 = vpow.pop %v4166
      %v4168 = vmul.f32 %v4121, 1.442695
      %v4169 = vpow.pop %v4168
      %v4170 = vmul.f32 %v4122, 1.442695
      %v4171 = vpow.pop %v4170
      %v4172 = vmul.f32 %v4123, 1.442695
      %v4173 = vpow.pop %v4172
      %v4174 = vmul.f32 %v4124, 1.442695
      %v4175 = vpow.pop %v4174
      %v4176 = vmul.f32 %v4125, 1.442695
      %v4177 = vpow.pop %v4176
      %v4178 = vmul.f32 %v4126, 1.442695
      %v4179 = vpow.pop %v4178
      %v4180 = vmul.f32 %v4127, 1.442695
      %v4181 = vpow.pop %v4180
      %v4182 = vmul.f32 %v4128, 1.442695
      %v4183 = vpow.pop %v4182
      %v4184 = vmul.f32 %v4129, 1.442695
      %v4185 = vpow.pop %v4184
      %v4186 = vmul.f32 %v4130, 1.442695
      %v4187 = vpow.pop %v4186
      %v4188 = vmul.f32 %v4131, 1.442695
      %v4189 = vpow.pop %v4188
      %v4190 = vmul.f32 %v4132, 1.442695
      %v4191 = vpow.pop %v4190
      %v4192 = vmul.f32 %v4133, 1.442695
      %v4193 = vpow.pop %v4192
      %v4194 = vmul.f32 %v4134, 1.442695
      %v4195 = vpow.pop %v4194
      %v4196 = vmul.f32 %v4135, 1.442695
      %v4197 = vpow.pop %v4196
      %v4198 = vmul.f32 %v4136, 1.442695
      %v4199 = vpow.pop %v4198
      %v4200 = vmul.f32 %v4137, 1.442695
      %v4201 = vpow.pop %v4200
      %v4202 = vadd.f32 %v4139, 1.0
      %v4203 = vadd.f32 %v4141, 1.0
      %v4204 = vadd.f32 %v4143, 1.0
      %v4205 = vadd.f32 %v4145, 1.0
      %v4206 = vadd.f32 %v4147, 1.0
      %v4207 = vadd.f32 %v4149, 1.0
      %v4208 = vadd.f32 %v4151, 1.0
      %v4209 = vadd.f32 %v4153, 1.0
      %v4210 = vadd.f32 %v4155, 1.0
      %v4211 = vadd.f32 %v4157, 1.0
      %v4212 = vadd.f32 %v4159, 1.0
      %v4213 = vadd.f32 %v4161, 1.0
      %v4214 = vadd.f32 %v4163, 1.0
      %v4215 = vadd.f32 %v4165, 1.0
      %v4216 = vadd.f32 %v4167, 1.0
      %v4217 = vadd.f32 %v4169, 1.0
      %v4218 = vadd.f32 %v4171, 1.0
      %v4219 = vadd.f32 %v4173, 1.0
      %v4220 = vadd.f32 %v4175, 1.0
      %v4221 = vadd.f32 %v4177, 1.0
      %v4222 = vadd.f32 %v4179, 1.0
      %v4223 = vadd.f32 %v4181, 1.0
      %v4224 = vadd.f32 %v4183, 1.0
      %v4225 = vadd.f32 %v4185, 1.0
      %v4226 = vadd.f32 %v4187, 1.0
      %v4227 = vadd.f32 %v4189, 1.0
      %v4228 = vadd.f32 %v4191, 1.0
      %v4229 = vadd.f32 %v4193, 1.0
      %v4230 = vadd.f32 %v4195, 1.0
      %v4231 = vadd.f32 %v4197, 1.0
      %v4232 = vadd.f32 %v4199, 1.0
      %v4233 = vadd.f32 %v4201, 1.0
      %v4234 = vrcp.pop %v4202
      %v4235 = vmul.f32 1.0, %v4234
      %v4236 = vrcp.pop %v4203
      %v4237 = vmul.f32 1.0, %v4236
      %v4238 = vrcp.pop %v4204
      %v4239 = vmul.f32 1.0, %v4238
      %v4240 = vrcp.pop %v4205
      %v4241 = vmul.f32 1.0, %v4240
      %v4242 = vrcp.pop %v4206
      %v4243 = vmul.f32 1.0, %v4242
      %v4244 = vrcp.pop %v4207
      %v4245 = vmul.f32 1.0, %v4244
      %v4246 = vrcp.pop %v4208
      %v4247 = vmul.f32 1.0, %v4246
      %v4248 = vrcp.pop %v4209
      %v4249 = vmul.f32 1.0, %v4248
      %v4250 = vrcp.pop %v4210
      %v4251 = vmul.f32 1.0, %v4250
      %v4252 = vrcp.pop %v4211
      %v4253 = vmul.f32 1.0, %v4252
      %v4254 = vrcp.pop %v4212
      %v4255 = vmul.f32 1.0, %v4254
      %v4256 = vrcp.pop %v4213
      %v4257 = vmul.f32 1.0, %v4256
      %v4258 = vrcp.pop %v4214
      %v4259 = vmul.f32 1.0, %v4258
      %v4260 = vrcp.pop %v4215
      %v4261 = vmul.f32 1.0, %v4260
      %v4262 = vrcp.pop %v4216
      %v4263 = vmul.f32 1.0, %v4262
      %v4264 = vrcp.pop %v4217
      %v4265 = vmul.f32 1.0, %v4264
      %v4266 = vrcp.pop %v4218
      %v4267 = vmul.f32 1.0, %v4266
      %v4268 = vrcp.pop %v4219
      %v4269 = vmul.f32 1.0, %v4268
      %v4270 = vrcp.pop %v4220
      %v4271 = vmul.f32 1.0, %v4270
      %v4272 = vrcp.pop %v4221
      %v4273 = vmul.f32 1.0, %v4272
      %v4274 = vrcp.pop %v4222
      %v4275 = vmul.f32 1.0, %v4274
      %v4276 = vrcp.pop %v4223
      %v4277 = vmul.f32 1.0, %v4276
      %v4278 = vrcp.pop %v4224
      %v4279 = vmul.f32 1.0, %v4278
      %v4280 = vrcp.pop %v4225
      %v4281 = vmul.f32 1.0, %v4280
      %v4282 = vrcp.pop %v4226
      %v4283 = vmul.f32 1.0, %v4282
      %v4284 = vrcp.pop %v4227
      %v4285 = vmul.f32 1.0, %v4284
      %v4286 = vrcp.pop %v4228
      %v4287 = vmul.f32 1.0, %v4286
      %v4288 = vrcp.pop %v4229
      %v4289 = vmul.f32 1.0, %v4288
      %v4290 = vrcp.pop %v4230
      %v4291 = vmul.f32 1.0, %v4290
      %v4292 = vrcp.pop %v4231
      %v4293 = vmul.f32 1.0, %v4292
      %v4294 = vrcp.pop %v4232
      %v4295 = vmul.f32 1.0, %v4294
      %v4296 = vrcp.pop %v4233
      %v4297 = vmul.f32 1.0, %v4296
      %v4298 = vmul.f32 %v4074, %v4235
      %v4299 = vmul.f32 %v4075, %v4237
      %v4300 = vmul.f32 %v4076, %v4239
      %v4301 = vmul.f32 %v4077, %v4241
      %v4302 = vmul.f32 %v4078, %v4243
      %v4303 = vmul.f32 %v4079, %v4245
      %v4304 = vmul.f32 %v4080, %v4247
      %v4305 = vmul.f32 %v4081, %v4249
      %v4306 = vmul.f32 %v4082, %v4251
      %v4307 = vmul.f32 %v4083, %v4253
      %v4308 = vmul.f32 %v4084, %v4255
      %v4309 = vmul.f32 %v4085, %v4257
      %v4310 = vmul.f32 %v4086, %v4259
      %v4311 = vmul.f32 %v4087, %v4261
      %v4312 = vmul.f32 %v4088, %v4263
      %v4313 = vmul.f32 %v4089, %v4265
      %v4314 = vmul.f32 %v4090, %v4267
      %v4315 = vmul.f32 %v4091, %v4269
      %v4316 = vmul.f32 %v4092, %v4271
      %v4317 = vmul.f32 %v4093, %v4273
      %v4318 = vmul.f32 %v4094, %v4275
      %v4319 = vmul.f32 %v4095, %v4277
      %v4320 = vmul.f32 %v4096, %v4279
      %v4321 = vmul.f32 %v4097, %v4281
      %v4322 = vmul.f32 %v4098, %v4283
      %v4323 = vmul.f32 %v4099, %v4285
      %v4324 = vmul.f32 %v4100, %v4287
      %v4325 = vmul.f32 %v4101, %v4289
      %v4326 = vmul.f32 %v4102, %v4291
      %v4327 = vmul.f32 %v4103, %v4293
      %v4328 = vmul.f32 %v4104, %v4295
      %v4329 = vmul.f32 %v4105, %v4297
      %v4330 = vadd.f32 %v4298, %v4302
      %v4331 = vadd.f32 %v4330, %v4306
      %v4332 = vadd.f32 %v4331, %v4310
      %v4333 = vadd.f32 %v4332, %v4314
      %v4334 = vadd.f32 %v4333, %v4318
      %v4335 = vadd.f32 %v4334, %v4322
      %v4336 = vadd.f32 %v4335, %v4326
      %v4337 = vrot.slane %v4336, 4
      %v4338 = vadd.f32 %v4336, %v4337
      %v4339 = vrot.slane %v4338, 2
      %v4340 = vadd.f32 %v4338, %v4339
      %v4341 = vrot.slane %v4340, 1
      %v4342 = vadd.f32 %v4340, %v4341
      %v4343 = vadd.f32 %v4299, %v4303
      %v4344 = vadd.f32 %v4343, %v4307
      %v4345 = vadd.f32 %v4344, %v4311
      %v4346 = vadd.f32 %v4345, %v4315
      %v4347 = vadd.f32 %v4346, %v4319
      %v4348 = vadd.f32 %v4347, %v4323
      %v4349 = vadd.f32 %v4348, %v4327
      %v4350 = vrot.slane %v4349, 4
      %v4351 = vadd.f32 %v4349, %v4350
      %v4352 = vrot.slane %v4351, 2
      %v4353 = vadd.f32 %v4351, %v4352
      %v4354 = vrot.slane %v4353, 1
      %v4355 = vadd.f32 %v4353, %v4354
      %v4356 = vadd.f32 %v4300, %v4304
      %v4357 = vadd.f32 %v4356, %v4308
      %v4358 = vadd.f32 %v4357, %v4312
      %v4359 = vadd.f32 %v4358, %v4316
      %v4360 = vadd.f32 %v4359, %v4320
      %v4361 = vadd.f32 %v4360, %v4324
      %v4362 = vadd.f32 %v4361, %v4328
      %v4363 = vrot.slane %v4362, 4
      %v4364 = vadd.f32 %v4362, %v4363
      %v4365 = vrot.slane %v4364, 2
      %v4366 = vadd.f32 %v4364, %v4365
      %v4367 = vrot.slane %v4366, 1
      %v4368 = vadd.f32 %v4366, %v4367
      %v4369 = vadd.f32 %v4301, %v4305
      %v4370 = vadd.f32 %v4369, %v4309
      %v4371 = vadd.f32 %v4370, %v4313
      %v4372 = vadd.f32 %v4371, %v4317
      %v4373 = vadd.f32 %v4372, %v4321
      %v4374 = vadd.f32 %v4373, %v4325
      %v4375 = vadd.f32 %v4374, %v4329
      %v4376 = vrot.slane %v4375, 4
      %v4377 = vadd.f32 %v4375, %v4376
      %v4378 = vrot.slane %v4377, 2
      %v4379 = vadd.f32 %v4377, %v4378
      %v4380 = vrot.slane %v4379, 1
      %v4381 = vadd.f32 %v4379, %v4380
      %v4382 = vrcp.pop 64.0
      %v4383 = vmul.f32 %v4342, %v4382
      %v4384 = vmul.f32 %v4355, %v4382
      %v4385 = vmul.f32 %v4368, %v4382
      %v4386 = vmul.f32 %v4381, %v4382
      %v4387 = vld [vmem:[%s7] sm:$0xf]
      %v4388 = vld [vmem:[%s7 + $0x4] sm:$0xf]
      %v4389 = vld [vmem:[%s7 + $0x8] sm:$0xf]
      %v4390 = vld [vmem:[%s7 + $0xc] sm:$0xf]
      %v4391 = vld [vmem:[%s7 + $0x10] sm:$0xf]
      %v4392 = vld [vmem:[%s7 + $0x14] sm:$0xf]
      %v4393 = vld [vmem:[%s7 + $0x18] sm:$0xf]
      %v4394 = vld [vmem:[%s7 + $0x1c] sm:$0xf]
      %v4395 = vld [vmem:[%s7 + $0x20] sm:$0xf]
      %v4396 = vld [vmem:[%s7 + $0x24] sm:$0xf]
      %v4397 = vld [vmem:[%s7 + $0x28] sm:$0xf]
      %v4398 = vld [vmem:[%s7 + $0x2c] sm:$0xf]
      %v4399 = vld [vmem:[%s7 + $0x30] sm:$0xf]
      %v4400 = vld [vmem:[%s7 + $0x34] sm:$0xf]
      %v4401 = vld [vmem:[%s7 + $0x38] sm:$0xf]
      %v4402 = vld [vmem:[%s7 + $0x3c] sm:$0xf]
      %v4403 = vld [vmem:[%s7 + $0x40] sm:$0xf]
      %v4404 = vld [vmem:[%s7 + $0x44] sm:$0xf]
      %v4405 = vld [vmem:[%s7 + $0x48] sm:$0xf]
      %v4406 = vld [vmem:[%s7 + $0x4c] sm:$0xf]
      %v4407 = vld [vmem:[%s7 + $0x50] sm:$0xf]
      %v4408 = vld [vmem:[%s7 + $0x54] sm:$0xf]
      %v4409 = vld [vmem:[%s7 + $0x58] sm:$0xf]
      %v4410 = vld [vmem:[%s7 + $0x5c] sm:$0xf]
      %v4411 = vld [vmem:[%s7 + $0x60] sm:$0xf]
      %v4412 = vld [vmem:[%s7 + $0x64] sm:$0xf]
      %v4413 = vld [vmem:[%s7 + $0x68] sm:$0xf]
      %v4414 = vld [vmem:[%s7 + $0x6c] sm:$0xf]
      %v4415 = vld [vmem:[%s7 + $0x70] sm:$0xf]
      %v4416 = vld [vmem:[%s7 + $0x74] sm:$0xf]
      %v4417 = vld [vmem:[%s7 + $0x78] sm:$0xf]
      %v4418 = vld [vmem:[%s7 + $0x7c] sm:$0xf]
      %v4419 = vld [vmem:[%s7 + $0x80] sm:$0xf]
      %v4420 = vld [vmem:[%s7 + $0x84] sm:$0xf]
      %v4421 = vld [vmem:[%s7 + $0x88] sm:$0xf]
      %v4422 = vld [vmem:[%s7 + $0x8c] sm:$0xf]
      %v4423 = vld [vmem:[%s7 + $0x90] sm:$0xf]
      %v4424 = vld [vmem:[%s7 + $0x94] sm:$0xf]
      %v4425 = vld [vmem:[%s7 + $0x98] sm:$0xf]
      %v4426 = vld [vmem:[%s7 + $0x9c] sm:$0xf]
      %v4427 = vld [vmem:[%s7 + $0xa0] sm:$0xf]
      %v4428 = vld [vmem:[%s7 + $0xa4] sm:$0xf]
      %v4429 = vld [vmem:[%s7 + $0xa8] sm:$0xf]
      %v4430 = vld [vmem:[%s7 + $0xac] sm:$0xf]
      %v4431 = vld [vmem:[%s7 + $0xb0] sm:$0xf]
      %v4432 = vld [vmem:[%s7 + $0xb4] sm:$0xf]
      %v4433 = vld [vmem:[%s7 + $0xb8] sm:$0xf]
      %v4434 = vld [vmem:[%s7 + $0xbc] sm:$0xf]
      %v4435 = vld [vmem:[%s7 + $0xc0] sm:$0xf]
      %v4436 = vld [vmem:[%s7 + $0xc4] sm:$0xf]
      %v4437 = vld [vmem:[%s7 + $0xc8] sm:$0xf]
      %v4438 = vld [vmem:[%s7 + $0xcc] sm:$0xf]
      %v4439 = vld [vmem:[%s7 + $0xd0] sm:$0xf]
      %v4440 = vld [vmem:[%s7 + $0xd4] sm:$0xf]
      %v4441 = vld [vmem:[%s7 + $0xd8] sm:$0xf]
      %v4442 = vld [vmem:[%s7 + $0xdc] sm:$0xf]
      %v4443 = vld [vmem:[%s7 + $0xe0] sm:$0xf]
      %v4444 = vld [vmem:[%s7 + $0xe4] sm:$0xf]
      %v4445 = vld [vmem:[%s7 + $0xe8] sm:$0xf]
      %v4446 = vld [vmem:[%s7 + $0xec] sm:$0xf]
      %v4447 = vld [vmem:[%s7 + $0xf0] sm:$0xf]
      %v4448 = vld [vmem:[%s7 + $0xf4] sm:$0xf]
      %v4449 = vld [vmem:[%s7 + $0xf8] sm:$0xf]
      %v4450 = vld [vmem:[%s7 + $0xfc] sm:$0xf]
      %v4451 = vpack.c.bf16 %v4383, %v4383
      %v4452 = vpack.c.bf16 %v4384, %v4384
      %v4453 = vpack.c.bf16 %v4385, %v4385
      %v4454 = vpack.c.bf16 %v4386, %v4386
      %v4455 = vld [vmem:[%s8] sm:$0x1]
      %v4520 = vunpack.c.l.b16 %v4387
      %v4521 = vunpack.c.l.b16 %v4388
      %v4522 = vunpack.c.l.b16 %v4389
      %v4523 = vunpack.c.l.b16 %v4390
      %v4524 = vunpack.c.l.b16 %v4391
      %v4525 = vunpack.c.l.b16 %v4392
      %v4526 = vunpack.c.l.b16 %v4393
      %v4527 = vunpack.c.l.b16 %v4394
      %v4528 = vunpack.c.l.b16 %v4395
      %v4529 = vunpack.c.l.b16 %v4396
      %v4530 = vunpack.c.l.b16 %v4397
      %v4531 = vunpack.c.l.b16 %v4398
      %v4532 = vunpack.c.l.b16 %v4399
      %v4533 = vunpack.c.l.b16 %v4400
      %v4534 = vunpack.c.l.b16 %v4401
      %v4535 = vunpack.c.l.b16 %v4402
      %v4536 = vunpack.c.l.b16 %v4403
      %v4537 = vunpack.c.l.b16 %v4404
      %v4538 = vunpack.c.l.b16 %v4405
      %v4539 = vunpack.c.l.b16 %v4406
      %v4540 = vunpack.c.l.b16 %v4407
      %v4541 = vunpack.c.l.b16 %v4408
      %v4542 = vunpack.c.l.b16 %v4409
      %v4543 = vunpack.c.l.b16 %v4410
      %v4544 = vunpack.c.l.b16 %v4411
      %v4545 = vunpack.c.l.b16 %v4412
      %v4546 = vunpack.c.l.b16 %v4413
      %v4547 = vunpack.c.l.b16 %v4414
      %v4548 = vunpack.c.l.b16 %v4415
      %v4549 = vunpack.c.l.b16 %v4416
      %v4550 = vunpack.c.l.b16 %v4417
      %v4551 = vunpack.c.l.b16 %v4418
      %v4552 = vunpack.c.l.b16 %v4419
      %v4553 = vunpack.c.l.b16 %v4420
      %v4554 = vunpack.c.l.b16 %v4421
      %v4555 = vunpack.c.l.b16 %v4422
      %v4556 = vunpack.c.l.b16 %v4423
      %v4557 = vunpack.c.l.b16 %v4424
      %v4558 = vunpack.c.l.b16 %v4425
      %v4559 = vunpack.c.l.b16 %v4426
      %v4560 = vunpack.c.l.b16 %v4427
      %v4561 = vunpack.c.l.b16 %v4428
      %v4562 = vunpack.c.l.b16 %v4429
      %v4563 = vunpack.c.l.b16 %v4430
      %v4564 = vunpack.c.l.b16 %v4431
      %v4565 = vunpack.c.l.b16 %v4432
      %v4566 = vunpack.c.l.b16 %v4433
      %v4567 = vunpack.c.l.b16 %v4434
      %v4568 = vunpack.c.l.b16 %v4435
      %v4569 = vunpack.c.l.b16 %v4436
      %v4570 = vunpack.c.l.b16 %v4437
      %v4571 = vunpack.c.l.b16 %v4438
      %v4572 = vunpack.c.l.b16 %v4439
      %v4573 = vunpack.c.l.b16 %v4440
      %v4574 = vunpack.c.l.b16 %v4441
      %v4575 = vunpack.c.l.b16 %v4442
      %v4576 = vunpack.c.l.b16 %v4443
      %v4577 = vunpack.c.l.b16 %v4444
      %v4578 = vunpack.c.l.b16 %v4445
      %v4579 = vunpack.c.l.b16 %v4446
      %v4580 = vunpack.c.l.b16 %v4447
      %v4581 = vunpack.c.l.b16 %v4448
      %v4582 = vunpack.c.l.b16 %v4449
      %v4583 = vunpack.c.l.b16 %v4450
      %v4584 = vpack.c.b16 %v4521, %v4520
      %v4585 = vpack.c.b16 %v4523, %v4522
      %v4586 = vpack.c.b16 %v4525, %v4524
      %v4587 = vpack.c.b16 %v4527, %v4526
      %v4588 = vpack.c.b16 %v4529, %v4528
      %v4589 = vpack.c.b16 %v4531, %v4530
      %v4590 = vpack.c.b16 %v4533, %v4532
      %v4591 = vpack.c.b16 %v4535, %v4534
      %v4592 = vpack.c.b16 %v4537, %v4536
      %v4593 = vpack.c.b16 %v4539, %v4538
      %v4594 = vpack.c.b16 %v4541, %v4540
      %v4595 = vpack.c.b16 %v4543, %v4542
      %v4596 = vpack.c.b16 %v4545, %v4544
      %v4597 = vpack.c.b16 %v4547, %v4546
      %v4598 = vpack.c.b16 %v4549, %v4548
      %v4599 = vpack.c.b16 %v4551, %v4550
      %v4600 = vpack.c.b16 %v4553, %v4552
      %v4601 = vpack.c.b16 %v4555, %v4554
      %v4602 = vpack.c.b16 %v4557, %v4556
      %v4603 = vpack.c.b16 %v4559, %v4558
      %v4604 = vpack.c.b16 %v4561, %v4560
      %v4605 = vpack.c.b16 %v4563, %v4562
      %v4606 = vpack.c.b16 %v4565, %v4564
      %v4607 = vpack.c.b16 %v4567, %v4566
      %v4608 = vpack.c.b16 %v4569, %v4568
      %v4609 = vpack.c.b16 %v4571, %v4570
      %v4610 = vpack.c.b16 %v4573, %v4572
      %v4611 = vpack.c.b16 %v4575, %v4574
      %v4612 = vpack.c.b16 %v4577, %v4576
      %v4613 = vpack.c.b16 %v4579, %v4578
      %v4614 = vpack.c.b16 %v4581, %v4580
      %v4615 = vpack.c.b16 %v4583, %v4582
      %4648 = vmatprep.subr.bf16.mxu0 0
      %4649 = vmatpush1.bf16.msra.mxu0 %v4591
      %4650 = vmatprep.subr.bf16.mxu0 0
      %4651 = vmatpush1.bf16.msra.mxu0 %v4590
      %4652 = vmatprep.subr.bf16.mxu0 0
      %4653 = vmatpush1.bf16.msra.mxu0 %v4589
      %4654 = vmatprep.subr.bf16.mxu0 0
      %4655 = vmatpush1.bf16.msra.mxu0 %v4588
      %4656 = vmatprep.subr.bf16.mxu0 0
      %4657 = vmatpush1.bf16.msra.mxu0 %v4587
      %4658 = vmatprep.subr.bf16.mxu0 0
      %4659 = vmatpush1.bf16.msra.mxu0 %v4586
      %4660 = vmatprep.subr.bf16.mxu0 0
      %4661 = vmatpush1.bf16.msra.mxu0 %v4585
      %4662 = vmatprep.subr.bf16.mxu0 0
      %4663 = vmatpush1.bf16.msra.mxu0 %v4584
      %4664 = vmatprep.subr.bf16.mxu0 0
      %4665 = vmatpush2.bf16.msra.mxu0 %v4599
      %4666 = vmatprep.subr.bf16.mxu0 0
      %4667 = vmatpush2.bf16.msra.mxu0 %v4598
      %4668 = vmatprep.subr.bf16.mxu0 0
      %4669 = vmatpush2.bf16.msra.mxu0 %v4597
      %4670 = vmatprep.subr.bf16.mxu0 0
      %4671 = vmatpush2.bf16.msra.mxu0 %v4596
      %4672 = vmatprep.subr.bf16.mxu0 0
      %4673 = vmatpush2.bf16.msra.mxu0 %v4595
      %4674 = vmatprep.subr.bf16.mxu0 0
      %4675 = vmatpush2.bf16.msra.mxu0 %v4594
      %4676 = vmatprep.subr.bf16.mxu0 0
      %4677 = vmatpush2.bf16.msra.mxu0 %v4593
      %4678 = vmatprep.subr.bf16.mxu0 0
      %4679 = vmatpush2.bf16.msra.mxu0 %v4592
      %4680 = vmatprep.mubr.bf16.mxu0 %v4452
      %4681 = vmatmul.mubr.bf16.gmra.mxu0 %v4451
      %v4682 = vpop.f32.mrf.mxu0
      %v4683 = vadd.f32 %v4455, %v4682
      %v4684 = vpop.f32.mrf.mxu0
      %v4685 = vpop.f32.mrf.mxu0
      %v4686 = vpop.f32.mrf.mxu0
      %4687 = vdwg.mxu0
      %4688 = vmatprep.subr.bf16.mxu0 0
      %4689 = vmatpush1.bf16.msra.mxu0 %v4607
      %4690 = vmatprep.subr.bf16.mxu0 0
      %4691 = vmatpush1.bf16.msra.mxu0 %v4606
      %4692 = vmatprep.subr.bf16.mxu0 0
      %4693 = vmatpush1.bf16.msra.mxu0 %v4605
      %4694 = vmatprep.subr.bf16.mxu0 0
      %4695 = vmatpush1.bf16.msra.mxu0 %v4604
      %4696 = vmatprep.subr.bf16.mxu0 0
      %4697 = vmatpush1.bf16.msra.mxu0 %v4603
      %4698 = vmatprep.subr.bf16.mxu0 0
      %4699 = vmatpush1.bf16.msra.mxu0 %v4602
      %4700 = vmatprep.subr.bf16.mxu0 0
      %4701 = vmatpush1.bf16.msra.mxu0 %v4601
      %4702 = vmatprep.subr.bf16.mxu0 0
      %4703 = vmatpush1.bf16.msra.mxu0 %v4600
      %4704 = vmatprep.subr.bf16.mxu0 0
      %4705 = vmatpush2.bf16.msra.mxu0 %v4615
      %4706 = vmatprep.subr.bf16.mxu0 0
      %4707 = vmatpush2.bf16.msra.mxu0 %v4614
      %4708 = vmatprep.subr.bf16.mxu0 0
      %4709 = vmatpush2.bf16.msra.mxu0 %v4613
      %4710 = vmatprep.subr.bf16.mxu0 0
      %4711 = vmatpush2.bf16.msra.mxu0 %v4612
      %4712 = vmatprep.subr.bf16.mxu0 0
      %4713 = vmatpush2.bf16.msra.mxu0 %v4611
      %4714 = vmatprep.subr.bf16.mxu0 0
      %4715 = vmatpush2.bf16.msra.mxu0 %v4610
      %4716 = vmatprep.subr.bf16.mxu0 0
      %4717 = vmatpush2.bf16.msra.mxu0 %v4609
      %4718 = vmatprep.subr.bf16.mxu0 0
      %4719 = vmatpush2.bf16.msra.mxu0 %v4608
      %4720 = vmatprep.mubr.bf16.mxu0 %v4454
      %4721 = vmatmul.mubr.bf16.gmra.mxu0 %v4453
      %v4722 = vpop.f32.mrf.mxu0
      %v4723 = vadd.f32 %v4683, %v4722
      %v4724 = vpop.f32.mrf.mxu0
      %v4725 = vpop.f32.mrf.mxu0
      %v4726 = vpop.f32.mrf.mxu0
      %4727 = vdwg.mxu0
      %v4728 = vxor.u32 %v4723, 2147483648
      %v4729 = vmul.f32 %v4728, 1.442695
      %v4730 = vpow.pop %v4729
      %v4731 = vadd.f32 %v4730, 1.0
      %v4732 = vrcp.pop %v4731
      %v4733 = vmul.f32 1.0, %v4732
      %v4734 = vmul.f32 %v4723, %v4733
      %v4735 = vld [vmem:[%s9] sm:$0xff]
      %v4736 = vld [vmem:[%s9 + $0x8] sm:$0xff]
      %v4737 = vld [vmem:[%s9 + $0x10] sm:$0xff]
      %v4738 = vld [vmem:[%s9 + $0x18] sm:$0xff]
      %v4739 = vld [vmem:[%s9 + $0x20] sm:$0xff]
      %v4740 = vld [vmem:[%s9 + $0x28] sm:$0xff]
      %v4741 = vld [vmem:[%s9 + $0x30] sm:$0xff]
      %v4742 = vld [vmem:[%s9 + $0x38] sm:$0xff]
      %v4743 = vpack.c.bf16 %v4734, %v4734
      %v4744 = vld [vmem:[%s10] sm:$0xf]
      %v4753 = vunpack.c.l.b16 %v4735
      %v4754 = vunpack.c.h.b16 %v4735
      %v4755 = vunpack.c.l.b16 %v4736
      %v4756 = vunpack.c.h.b16 %v4736
      %v4757 = vunpack.c.l.b16 %v4737
      %v4758 = vunpack.c.h.b16 %v4737
      %v4759 = vunpack.c.l.b16 %v4738
      %v4760 = vunpack.c.h.b16 %v4738
      %v4761 = vunpack.c.l.b16 %v4739
      %v4762 = vunpack.c.h.b16 %v4739
      %v4763 = vunpack.c.l.b16 %v4740
      %v4764 = vunpack.c.h.b16 %v4740
      %v4765 = vunpack.c.l.b16 %v4741
      %v4766 = vunpack.c.h.b16 %v4741
      %v4767 = vunpack.c.l.b16 %v4742
      %v4768 = vunpack.c.h.b16 %v4742
      %v4769 = vpack.c.b16 %v4757, %v4753
      %v4770 = vpack.c.b16 %v4758, %v4754
      %v4771 = vpack.c.b16 %v4759, %v4755
      %v4772 = vpack.c.b16 %v4760, %v4756
      %v4773 = vpack.c.b16 %v4765, %v4761
      %v4774 = vpack.c.b16 %v4766, %v4762
      %v4775 = vpack.c.b16 %v4767, %v4763
      %v4776 = vpack.c.b16 %v4768, %v4764
      %v4786 = vlaneseq
      %v4787 = vshrl.u32 %v4786, 7
      %v4788 = vsub.s32 0, %v4787
      %v4789 = vrot.slane %v4744, %v4788
      %v4790 = vlaneseq
      %v4791 = vshrl.u32 %v4790, 7
      %v4792 = vsub.s32 1, %v4791
      %v4793 = vrot.slane %v4744, %v4792
      %v4794 = vlaneseq
      %v4795 = vshrl.u32 %v4794, 7
      %v4796 = vsub.s32 2, %v4795
      %v4797 = vrot.slane %v4744, %v4796
      %v4798 = vlaneseq
      %v4799 = vshrl.u32 %v4798, 7
      %v4800 = vsub.s32 3, %v4799
      %v4801 = vrot.slane %v4744, %v4800
      %vm4806 = vcmask 261120
      %v4808 = vsel %vm4806, %v4743, 0
      %4810 = vmatprep.subr.bf16.mxu0 0
      %4811 = vmatpush1.bf16.msra.mxu0 0
      %4812 = vmatprep.subr.bf16.mxu0 0
      %4813 = vmatpush1.bf16.msra.mxu0 0
      %4814 = vmatprep.subr.bf16.mxu0 0
      %4815 = vmatpush1.bf16.msra.mxu0 0
      %4816 = vmatprep.subr.bf16.mxu0 0
      %4817 = vmatpush1.bf16.msra.mxu0 0
      %4818 = vmatprep.subr.bf16.mxu0 0
      %4819 = vmatpush1.bf16.msra.mxu0 0
      %4820 = vmatprep.subr.bf16.mxu0 0
      %4821 = vmatpush1.bf16.msra.mxu0 0
      %4822 = vmatprep.subr.bf16.mxu0 %v4774
      %4823 = vmatpush1.bf16.msra.mxu0 %v4773
      %4824 = vmatprep.subr.bf16.mxu0 %v4770
      %4825 = vmatpush1.bf16.msra.mxu0 %v4769
      %4826 = vmatprep.subr.bf16.mxu0 0
      %4827 = vmatpush2.bf16.msra.mxu0 0
      %4828 = vmatprep.subr.bf16.mxu0 0
      %4829 = vmatpush2.bf16.msra.mxu0 0
      %4830 = vmatprep.subr.bf16.mxu0 0
      %4831 = vmatpush2.bf16.msra.mxu0 0
      %4832 = vmatprep.subr.bf16.mxu0 0
      %4833 = vmatpush2.bf16.msra.mxu0 0
      %4834 = vmatprep.subr.bf16.mxu0 0
      %4835 = vmatpush2.bf16.msra.mxu0 0
      %4836 = vmatprep.subr.bf16.mxu0 0
      %4837 = vmatpush2.bf16.msra.mxu0 0
      %4838 = vmatprep.subr.bf16.mxu0 0
      %4839 = vmatpush2.bf16.msra.mxu0 0
      %4840 = vmatprep.subr.bf16.mxu0 0
      %4841 = vmatpush2.bf16.msra.mxu0 0
      %4842 = vmatprep.mubr.bf16.mxu0 0
      %4843 = vmatmul.mubr.bf16.gmra.mxu0 %v4808
      %v4844 = vpop.f32.mrf.mxu0
      %v4845 = vadd.f32 %v4789, %v4844
      %v4846 = vpop.f32.mrf.mxu0
      %v4847 = vadd.f32 %v4793, %v4846
      %v4848 = vpop.f32.mrf.mxu0
      %v4849 = vpop.f32.mrf.mxu0
      %4850 = vdwg.mxu0
      %4851 = vmatprep.subr.bf16.mxu0 0
      %4852 = vmatpush1.bf16.msra.mxu0 0
      %4853 = vmatprep.subr.bf16.mxu0 0
      %4854 = vmatpush1.bf16.msra.mxu0 0
      %4855 = vmatprep.subr.bf16.mxu0 0
      %4856 = vmatpush1.bf16.msra.mxu0 0
      %4857 = vmatprep.subr.bf16.mxu0 0
      %4858 = vmatpush1.bf16.msra.mxu0 0
      %4859 = vmatprep.subr.bf16.mxu0 0
      %4860 = vmatpush1.bf16.msra.mxu0 0
      %4861 = vmatprep.subr.bf16.mxu0 0
      %4862 = vmatpush1.bf16.msra.mxu0 0
      %4863 = vmatprep.subr.bf16.mxu0 %v4776
      %4864 = vmatpush1.bf16.msra.mxu0 %v4775
      %4865 = vmatprep.subr.bf16.mxu0 %v4772
      %4866 = vmatpush1.bf16.msra.mxu0 %v4771
      %4867 = vmatprep.subr.bf16.mxu0 0
      %4868 = vmatpush2.bf16.msra.mxu0 0
      %4869 = vmatprep.subr.bf16.mxu0 0
      %4870 = vmatpush2.bf16.msra.mxu0 0
      %4871 = vmatprep.subr.bf16.mxu0 0
      %4872 = vmatpush2.bf16.msra.mxu0 0
      %4873 = vmatprep.subr.bf16.mxu0 0
      %4874 = vmatpush2.bf16.msra.mxu0 0
      %4875 = vmatprep.subr.bf16.mxu0 0
      %4876 = vmatpush2.bf16.msra.mxu0 0
      %4877 = vmatprep.subr.bf16.mxu0 0
      %4878 = vmatpush2.bf16.msra.mxu0 0
      %4879 = vmatprep.subr.bf16.mxu0 0
      %4880 = vmatpush2.bf16.msra.mxu0 0
      %4881 = vmatprep.subr.bf16.mxu0 0
      %4882 = vmatpush2.bf16.msra.mxu0 0
      %4883 = vmatprep.mubr.bf16.mxu0 0
      %4884 = vmatmul.mubr.bf16.gmra.mxu0 %v4808
      %v4885 = vpop.f32.mrf.mxu0
      %v4886 = vadd.f32 %v4797, %v4885
      %v4887 = vpop.f32.mrf.mxu0
      %v4888 = vadd.f32 %v4801, %v4887
      %v4889 = vpop.f32.mrf.mxu0
      %v4890 = vpop.f32.mrf.mxu0
      %4891 = vdwg.mxu0
      %v4892 = vxor.u32 %v4845, 2147483648
      %v4893 = vxor.u32 %v4847, 2147483648
      %v4894 = vxor.u32 %v4886, 2147483648
      %v4895 = vxor.u32 %v4888, 2147483648
      %v4896 = vmul.f32 %v4892, 1.442695
      %v4897 = vpow.pop %v4896
      %v4898 = vmul.f32 %v4893, 1.442695
      %v4899 = vpow.pop %v4898
      %v4900 = vmul.f32 %v4894, 1.442695
      %v4901 = vpow.pop %v4900
      %v4902 = vmul.f32 %v4895, 1.442695
      %v4903 = vpow.pop %v4902
      %v4904 = vadd.f32 %v4897, 1.0
      %v4905 = vadd.f32 %v4899, 1.0
      %v4906 = vadd.f32 %v4901, 1.0
      %v4907 = vadd.f32 %v4903, 1.0
      %v4908 = vrcp.pop %v4904
      %v4909 = vmul.f32 1.0, %v4908
      %v4910 = vrcp.pop %v4905
      %v4911 = vmul.f32 1.0, %v4910
      %v4912 = vrcp.pop %v4906
      %v4913 = vmul.f32 1.0, %v4912
      %v4914 = vrcp.pop %v4907
      %v4915 = vmul.f32 1.0, %v4914
      %v4916 = vlaneseq
      %v4917 = vshrl.u32 %v4916, 7
      %v4918 = vsub.s32 0, %v4917
      %v4919 = vrot.slane %v4909, %v4918
      %v4920 = vlaneseq
      %v4921 = vshrl.u32 %v4920, 7
      %v4922 = vsub.s32 0, %v4921
      %v4923 = vrot.slane %v4911, %v4922
      %v4924 = vlaneseq
      %v4925 = vshrl.u32 %v4924, 7
      %v4926 = vsub.s32 0, %v4925
      %v4927 = vrot.slane %v4913, %v4926
      %v4928 = vlaneseq
      %v4929 = vshrl.u32 %v4928, 7
      %v4930 = vsub.s32 0, %v4929
      %v4931 = vrot.slane %v4915, %v4930
      %v4932 = vmul.f32 %v4298, %v4919
      %v4933 = vmul.f32 %v4299, %v4923
      %v4934 = vmul.f32 %v4300, %v4927
      %v4935 = vmul.f32 %v4301, %v4931
      %v4936 = vmul.f32 %v4302, %v4919
      %v4937 = vmul.f32 %v4303, %v4923
      %v4938 = vmul.f32 %v4304, %v4927
      %v4939 = vmul.f32 %v4305, %v4931
      %v4940 = vmul.f32 %v4306, %v4919
      %v4941 = vmul.f32 %v4307, %v4923
      %v4942 = vmul.f32 %v4308, %v4927
      %v4943 = vmul.f32 %v4309, %v4931
      %v4944 = vmul.f32 %v4310, %v4919
      %v4945 = vmul.f32 %v4311, %v4923
      %v4946 = vmul.f32 %v4312, %v4927
      %v4947 = vmul.f32 %v4313, %v4931
      %v4948 = vmul.f32 %v4314, %v4919
      %v4949 = vmul.f32 %v4315, %v4923
      %v4950 = vmul.f32 %v4316, %v4927
      %v4951 = vmul.f32 %v4317, %v4931
      %v4952 = vmul.f32 %v4318, %v4919
      %v4953 = vmul.f32 %v4319, %v4923
      %v4954 = vmul.f32 %v4320, %v4927
      %v4955 = vmul.f32 %v4321, %v4931
      %v4956 = vmul.f32 %v4322, %v4919
      %v4957 = vmul.f32 %v4323, %v4923
      %v4958 = vmul.f32 %v4324, %v4927
      %v4959 = vmul.f32 %v4325, %v4931
      %v4960 = vmul.f32 %v4326, %v4919
      %v4961 = vmul.f32 %v4327, %v4923
      %v4962 = vmul.f32 %v4328, %v4927
      %v4963 = vmul.f32 %v4329, %v4931
      %v4964 = vld [vmem:[%s11] sm:$0xf]
      %v4965 = vld [vmem:[%s11 + $0x4] sm:$0xf]
      %v4966 = vld [vmem:[%s11 + $0x8] sm:$0xf]
      %v4967 = vld [vmem:[%s11 + $0xc] sm:$0xf]
      %v4968 = vld [vmem:[%s11 + $0x10] sm:$0xf]
      %v4969 = vld [vmem:[%s11 + $0x14] sm:$0xf]
      %v4970 = vld [vmem:[%s11 + $0x18] sm:$0xf]
      %v4971 = vld [vmem:[%s11 + $0x1c] sm:$0xf]
      %v4972 = vld [vmem:[%s11 + $0x20] sm:$0xf]
      %v4973 = vld [vmem:[%s11 + $0x24] sm:$0xf]
      %v4974 = vld [vmem:[%s11 + $0x28] sm:$0xf]
      %v4975 = vld [vmem:[%s11 + $0x2c] sm:$0xf]
      %v4976 = vld [vmem:[%s11 + $0x30] sm:$0xf]
      %v4977 = vld [vmem:[%s11 + $0x34] sm:$0xf]
      %v4978 = vld [vmem:[%s11 + $0x38] sm:$0xf]
      %v4979 = vld [vmem:[%s11 + $0x3c] sm:$0xf]
      %v4980 = vld [vmem:[%s11 + $0x40] sm:$0xf]
      %v4981 = vld [vmem:[%s11 + $0x44] sm:$0xf]
      %v4982 = vld [vmem:[%s11 + $0x48] sm:$0xf]
      %v4983 = vld [vmem:[%s11 + $0x4c] sm:$0xf]
      %v4984 = vld [vmem:[%s11 + $0x50] sm:$0xf]
      %v4985 = vld [vmem:[%s11 + $0x54] sm:$0xf]
      %v4986 = vld [vmem:[%s11 + $0x58] sm:$0xf]
      %v4987 = vld [vmem:[%s11 + $0x5c] sm:$0xf]
      %v4988 = vld [vmem:[%s11 + $0x60] sm:$0xf]
      %v4989 = vld [vmem:[%s11 + $0x64] sm:$0xf]
      %v4990 = vld [vmem:[%s11 + $0x68] sm:$0xf]
      %v4991 = vld [vmem:[%s11 + $0x6c] sm:$0xf]
      %v4992 = vld [vmem:[%s11 + $0x70] sm:$0xf]
      %v4993 = vld [vmem:[%s11 + $0x74] sm:$0xf]
      %v4994 = vld [vmem:[%s11 + $0x78] sm:$0xf]
      %v4995 = vld [vmem:[%s11 + $0x7c] sm:$0xf]
      %v4996 = vld [vmem:[%s11 + $0x80] sm:$0xf]
      %v4997 = vld [vmem:[%s11 + $0x84] sm:$0xf]
      %v4998 = vld [vmem:[%s11 + $0x88] sm:$0xf]
      %v4999 = vld [vmem:[%s11 + $0x8c] sm:$0xf]
      %v5000 = vld [vmem:[%s11 + $0x90] sm:$0xf]
      %v5001 = vld [vmem:[%s11 + $0x94] sm:$0xf]
      %v5002 = vld [vmem:[%s11 + $0x98] sm:$0xf]
      %v5003 = vld [vmem:[%s11 + $0x9c] sm:$0xf]
      %v5004 = vld [vmem:[%s11 + $0xa0] sm:$0xf]
      %v5005 = vld [vmem:[%s11 + $0xa4] sm:$0xf]
      %v5006 = vld [vmem:[%s11 + $0xa8] sm:$0xf]
      %v5007 = vld [vmem:[%s11 + $0xac] sm:$0xf]
      %v5008 = vld [vmem:[%s11 + $0xb0] sm:$0xf]
      %v5009 = vld [vmem:[%s11 + $0xb4] sm:$0xf]
      %v5010 = vld [vmem:[%s11 + $0xb8] sm:$0xf]
      %v5011 = vld [vmem:[%s11 + $0xbc] sm:$0xf]
      %v5012 = vld [vmem:[%s11 + $0xc0] sm:$0xf]
      %v5013 = vld [vmem:[%s11 + $0xc4] sm:$0xf]
      %v5014 = vld [vmem:[%s11 + $0xc8] sm:$0xf]
      %v5015 = vld [vmem:[%s11 + $0xcc] sm:$0xf]
      %v5016 = vld [vmem:[%s11 + $0xd0] sm:$0xf]
      %v5017 = vld [vmem:[%s11 + $0xd4] sm:$0xf]
      %v5018 = vld [vmem:[%s11 + $0xd8] sm:$0xf]
      %v5019 = vld [vmem:[%s11 + $0xdc] sm:$0xf]
      %v5020 = vld [vmem:[%s11 + $0xe0] sm:$0xf]
      %v5021 = vld [vmem:[%s11 + $0xe4] sm:$0xf]
      %v5022 = vld [vmem:[%s11 + $0xe8] sm:$0xf]
      %v5023 = vld [vmem:[%s11 + $0xec] sm:$0xf]
      %v5024 = vld [vmem:[%s11 + $0xf0] sm:$0xf]
      %v5025 = vld [vmem:[%s11 + $0xf4] sm:$0xf]
      %v5026 = vld [vmem:[%s11 + $0xf8] sm:$0xf]
      %v5027 = vld [vmem:[%s11 + $0xfc] sm:$0xf]
      %v5028 = vpack.c.bf16 %v4936, %v4932
      %v5029 = vpack.c.bf16 %v4937, %v4933
      %v5030 = vpack.c.bf16 %v4938, %v4934
      %v5031 = vpack.c.bf16 %v4939, %v4935
      %v5032 = vpack.c.bf16 %v4944, %v4940
      %v5033 = vpack.c.bf16 %v4945, %v4941
      %v5034 = vpack.c.bf16 %v4946, %v4942
      %v5035 = vpack.c.bf16 %v4947, %v4943
      %v5036 = vpack.c.bf16 %v4952, %v4948
      %v5037 = vpack.c.bf16 %v4953, %v4949
      %v5038 = vpack.c.bf16 %v4954, %v4950
      %v5039 = vpack.c.bf16 %v4955, %v4951
      %v5040 = vpack.c.bf16 %v4960, %v4956
      %v5041 = vpack.c.bf16 %v4961, %v4957
      %v5042 = vpack.c.bf16 %v4962, %v4958
      %v5043 = vpack.c.bf16 %v4963, %v4959
      %v5044 = vld [vmem:[%s12] sm:$0x1]
      %v5046 = vlaneseq
      %v5047 = vshrl.u32 %v5046, 7
      %v5048 = vsub.s32 0, %v5047
      %v5049 = vrot.slane %v5044, %v5048
      %v5115 = vunpack.c.l.b16 %v4964
      %v5116 = vunpack.c.l.b16 %v4965
      %v5117 = vunpack.c.l.b16 %v4966
      %v5118 = vunpack.c.l.b16 %v4967
      %v5119 = vunpack.c.l.b16 %v4968
      %v5120 = vunpack.c.l.b16 %v4969
      %v5121 = vunpack.c.l.b16 %v4970
      %v5122 = vunpack.c.l.b16 %v4971
      %v5123 = vunpack.c.l.b16 %v4972
      %v5124 = vunpack.c.l.b16 %v4973
      %v5125 = vunpack.c.l.b16 %v4974
      %v5126 = vunpack.c.l.b16 %v4975
      %v5127 = vunpack.c.l.b16 %v4976
      %v5128 = vunpack.c.l.b16 %v4977
      %v5129 = vunpack.c.l.b16 %v4978
      %v5130 = vunpack.c.l.b16 %v4979
      %v5131 = vunpack.c.l.b16 %v4980
      %v5132 = vunpack.c.l.b16 %v4981
      %v5133 = vunpack.c.l.b16 %v4982
      %v5134 = vunpack.c.l.b16 %v4983
      %v5135 = vunpack.c.l.b16 %v4984
      %v5136 = vunpack.c.l.b16 %v4985
      %v5137 = vunpack.c.l.b16 %v4986
      %v5138 = vunpack.c.l.b16 %v4987
      %v5139 = vunpack.c.l.b16 %v4988
      %v5140 = vunpack.c.l.b16 %v4989
      %v5141 = vunpack.c.l.b16 %v4990
      %v5142 = vunpack.c.l.b16 %v4991
      %v5143 = vunpack.c.l.b16 %v4992
      %v5144 = vunpack.c.l.b16 %v4993
      %v5145 = vunpack.c.l.b16 %v4994
      %v5146 = vunpack.c.l.b16 %v4995
      %v5147 = vunpack.c.l.b16 %v4996
      %v5148 = vunpack.c.l.b16 %v4997
      %v5149 = vunpack.c.l.b16 %v4998
      %v5150 = vunpack.c.l.b16 %v4999
      %v5151 = vunpack.c.l.b16 %v5000
      %v5152 = vunpack.c.l.b16 %v5001
      %v5153 = vunpack.c.l.b16 %v5002
      %v5154 = vunpack.c.l.b16 %v5003
      %v5155 = vunpack.c.l.b16 %v5004
      %v5156 = vunpack.c.l.b16 %v5005
      %v5157 = vunpack.c.l.b16 %v5006
      %v5158 = vunpack.c.l.b16 %v5007
      %v5159 = vunpack.c.l.b16 %v5008
      %v5160 = vunpack.c.l.b16 %v5009
      %v5161 = vunpack.c.l.b16 %v5010
      %v5162 = vunpack.c.l.b16 %v5011
      %v5163 = vunpack.c.l.b16 %v5012
      %v5164 = vunpack.c.l.b16 %v5013
      %v5165 = vunpack.c.l.b16 %v5014
      %v5166 = vunpack.c.l.b16 %v5015
      %v5167 = vunpack.c.l.b16 %v5016
      %v5168 = vunpack.c.l.b16 %v5017
      %v5169 = vunpack.c.l.b16 %v5018
      %v5170 = vunpack.c.l.b16 %v5019
      %v5171 = vunpack.c.l.b16 %v5020
      %v5172 = vunpack.c.l.b16 %v5021
      %v5173 = vunpack.c.l.b16 %v5022
      %v5174 = vunpack.c.l.b16 %v5023
      %v5175 = vunpack.c.l.b16 %v5024
      %v5176 = vunpack.c.l.b16 %v5025
      %v5177 = vunpack.c.l.b16 %v5026
      %v5178 = vunpack.c.l.b16 %v5027
      %v5179 = vpack.c.b16 %v5116, %v5115
      %v5180 = vpack.c.b16 %v5118, %v5117
      %v5181 = vpack.c.b16 %v5120, %v5119
      %v5182 = vpack.c.b16 %v5122, %v5121
      %v5183 = vpack.c.b16 %v5124, %v5123
      %v5184 = vpack.c.b16 %v5126, %v5125
      %v5185 = vpack.c.b16 %v5128, %v5127
      %v5186 = vpack.c.b16 %v5130, %v5129
      %v5187 = vpack.c.b16 %v5132, %v5131
      %v5188 = vpack.c.b16 %v5134, %v5133
      %v5189 = vpack.c.b16 %v5136, %v5135
      %v5190 = vpack.c.b16 %v5138, %v5137
      %v5191 = vpack.c.b16 %v5140, %v5139
      %v5192 = vpack.c.b16 %v5142, %v5141
      %v5193 = vpack.c.b16 %v5144, %v5143
      %v5194 = vpack.c.b16 %v5146, %v5145
      %v5195 = vpack.c.b16 %v5148, %v5147
      %v5196 = vpack.c.b16 %v5150, %v5149
      %v5197 = vpack.c.b16 %v5152, %v5151
      %v5198 = vpack.c.b16 %v5154, %v5153
      %v5199 = vpack.c.b16 %v5156, %v5155
      %v5200 = vpack.c.b16 %v5158, %v5157
      %v5201 = vpack.c.b16 %v5160, %v5159
      %v5202 = vpack.c.b16 %v5162, %v5161
      %v5203 = vpack.c.b16 %v5164, %v5163
      %v5204 = vpack.c.b16 %v5166, %v5165
      %v5205 = vpack.c.b16 %v5168, %v5167
      %v5206 = vpack.c.b16 %v5170, %v5169
      %v5207 = vpack.c.b16 %v5172, %v5171
      %v5208 = vpack.c.b16 %v5174, %v5173
      %v5209 = vpack.c.b16 %v5176, %v5175
      %v5210 = vpack.c.b16 %v5178, %v5177
      %5243 = vmatprep.subr.bf16.mxu0 0
      %5244 = vmatpush1.bf16.msra.mxu0 %v5186
      %5245 = vmatprep.subr.bf16.mxu0 0
      %5246 = vmatpush1.bf16.msra.mxu0 %v5185
      %5247 = vmatprep.subr.bf16.mxu0 0
      %5248 = vmatpush1.bf16.msra.mxu0 %v5184
      %5249 = vmatprep.subr.bf16.mxu0 0
      %5250 = vmatpush1.bf16.msra.mxu0 %v5183
      %5251 = vmatprep.subr.bf16.mxu0 0
      %5252 = vmatpush1.bf16.msra.mxu0 %v5182
      %5253 = vmatprep.subr.bf16.mxu0 0
      %5254 = vmatpush1.bf16.msra.mxu0 %v5181
      %5255 = vmatprep.subr.bf16.mxu0 0
      %5256 = vmatpush1.bf16.msra.mxu0 %v5180
      %5257 = vmatprep.subr.bf16.mxu0 0
      %5258 = vmatpush1.bf16.msra.mxu0 %v5179
      %5259 = vmatprep.subr.bf16.mxu0 0
      %5260 = vmatpush2.bf16.msra.mxu0 %v5194
      %5261 = vmatprep.subr.bf16.mxu0 0
      %5262 = vmatpush2.bf16.msra.mxu0 %v5193
      %5263 = vmatprep.subr.bf16.mxu0 0
      %5264 = vmatpush2.bf16.msra.mxu0 %v5192
      %5265 = vmatprep.subr.bf16.mxu0 0
      %5266 = vmatpush2.bf16.msra.mxu0 %v5191
      %5267 = vmatprep.subr.bf16.mxu0 0
      %5268 = vmatpush2.bf16.msra.mxu0 %v5190
      %5269 = vmatprep.subr.bf16.mxu0 0
      %5270 = vmatpush2.bf16.msra.mxu0 %v5189
      %5271 = vmatprep.subr.bf16.mxu0 0
      %5272 = vmatpush2.bf16.msra.mxu0 %v5188
      %5273 = vmatprep.subr.bf16.mxu0 0
      %5274 = vmatpush2.bf16.msra.mxu0 %v5187
      %5275 = vmatprep.mubr.bf16.mxu0 %v5029
      %5276 = vmatmul.mubr.bf16.gmra.mxu0 %v5028
      %v5277 = vpop.f32.mrf.mxu0
      %v5278 = vadd.f32 %v5049, %v5277
      %v5279 = vpop.f32.mrf.mxu0
      %v5280 = vpop.f32.mrf.mxu0
      %v5281 = vadd.f32 %v5049, %v5280
      %v5282 = vpop.f32.mrf.mxu0
      %5283 = vmatprep.mubr.bf16.mxu0 %v5033
      %5284 = vmatmul.mubr.bf16.gmra.mxu0 %v5032
      %v5285 = vpop.f32.mrf.mxu0
      %v5286 = vadd.f32 %v5049, %v5285
      %v5287 = vpop.f32.mrf.mxu0
      %v5288 = vpop.f32.mrf.mxu0
      %v5289 = vadd.f32 %v5049, %v5288
      %v5290 = vpop.f32.mrf.mxu0
      %5291 = vmatprep.mubr.bf16.mxu0 %v5037
      %5292 = vmatmul.mubr.bf16.gmra.mxu0 %v5036
      %v5293 = vpop.f32.mrf.mxu0
      %v5294 = vadd.f32 %v5049, %v5293
      %v5295 = vpop.f32.mrf.mxu0
      %v5296 = vpop.f32.mrf.mxu0
      %v5297 = vadd.f32 %v5049, %v5296
      %v5298 = vpop.f32.mrf.mxu0
      %5299 = vmatprep.mubr.bf16.mxu0 %v5041
      %5300 = vmatmul.mubr.bf16.gmra.mxu0 %v5040
      %v5301 = vpop.f32.mrf.mxu0
      %v5302 = vadd.f32 %v5049, %v5301
      %v5303 = vpop.f32.mrf.mxu0
      %v5304 = vpop.f32.mrf.mxu0
      %v5305 = vadd.f32 %v5049, %v5304
      %v5306 = vpop.f32.mrf.mxu0
      %5307 = vdwg.mxu0
      %5308 = vmatprep.subr.bf16.mxu0 0
      %5309 = vmatpush1.bf16.msra.mxu0 %v5202
      %5310 = vmatprep.subr.bf16.mxu0 0
      %5311 = vmatpush1.bf16.msra.mxu0 %v5201
      %5312 = vmatprep.subr.bf16.mxu0 0
      %5313 = vmatpush1.bf16.msra.mxu0 %v5200
      %5314 = vmatprep.subr.bf16.mxu0 0
      %5315 = vmatpush1.bf16.msra.mxu0 %v5199
      %5316 = vmatprep.subr.bf16.mxu0 0
      %5317 = vmatpush1.bf16.msra.mxu0 %v5198
      %5318 = vmatprep.subr.bf16.mxu0 0
      %5319 = vmatpush1.bf16.msra.mxu0 %v5197
      %5320 = vmatprep.subr.bf16.mxu0 0
      %5321 = vmatpush1.bf16.msra.mxu0 %v5196
      %5322 = vmatprep.subr.bf16.mxu0 0
      %5323 = vmatpush1.bf16.msra.mxu0 %v5195
      %5324 = vmatprep.subr.bf16.mxu0 0
      %5325 = vmatpush2.bf16.msra.mxu0 %v5210
      %5326 = vmatprep.subr.bf16.mxu0 0
      %5327 = vmatpush2.bf16.msra.mxu0 %v5209
      %5328 = vmatprep.subr.bf16.mxu0 0
      %5329 = vmatpush2.bf16.msra.mxu0 %v5208
      %5330 = vmatprep.subr.bf16.mxu0 0
      %5331 = vmatpush2.bf16.msra.mxu0 %v5207
      %5332 = vmatprep.subr.bf16.mxu0 0
      %5333 = vmatpush2.bf16.msra.mxu0 %v5206
      %5334 = vmatprep.subr.bf16.mxu0 0
      %5335 = vmatpush2.bf16.msra.mxu0 %v5205
      %5336 = vmatprep.subr.bf16.mxu0 0
      %5337 = vmatpush2.bf16.msra.mxu0 %v5204
      %5338 = vmatprep.subr.bf16.mxu0 0
      %5339 = vmatpush2.bf16.msra.mxu0 %v5203
      %5340 = vmatprep.mubr.bf16.mxu0 %v5031
      %5341 = vmatmul.mubr.bf16.gmra.mxu0 %v5030
      %v5342 = vpop.f32.mrf.mxu0
      %v5343 = vadd.f32 %v5278, %v5342
      %v5344 = vpop.f32.mrf.mxu0
      %v5345 = vpop.f32.mrf.mxu0
      %v5346 = vadd.f32 %v5281, %v5345
      %v5347 = vpop.f32.mrf.mxu0
      %5348 = vmatprep.mubr.bf16.mxu0 %v5035
      %5349 = vmatmul.mubr.bf16.gmra.mxu0 %v5034
      %v5350 = vpop.f32.mrf.mxu0
      %v5351 = vadd.f32 %v5286, %v5350
      %v5352 = vpop.f32.mrf.mxu0
      %v5353 = vpop.f32.mrf.mxu0
      %v5354 = vadd.f32 %v5289, %v5353
      %v5355 = vpop.f32.mrf.mxu0
      %5356 = vmatprep.mubr.bf16.mxu0 %v5039
      %5357 = vmatmul.mubr.bf16.gmra.mxu0 %v5038
      %v5358 = vpop.f32.mrf.mxu0
      %v5359 = vadd.f32 %v5294, %v5358
      %v5360 = vpop.f32.mrf.mxu0
      %v5361 = vpop.f32.mrf.mxu0
      %v5362 = vadd.f32 %v5297, %v5361
      %v5363 = vpop.f32.mrf.mxu0
      %5364 = vmatprep.mubr.bf16.mxu0 %v5043
      %5365 = vmatmul.mubr.bf16.gmra.mxu0 %v5042
      %v5366 = vpop.f32.mrf.mxu0
      %v5367 = vadd.f32 %v5302, %v5366
      %v5368 = vpop.f32.mrf.mxu0
      %v5369 = vpop.f32.mrf.mxu0
      %v5370 = vadd.f32 %v5305, %v5369
      %v5371 = vpop.f32.mrf.mxu0
      %5372 = vdwg.mxu0
      %v5373 = vadd.f32 %v5343, %v661
      %v5374 = vadd.f32 %v5346, %v662
      %v5375 = vadd.f32 %v5351, %v663
      %v5376 = vadd.f32 %v5354, %v664
      %v5377 = vadd.f32 %v5359, %v665
      %v5378 = vadd.f32 %v5362, %v666
      %v5379 = vadd.f32 %v5367, %v667
      %v5380 = vadd.f32 %v5370, %v668
      %v5381 = vld [vmem:[%s13] sm:$0xff]
      %v5382 = vld [vmem:[%s13 + $0x8] sm:$0xff]
      %v5383 = vld [vmem:[%s13 + $0x10] sm:$0xff]
      %v5384 = vld [vmem:[%s13 + $0x18] sm:$0xff]
      %v5385 = vld [vmem:[%s13 + $0x20] sm:$0xff]
      %v5386 = vld [vmem:[%s13 + $0x28] sm:$0xff]
      %v5387 = vld [vmem:[%s13 + $0x30] sm:$0xff]
      %v5388 = vld [vmem:[%s13 + $0x38] sm:$0xff]
      %v5389 = vld [vmem:[%s13 + $0x40] sm:$0xff]
      %v5390 = vld [vmem:[%s13 + $0x48] sm:$0xff]
      %v5391 = vld [vmem:[%s13 + $0x50] sm:$0xff]
      %v5392 = vld [vmem:[%s13 + $0x58] sm:$0xff]
      %v5393 = vld [vmem:[%s13 + $0x60] sm:$0xff]
      %v5394 = vld [vmem:[%s13 + $0x68] sm:$0xff]
      %v5395 = vld [vmem:[%s13 + $0x70] sm:$0xff]
      %v5396 = vld [vmem:[%s13 + $0x78] sm:$0xff]
      %v5397 = vpack.c.bf16 %v5374, %v5373
      %v5398 = vpack.c.bf16 %v5376, %v5375
      %v5399 = vpack.c.bf16 %v5378, %v5377
      %v5400 = vpack.c.bf16 %v5380, %v5379
      %v5401 = vld [vmem:[%s14] sm:$0x3]
      %v5403 = vlaneseq
      %v5404 = vshrl.u32 %v5403, 7
      %v5405 = vsub.s32 0, %v5404
      %v5406 = vrot.slane %v5401, %v5405
      %v5407 = vlaneseq
      %v5408 = vshrl.u32 %v5407, 7
      %v5409 = vsub.s32 1, %v5408
      %v5410 = vrot.slane %v5401, %v5409
      %v5429 = vunpack.c.l.b16 %v5381
      %v5430 = vunpack.c.h.b16 %v5381
      %v5431 = vunpack.c.l.b16 %v5382
      %v5432 = vunpack.c.h.b16 %v5382
      %v5433 = vunpack.c.l.b16 %v5383
      %v5434 = vunpack.c.h.b16 %v5383
      %v5435 = vunpack.c.l.b16 %v5384
      %v5436 = vunpack.c.h.b16 %v5384
      %v5437 = vunpack.c.l.b16 %v5385
      %v5438 = vunpack.c.h.b16 %v5385
      %v5439 = vunpack.c.l.b16 %v5386
      %v5440 = vunpack.c.h.b16 %v5386
      %v5441 = vunpack.c.l.b16 %v5387
      %v5442 = vunpack.c.h.b16 %v5387
      %v5443 = vunpack.c.l.b16 %v5388
      %v5444 = vunpack.c.h.b16 %v5388
      %v5445 = vunpack.c.l.b16 %v5389
      %v5446 = vunpack.c.h.b16 %v5389
      %v5447 = vunpack.c.l.b16 %v5390
      %v5448 = vunpack.c.h.b16 %v5390
      %v5449 = vunpack.c.l.b16 %v5391
      %v5450 = vunpack.c.h.b16 %v5391
      %v5451 = vunpack.c.l.b16 %v5392
      %v5452 = vunpack.c.h.b16 %v5392
      %v5453 = vunpack.c.l.b16 %v5393
      %v5454 = vunpack.c.h.b16 %v5393
      %v5455 = vunpack.c.l.b16 %v5394
      %v5456 = vunpack.c.h.b16 %v5394
      %v5457 = vunpack.c.l.b16 %v5395
      %v5458 = vunpack.c.h.b16 %v5395
      %v5459 = vunpack.c.l.b16 %v5396
      %v5460 = vunpack.c.h.b16 %v5396
      %v5461 = vpack.c.b16 %v5431, %v5429
      %v5462 = vpack.c.b16 %v5432, %v5430
      %v5463 = vpack.c.b16 %v5435, %v5433
      %v5464 = vpack.c.b16 %v5436, %v5434
      %v5465 = vpack.c.b16 %v5439, %v5437
      %v5466 = vpack.c.b16 %v5440, %v5438
      %v5467 = vpack.c.b16 %v5443, %v5441
      %v5468 = vpack.c.b16 %v5444, %v5442
      %v5469 = vpack.c.b16 %v5447, %v5445
      %v5470 = vpack.c.b16 %v5448, %v5446
      %v5471 = vpack.c.b16 %v5451, %v5449
      %v5472 = vpack.c.b16 %v5452, %v5450
      %v5473 = vpack.c.b16 %v5455, %v5453
      %v5474 = vpack.c.b16 %v5456, %v5454
      %v5475 = vpack.c.b16 %v5459, %v5457
      %v5476 = vpack.c.b16 %v5460, %v5458
      %5493 = vmatprep.subr.bf16.mxu0 %v5476
      %5494 = vmatpush1.bf16.msra.mxu0 %v5475
      %5495 = vmatprep.subr.bf16.mxu0 %v5474
      %5496 = vmatpush1.bf16.msra.mxu0 %v5473
      %5497 = vmatprep.subr.bf16.mxu0 %v5472
      %5498 = vmatpush1.bf16.msra.mxu0 %v5471
      %5499 = vmatprep.subr.bf16.mxu0 %v5470
      %5500 = vmatpush1.bf16.msra.mxu0 %v5469
      %5501 = vmatprep.subr.bf16.mxu0 %v5468
      %5502 = vmatpush1.bf16.msra.mxu0 %v5467
      %5503 = vmatprep.subr.bf16.mxu0 %v5466
      %5504 = vmatpush1.bf16.msra.mxu0 %v5465
      %5505 = vmatprep.subr.bf16.mxu0 %v5464
      %5506 = vmatpush1.bf16.msra.mxu0 %v5463
      %5507 = vmatprep.subr.bf16.mxu0 %v5462
      %5508 = vmatpush1.bf16.msra.mxu0 %v5461
      %5509 = vmatprep.subr.bf16.mxu0 0
      %5510 = vmatpush2.bf16.msra.mxu0 0
      %5511 = vmatprep.subr.bf16.mxu0 0
      %5512 = vmatpush2.bf16.msra.mxu0 0
      %5513 = vmatprep.subr.bf16.mxu0 0
      %5514 = vmatpush2.bf16.msra.mxu0 0
      %5515 = vmatprep.subr.bf16.mxu0 0
      %5516 = vmatpush2.bf16.msra.mxu0 0
      %5517 = vmatprep.subr.bf16.mxu0 0
      %5518 = vmatpush2.bf16.msra.mxu0 0
      %5519 = vmatprep.subr.bf16.mxu0 0
      %5520 = vmatpush2.bf16.msra.mxu0 0
      %5521 = vmatprep.subr.bf16.mxu0 0
      %5522 = vmatpush2.bf16.msra.mxu0 0
      %5523 = vmatprep.subr.bf16.mxu0 0
      %5524 = vmatpush2.bf16.msra.mxu0 0
      %5525 = vmatprep.mubr.bf16.mxu0 0
      %5526 = vmatmul.mubr.bf16.gmra.mxu0 %v5397
      %v5527 = vpop.f32.mrf.mxu0
      %v5528 = vadd.f32 %v5406, %v5527
      %v5529 = vpop.f32.mrf.mxu0
      %v5530 = vadd.f32 %v5410, %v5529
      %v5531 = vpop.f32.mrf.mxu0
      %v5532 = vadd.f32 %v5406, %v5531
      %v5533 = vpop.f32.mrf.mxu0
      %v5534 = vadd.f32 %v5410, %v5533
      %5535 = vmatprep.mubr.bf16.mxu0 0
      %5536 = vmatmul.mubr.bf16.gmra.mxu0 %v5398
      %v5537 = vpop.f32.mrf.mxu0
      %v5538 = vadd.f32 %v5406, %v5537
      %v5539 = vpop.f32.mrf.mxu0
      %v5540 = vadd.f32 %v5410, %v5539
      %v5541 = vpop.f32.mrf.mxu0
      %v5542 = vadd.f32 %v5406, %v5541
      %v5543 = vpop.f32.mrf.mxu0
      %v5544 = vadd.f32 %v5410, %v5543
      %5545 = vmatprep.mubr.bf16.mxu0 0
      %5546 = vmatmul.mubr.bf16.gmra.mxu0 %v5399
      %v5547 = vpop.f32.mrf.mxu0
      %v5548 = vadd.f32 %v5406, %v5547
      %v5549 = vpop.f32.mrf.mxu0
      %v5550 = vadd.f32 %v5410, %v5549
      %v5551 = vpop.f32.mrf.mxu0
      %v5552 = vadd.f32 %v5406, %v5551
      %v5553 = vpop.f32.mrf.mxu0
      %v5554 = vadd.f32 %v5410, %v5553
      %5555 = vmatprep.mubr.bf16.mxu0 0
      %5556 = vmatmul.mubr.bf16.gmra.mxu0 %v5400
      %v5557 = vpop.f32.mrf.mxu0
      %v5558 = vadd.f32 %v5406, %v5557
      %v5559 = vpop.f32.mrf.mxu0
      %v5560 = vadd.f32 %v5410, %v5559
      %v5561 = vpop.f32.mrf.mxu0
      %v5562 = vadd.f32 %v5406, %v5561
      %v5563 = vpop.f32.mrf.mxu0
      %v5564 = vadd.f32 %v5410, %v5563
      %5565 = vdwg.mxu0
      %v5566 = vxor.u32 %v5528, 2147483648
      %v5567 = vxor.u32 %v5530, 2147483648
      %v5568 = vxor.u32 %v5532, 2147483648
      %v5569 = vxor.u32 %v5534, 2147483648
      %v5570 = vxor.u32 %v5538, 2147483648
      %v5571 = vxor.u32 %v5540, 2147483648
      %v5572 = vxor.u32 %v5542, 2147483648
      %v5573 = vxor.u32 %v5544, 2147483648
      %v5574 = vxor.u32 %v5548, 2147483648
      %v5575 = vxor.u32 %v5550, 2147483648
      %v5576 = vxor.u32 %v5552, 2147483648
      %v5577 = vxor.u32 %v5554, 2147483648
      %v5578 = vxor.u32 %v5558, 2147483648
      %v5579 = vxor.u32 %v5560, 2147483648
      %v5580 = vxor.u32 %v5562, 2147483648
      %v5581 = vxor.u32 %v5564, 2147483648
      %v5582 = vmul.f32 %v5566, 1.442695
      %v5583 = vpow.pop %v5582
      %v5584 = vmul.f32 %v5567, 1.442695
      %v5585 = vpow.pop %v5584
      %v5586 = vmul.f32 %v5568, 1.442695
      %v5587 = vpow.pop %v5586
      %v5588 = vmul.f32 %v5569, 1.442695
      %v5589 = vpow.pop %v5588
      %v5590 = vmul.f32 %v5570, 1.442695
      %v5591 = vpow.pop %v5590
      %v5592 = vmul.f32 %v5571, 1.442695
      %v5593 = vpow.pop %v5592
      %v5594 = vmul.f32 %v5572, 1.442695
      %v5595 = vpow.pop %v5594
      %v5596 = vmul.f32 %v5573, 1.442695
      %v5597 = vpow.pop %v5596
      %v5598 = vmul.f32 %v5574, 1.442695
      %v5599 = vpow.pop %v5598
      %v5600 = vmul.f32 %v5575, 1.442695
      %v5601 = vpow.pop %v5600
      %v5602 = vmul.f32 %v5576, 1.442695
      %v5603 = vpow.pop %v5602
      %v5604 = vmul.f32 %v5577, 1.442695
      %v5605 = vpow.pop %v5604
      %v5606 = vmul.f32 %v5578, 1.442695
      %v5607 = vpow.pop %v5606
      %v5608 = vmul.f32 %v5579, 1.442695
      %v5609 = vpow.pop %v5608
      %v5610 = vmul.f32 %v5580, 1.442695
      %v5611 = vpow.pop %v5610
      %v5612 = vmul.f32 %v5581, 1.442695
      %v5613 = vpow.pop %v5612
      %v5614 = vadd.f32 %v5583, 1.0
      %v5615 = vadd.f32 %v5585, 1.0
      %v5616 = vadd.f32 %v5587, 1.0
      %v5617 = vadd.f32 %v5589, 1.0
      %v5618 = vadd.f32 %v5591, 1.0
      %v5619 = vadd.f32 %v5593, 1.0
      %v5620 = vadd.f32 %v5595, 1.0
      %v5621 = vadd.f32 %v5597, 1.0
      %v5622 = vadd.f32 %v5599, 1.0
      %v5623 = vadd.f32 %v5601, 1.0
      %v5624 = vadd.f32 %v5603, 1.0
      %v5625 = vadd.f32 %v5605, 1.0
      %v5626 = vadd.f32 %v5607, 1.0
      %v5627 = vadd.f32 %v5609, 1.0
      %v5628 = vadd.f32 %v5611, 1.0
      %v5629 = vadd.f32 %v5613, 1.0
      %v5630 = vrcp.pop %v5614
      %v5631 = vmul.f32 1.0, %v5630
      %v5632 = vrcp.pop %v5615
      %v5633 = vmul.f32 1.0, %v5632
      %v5634 = vrcp.pop %v5616
      %v5635 = vmul.f32 1.0, %v5634
      %v5636 = vrcp.pop %v5617
      %v5637 = vmul.f32 1.0, %v5636
      %v5638 = vrcp.pop %v5618
      %v5639 = vmul.f32 1.0, %v5638
      %v5640 = vrcp.pop %v5619
      %v5641 = vmul.f32 1.0, %v5640
      %v5642 = vrcp.pop %v5620
      %v5643 = vmul.f32 1.0, %v5642
      %v5644 = vrcp.pop %v5621
      %v5645 = vmul.f32 1.0, %v5644
      %v5646 = vrcp.pop %v5622
      %v5647 = vmul.f32 1.0, %v5646
      %v5648 = vrcp.pop %v5623
      %v5649 = vmul.f32 1.0, %v5648
      %v5650 = vrcp.pop %v5624
      %v5651 = vmul.f32 1.0, %v5650
      %v5652 = vrcp.pop %v5625
      %v5653 = vmul.f32 1.0, %v5652
      %v5654 = vrcp.pop %v5626
      %v5655 = vmul.f32 1.0, %v5654
      %v5656 = vrcp.pop %v5627
      %v5657 = vmul.f32 1.0, %v5656
      %v5658 = vrcp.pop %v5628
      %v5659 = vmul.f32 1.0, %v5658
      %v5660 = vrcp.pop %v5629
      %v5661 = vmul.f32 1.0, %v5660
      %v5662 = vmul.f32 %v5528, %v5631
      %v5663 = vmul.f32 %v5530, %v5633
      %v5664 = vmul.f32 %v5532, %v5635
      %v5665 = vmul.f32 %v5534, %v5637
      %v5666 = vmul.f32 %v5538, %v5639
      %v5667 = vmul.f32 %v5540, %v5641
      %v5668 = vmul.f32 %v5542, %v5643
      %v5669 = vmul.f32 %v5544, %v5645
      %v5670 = vmul.f32 %v5548, %v5647
      %v5671 = vmul.f32 %v5550, %v5649
      %v5672 = vmul.f32 %v5552, %v5651
      %v5673 = vmul.f32 %v5554, %v5653
      %v5674 = vmul.f32 %v5558, %v5655
      %v5675 = vmul.f32 %v5560, %v5657
      %v5676 = vmul.f32 %v5562, %v5659
      %v5677 = vmul.f32 %v5564, %v5661
      %v5678 = vadd.f32 %v5662, %v5664
      %v5679 = vadd.f32 %v5678, %v5666
      %v5680 = vadd.f32 %v5679, %v5668
      %v5681 = vadd.f32 %v5680, %v5670
      %v5682 = vadd.f32 %v5681, %v5672
      %v5683 = vadd.f32 %v5682, %v5674
      %v5684 = vadd.f32 %v5683, %v5676
      %v5685 = vrot.slane %v5684, 4
      %v5686 = vadd.f32 %v5684, %v5685
      %v5687 = vrot.slane %v5686, 2
      %v5688 = vadd.f32 %v5686, %v5687
      %v5689 = vrot.slane %v5688, 1
      %v5690 = vadd.f32 %v5688, %v5689
      %v5691 = vadd.f32 %v5663, %v5665
      %v5692 = vadd.f32 %v5691, %v5667
      %v5693 = vadd.f32 %v5692, %v5669
      %v5694 = vadd.f32 %v5693, %v5671
      %v5695 = vadd.f32 %v5694, %v5673
      %v5696 = vadd.f32 %v5695, %v5675
      %v5697 = vadd.f32 %v5696, %v5677
      %v5698 = vrot.slane %v5697, 4
      %v5699 = vadd.f32 %v5697, %v5698
      %v5700 = vrot.slane %v5699, 2
      %v5701 = vadd.f32 %v5699, %v5700
      %v5702 = vrot.slane %v5701, 1
      %v5703 = vadd.f32 %v5701, %v5702
      %v5704 = vmul.f32 %v5690, %v4382
      %v5705 = vmul.f32 %v5703, %v4382
      %v5708 = vcombine.low %v5704, %v5705
      %v5710 = vunpack.c.l.s4 1966171168
      %v5711 = vunpack.c.0.s8 %v5710
      %v5712 = vlaneseq
      %v5713 = vshrl.u32 %v5712, 7
      %v5714 = vsub.s32 %v5711, %v5713
      %v5715 = vrot.slane %v5708, %v5714
      %v5717 = vunpack.c.l.s4 1966171168
      %v5718 = vunpack.c.0.s8 %v5717
      %v5719 = vlaneseq
      %v5720 = vshrl.u32 %v5719, 7
      %v5721 = vsub.s32 %v5718, %v5720
      %v5722 = vrot.slane %v5715, %v5721
      %v5724 = vlaneseq
      %vm5725 = vcmp.ge.s32.totalorder %v5724, 0
      %vm5726 = vcmp.lt.s32.totalorder %v5724, 256
      %vm5727 = vmand %vm5725, %vm5726
      %5728 = vst.msk [vmem:[%s492] sm:$0x3] %vm5727, %v5722
      %p5729 = scmp.lt.s32.totalorder %s26, 1
      %s5730 = scalar_select %p5729, %s26, 1
      %s5731 = smul.addr %s5730, 2
      %s5732 = scalar_lea.vmem %s15, %s5731
      // Predicated region
      $region81: #{vision_encoder_efficient.1} parent=79 // pred_check
        %p5733 = pneg %p364
      $region82: #{vision_encoder_efficient.1} parent=79 // pred_check_branch
        %5735 = sbr.rel (%p5733) target = $region84
      $region83: #{vision_encoder_efficient.1} parent=79 // pred_region
        _
      $region84: #{vision_encoder_efficient.1} parent=79 // pred_fallthru
        _
    $region80: #{vision_encoder_efficient.1} parent=5 // pred_fallthru
      _
    %p5736 = scmp.le.s32.totalorder 2, %s21
    // Predicated region
    $region85: #{vision_encoder_efficient.1} parent=5 // pred_check
      %p5737 = pneg %p5736
    $region86: #{vision_encoder_efficient.1} parent=5 // pred_check_branch
      %5739 = sbr.rel (%p5737) target = $region88
    $region87: #{vision_encoder_efficient.1} parent=5 // pred_region
      %s5740 = ssub.s32 %s21, 2
      // Predicated region
      $region89: #{vision_encoder_efficient.1} parent=87 // pred_check
        %p5741 = pneg %p370
      $region90: #{vision_encoder_efficient.1} parent=87 // pred_check_branch
        %5743 = sbr.rel (%p5741) target = $region92
      $region91: #{vision_encoder_efficient.1} parent=87 // pred_region
        %p5744 = scmp.lt.s32.totalorder %s27, 1
        %s5745 = scalar_select %p5744, %s27, 1
        %s5746 = smul.addr %s5745, 2
        %s5747 = scalar_lea.vmem %s15, %s5746
      $region92: #{vision_encoder_efficient.1} parent=87 // pred_fallthru
        _
    $region88: #{vision_encoder_efficient.1} parent=5 // pred_fallthru
      _
  $region6: #{vision_encoder_efficient.1} parent=0 // loop_footer
    %s25 = sadd.s32 1, %s21
  $region7: #{vision_encoder_efficient.1} parent=0 // loop_footer_branch
    %20 = sbr.rel target = $region3
  $region8: #{vision_encoder_efficient.1} parent=0 // loop_exit
    _

</llo_original>
